<compile_context>
chip_gen: v6e
topology: v6e:2x2x1
jax: 0.10.0
libtpu: 0.0.40
codegen_flags: <defaults>
</compile_context>

<pallas_src>
import functools

import jax
import jax.numpy as jnp
from jax import lax
from jax.experimental import pallas as pl
from jax.experimental.pallas import tpu as pltpu

EPS = 1e-5
MATMUL_DTYPE = jnp.bfloat16    # MXU operand dtype
STORE_DTYPE = jnp.bfloat16     # intermediate conv-output / activation storage dtype


def _round_up(x, m):
    return ((x + m - 1) // m) * m


@functools.lru_cache(maxsize=None)
def _vmem_capacity_bytes():
    try:
        return int(pltpu.get_tpu_info().vmem_capacity_bytes)
    except Exception:
        return 64 * 2**20          # conservative (v7x-sized) fallback


def _vmem_limit(need_bytes):
    ceiling = max(32 * 2**20, _vmem_capacity_bytes() - 16 * 2**20)  # compiler headroom
    return int(max(16 * 2**20, min(ceiling, 2 * need_bytes)))


def _pick_th(H, Wp):
    """Largest divisor of H whose row band (th*Wp rows) fits the per-step target.
    Prefers bands whose row count is a multiple of 16 (bf16 sublane-aligned)."""
    target = 2048 if _vmem_capacity_bytes() >= 96 * 2**20 else 1024
    cands = [d for d in range(1, H + 1) if H % d == 0 and d * Wp <= target]
    if not cands:
        return 1
    aligned = [d for d in cands if (d * Wp) % 16 == 0]
    return max(aligned) if aligned else max(cands)


def _largest_divisor_leq(n, limit):
    best = 1
    for d in range(1, n + 1):
        if n % d == 0 and d <= limit:
            best = d
    return best


# --------------------------------------------------------------------------- #
# Pass 1: conv + batch statistics
# --------------------------------------------------------------------------- #
def _conv_stats_call(x_bands, w_mat, *, tap_offsets, L, Wp, W, y_dtype):
    """3x3 conv as shifted MXU matmuls + per-batch per-channel sum / sumsq partials.

    x_bands: (N, nH, Lband, K) bf16  halo-padded row bands (Lband >= L + max offset)
    w_mat:   (T, K, Cop)       bf16  per-tap (T=9) or tap-folded (T=1) weights
    returns  y     (N, nH, L, Cop) y_dtype  conv output (2 garbage cols / image row)
             sum   (N, 1, Cop) f32,  sumsq (N, 1, Cop) f32  valid-pixel partials
    """
    N, nH, Lband, K = x_bands.shape
    T, _, Cop = w_mat.shape
    assert len(tap_offsets) == T

    def kernel(x_ref, w_ref, y_ref, sum_ref, sumsq_ref):
        h = pl.program_id(1)

        # Value-chained MXU accumulation: no per-tap VMEM read-modify-write.
        acc = jnp.dot(x_ref[0, 0, pl.ds(tap_offsets[0], L), :], w_ref[0],
                      preferred_element_type=jnp.float32)
        for t in range(1, T):
            acc = acc + jnp.dot(x_ref[0, 0, pl.ds(tap_offsets[t], L), :], w_ref[t],
                                preferred_element_type=jnp.float32)

        y_ref[0, 0, :, :] = acc.astype(y_ref.dtype)

        # Per-batch stats partials: accumulated only across the row-band axis,
        # so the batch axis stays megacore-parallel.  Mask the 2 wrap-around
        # garbage columns of every image row out of the statistics.
        col = lax.broadcasted_iota(jnp.int32, (L, 1), 0) % Wp
        valid = (col < W).astype(jnp.float32)
        ym = acc * valid

        @pl.when(h == 0)
        def _():
            sum_ref[...] = jnp.zeros_like(sum_ref)
            sumsq_ref[...] = jnp.zeros_like(sumsq_ref)

        sum_ref[...] += jnp.sum(ym, axis=0, keepdims=True)
        sumsq_ref[...] += jnp.sum(ym * acc, axis=0, keepdims=True)

    x_isz = jnp.dtype(MATMUL_DTYPE).itemsize
    y_isz = jnp.dtype(y_dtype).itemsize
    need = (2 * Lband * K * x_isz             # x band (double buffered)
            + 2 * T * K * Cop * x_isz         # weights (grid invariant)
            + 2 * L * Cop * y_isz             # y block
            + 4 * Cop * 4                     # stats blocks
            + L * Cop * 4)                    # f32 accumulator value
    # TODO(synk): mark the grid-invariant weight block pipeline_mode=pl.Buffered(1)
    # once single-buffered BlockSpecs are verified on the target jax version.
    flops = 2 * N * nH * T * L * K * Cop
    bytes_accessed = (N * nH * Lband * K * x_isz + T * K * Cop * x_isz
                      + N * nH * L * Cop * y_isz + 2 * N * Cop * 4)

    grid_spec = pltpu.PrefetchScalarGridSpec(
        num_scalar_prefetch=0,
        grid=(N, nH),
        in_specs=[
            pl.BlockSpec((1, 1, Lband, K), lambda n, h: (n, h, 0, 0)),
            pl.BlockSpec((T, K, Cop), lambda n, h: (0, 0, 0)),
        ],
        out_specs=[
            pl.BlockSpec((1, 1, L, Cop), lambda n, h: (n, h, 0, 0)),
            pl.BlockSpec((1, 1, Cop), lambda n, h: (n, 0, 0)),
            pl.BlockSpec((1, 1, Cop), lambda n, h: (n, 0, 0)),
        ],
    )
    return pl.pallas_call(
        kernel,
        out_shape=(jax.ShapeDtypeStruct((N, nH, L, Cop), y_dtype),
                   jax.ShapeDtypeStruct((N, 1, Cop), jnp.float32),
                   jax.ShapeDtypeStruct((N, 1, Cop), jnp.float32)),
        grid_spec=grid_spec,
        compiler_params=pltpu.CompilerParams(
            dimension_semantics=("parallel", "arbitrary"),
            vmem_limit_bytes=_vmem_limit(need),
        ),
        cost_estimate=pl.CostEstimate(flops=int(flops), transcendentals=0,
                                      bytes_accessed=int(bytes_accessed)),
    )(x_bands, w_mat)


# --------------------------------------------------------------------------- #
# Pass 2: BN (folded scale/shift) + ReLU + pad-column zeroing
# --------------------------------------------------------------------------- #
def _bn_relu_call(y, scale, shift, *, Wp, W, out_dtype):
    """y * scale + shift, ReLU, zero the garbage pad columns.  The result is the
    next layer's activation in (row * Wp)-flat layout (one jnp.pad away from the
    halo-padded input).  Row bands are merged per grid step for HBM density."""
    N, nH, L, Cop = y.shape
    y_isz = jnp.dtype(y.dtype).itemsize
    o_isz = jnp.dtype(out_dtype).itemsize
    mh = _largest_divisor_leq(nH, max(1, (8 * 2**20) // (L * Cop * (y_isz + o_isz))))

    def kernel(y_ref, sc_ref, sh_ref, o_ref):
        v = jnp.maximum(y_ref[...].astype(jnp.float32) * sc_ref[...] + sh_ref[...],
                        0.0)
        col = lax.broadcasted_iota(jnp.int32, (L, 1), 0) % Wp
        v = v * (col < W).astype(jnp.float32)
        o_ref[...] = v.astype(o_ref.dtype)

    grid_spec = pltpu.PrefetchScalarGridSpec(
        num_scalar_prefetch=0,
        grid=(N, nH // mh),
        in_specs=[
            pl.BlockSpec((1, mh, L, Cop), lambda n, j: (n, j, 0, 0)),
            pl.BlockSpec((1, 1, 1, Cop), lambda n, j: (0, 0, 0, 0)),
            pl.BlockSpec((1, 1, 1, Cop), lambda n, j: (0, 0, 0, 0)),
        ],
        out_specs=pl.BlockSpec((1, mh, L, Cop), lambda n, j: (n, j, 0, 0)),
    )
    need = 2 * mh * L * Cop * (y_isz + o_isz) + 4 * Cop * 4
    aliases = {0: 0} if out_dtype == y.dtype else {}
    return pl.pallas_call(
        kernel,
        out_shape=jax.ShapeDtypeStruct((N, nH, L, Cop), out_dtype),
        grid_spec=grid_spec,
        compiler_params=pltpu.CompilerParams(
            dimension_semantics=("parallel", "parallel"),
            vmem_limit_bytes=_vmem_limit(need),
        ),
        cost_estimate=pl.CostEstimate(
            flops=int(3 * N * nH * L * Cop), transcendentals=0,
            bytes_accessed=int(N * nH * L * Cop * (y_isz + o_isz))),
        input_output_aliases=aliases,
    )(y, scale, shift)


# --------------------------------------------------------------------------- #
# One Conv3x3 -> BatchNorm(train) -> ReLU layer
# --------------------------------------------------------------------------- #
def _conv_bn_relu_layer(x_pf, w_hwio, gamma, beta, *, N, H, W, store_dtype):
    """x_pf: (N, (H+2)*(W+2), C) halo-padded flat activation (zero halo/pads).

    Returns (y2, Co): y2 is (N, H*(W+2), Cop) with the 2 per-row pad columns and
    channels beyond Co zeroed, so a single jnp.pad turns it into the next
    layer's halo-padded flat input."""
    Cin = w_hwio.shape[2]
    Co = w_hwio.shape[3]
    Wp = W + 2
    Cop = _round_up(Co, 128)
    th = _pick_th(H, Wp)
    nH = H // th
    L = th * Wp

    x_pfg = jnp.pad(x_pf, ((0, 0), (0, 2), (0, 0)))   # 2 guard pixels for dy=2 taps

    if 9 * Cin <= 128:
        # Small-Cin layer: fold the 9 taps along K (im2col over only Cin channels),
        # so the MXU runs one K >= 9*Cin matmul instead of 9 mostly-zero K=128 ones.
        K = _round_up(9 * Cin, 128)
        cols = [x_pfg[:, dy * Wp + dx: dy * Wp + dx + H * Wp, :Cin]
                for dy in range(3) for dx in range(3)]
        x_col = jnp.concatenate(cols, axis=-1)
        x_col = jnp.pad(x_col, ((0, 0), (0, 0), (0, K - 9 * Cin)))
        x_bands = x_col.reshape(N, nH, L, K)
        tap_offsets = (0,)
        w_mat = jnp.pad(w_hwio.reshape(9 * Cin, Co),
                        ((0, K - 9 * Cin), (0, Cop - Co))).reshape(1, K, Cop)
    else:
        K = _round_up(Cin, 128)
        if x_pfg.shape[-1] < K:
            x_pfg = jnp.pad(x_pfg, ((0, 0), (0, 0), (0, K - x_pfg.shape[-1])))
        Lband = (th + 2) * Wp + 2
        # Overlapping (th+2)-row halo bands: VMEM holds one band, not the image.
        x_bands = jnp.stack(
            [x_pfg[:, h * L: h * L + Lband, :K] for h in range(nH)], axis=1)
        tap_offsets = tuple(dy * Wp + dx for dy in range(3) for dx in range(3))
        w_mat = jnp.pad(w_hwio, ((0, 0), (0, 0), (0, K - Cin), (0, Cop - Co))
                        ).reshape(9, K, Cop)

    x_bands = x_bands.astype(MATMUL_DTYPE)
    w_mat = w_mat.astype(MATMUL_DTYPE)

    y, s, ss = _conv_stats_call(x_bands, w_mat, tap_offsets=tap_offsets,
                                L=L, Wp=Wp, W=W, y_dtype=store_dtype)

    # Reduce per-batch partials; fold training-mode BN (biased batch statistics)
    # into a per-channel scale/shift.
    cnt = jnp.float32(N * H * W)
    s = jnp.sum(s, axis=0).reshape(1, Cop)
    ss = jnp.sum(ss, axis=0).reshape(1, Cop)
    mean = s / cnt
    var = jnp.maximum(ss / cnt - mean * mean, 0.0)
    gamma_p = jnp.pad(gamma, (0, Cop - Co)).astype(jnp.float32)
    beta_p = jnp.pad(beta, (0, Cop - Co)).astype(jnp.float32)
    scale = gamma_p[None, :] * lax.rsqrt(var + EPS)
    shift = beta_p[None, :] - mean * scale

    y2 = _bn_relu_call(y, scale.reshape(1, 1, 1, Cop), shift.reshape(1, 1, 1, Cop),
                       Wp=Wp, W=W, out_dtype=store_dtype)
    return y2.reshape(N, H * Wp, Cop), Co


def conv_block_forward(x_nchw, params):
    """conv_block forward: [Conv3x3(pad=1) -> BatchNorm2d(train) -> ReLU] x 2.

    params: list of (w_hwio, bias, gamma, beta), w_hwio (3, 3, Ci, Co).
    The conv bias is intentionally dropped: a per-channel constant added before
    training-mode BatchNorm is exactly cancelled by the batch-mean subtraction.
    """
    N, _, H, W = x_nchw.shape
    Hp, Wp = H + 2, W + 2
    a = jnp.transpose(x_nchw, (0, 2, 3, 1)).astype(jnp.float32)       # NHWC
    x_pf = jnp.pad(a, ((0, 0), (1, 1), (1, 1), (0, 0)))
    x_pf = x_pf.reshape(N, Hp * Wp, a.shape[-1]).astype(MATMUL_DTYPE)

    out = None
    for li, (w_hwio, _bias, gamma, beta) in enumerate(params):
        last = li == len(params) - 1
        y2, Co = _conv_bn_relu_layer(
            x_pf, w_hwio, gamma, beta, N=N, H=H, W=W,
            store_dtype=jnp.float32 if last else STORE_DTYPE)
        if last:
            out = y2.reshape(N, H, Wp, -1)[:, :, :W, :Co]
        else:
            # Pad columns / channels are already zeroed by pass 2, so the next
            # layer's halo-padded flat input is one zero-pad away (no slice /
            # mask / cast glue between layers).
            x_pf = jnp.pad(y2, ((0, 0), (Wp + 1, Wp - 1), (0, 0)))
    # TODO(synk): BatchNorm running_mean/running_var buffer updates (stateful
    # PyTorch side effect) are not produced; they do not affect the output.
    return jnp.transpose(out, (0, 3, 1, 2))                           # NCHW


# --------------------------------------------------------------------------- #
# Pure-JAX references and test harness
# --------------------------------------------------------------------------- #
def _ref_forward(x_nchw, params, matmul_dtype=jnp.float32, store_dtypes=None):
    """Reference (NHWC lax.conv + bias + training-mode BN + ReLU).  matmul_dtype /
    store_dtypes let the bf16 kernel be checked apples-to-apples; BN statistics
    and elementwise math stay f32."""
    if store_dtypes is None:
        store_dtypes = [jnp.float32] * len(params)
    x = jnp.transpose(x_nchw, (0, 2, 3, 1)).astype(jnp.float32)
    for (w_hwio, bias, gamma, beta), sd in zip(params, store_dtypes):
        y = lax.conv_general_dilated(
            x.astype(matmul_dtype), w_hwio.astype(matmul_dtype),
            window_strides=(1, 1), padding="SAME",
            dimension_numbers=("NHWC", "HWIO", "NHWC"),
            preferred_element_type=jnp.float32) + bias
        mean = y.mean(axis=(0, 1, 2), keepdims=True)
        var = ((y - mean) ** 2).mean(axis=(0, 1, 2), keepdims=True)
        yq = y.astype(sd).astype(jnp.float32)
        y = (yq - mean) * lax.rsqrt(var + EPS) * gamma + beta
        x = jnp.maximum(y, 0.0)
    return jnp.transpose(x, (0, 3, 1, 2))


def make_params(key, in_chan, out_chan):
    """Deterministic parameter init for conv_block(in_chan, out_chan)."""
    k1, k2 = jax.random.split(key)
    params = []
    cin = in_chan
    for k in (k1, k2):
        kw, kb = jax.random.split(k)
        w = jax.random.normal(kw, (3, 3, cin, out_chan), jnp.float32) * 0.1
        b = jax.random.normal(kb, (out_chan,), jnp.float32) * 0.1
        gamma = jnp.ones((out_chan,), jnp.float32)   # BN default init
        beta = jnp.zeros((out_chan,), jnp.float32)
        params.append((w, b, gamma, beta))
        cin = out_chan
    return params


if __name__ == "__main__":
    fwd = jax.jit(conv_block_forward)

    def _check(name, N, C_in, C_out, H, W, kseed):
        kx, kp = jax.random.split(jax.random.PRNGKey(kseed))
        x = jax.random.normal(kx, (N, C_in, H, W), jnp.float32)
        params = make_params(kp, C_in, C_out)

        out = jax.block_until_ready(fwd(x, params))
        assert out.shape == (N, C_out, H, W)

        # Apples-to-apples: same bf16 MXU operands, same bf16 intermediate
        # conv-output storage, bias dropped (it cancels exactly under train BN).
        params_nb = [(w, jnp.zeros_like(b), g, be) for (w, b, g, be) in params]
        store_dts = [STORE_DTYPE] * (len(params) - 1) + [jnp.float32]
        ref_bf = jax.block_until_ready(
            _ref_forward(x, params_nb, MATMUL_DTYPE, store_dts))
        err = float(jnp.max(jnp.abs(out - ref_bf)))
        assert jnp.allclose(out, ref_bf, atol=5e-3, rtol=5e-3), \
            f"{name}: bf16-ref max abs diff {err}"

        # Fidelity to the full-f32 PyTorch semantics (bias included).
        ref32 = jax.block_until_ready(_ref_forward(x, params))
        err32 = float(jnp.max(jnp.abs(out - ref32)))
        assert jnp.allclose(out, ref32, atol=4e-2, rtol=4e-2), \
            f"{name}: f32-ref max abs diff {err32}"

    # Tap-folded (small-Cin) path: conv_block(4, 8) on 16x16, batch 2.
    _check("folded", N=2, C_in=4, C_out=8, H=16, W=16, kseed=0)
    # General 9-shifted-matmul path: conv_block(16, 16) on 8x8, batch 2.
    _check("general", N=2, C_in=16, C_out=16, H=8, W=8, kseed=1)

    print("KERNEL_OK")
</pallas_src>

<mosaic_0001>
module attributes {stable_mosaic.version = 11 : i64} {
  func.func @kernel(%arg0: i32, %arg1: i32, %arg2: memref<1x1x288x128xbf16, #tpu.memory_space<vmem>>, %arg3: memref<1x128x128xbf16, #tpu.memory_space<vmem>>, %arg4: memref<1x1x288x128xbf16, #tpu.memory_space<vmem>>, %arg5: memref<1x1x128xf32, #tpu.memory_space<vmem>>, %arg6: memref<1x1x128xf32, #tpu.memory_space<vmem>>) attributes {dimension_semantics = [#tpu.dimension_semantics<parallel>, #tpu.dimension_semantics<arbitrary>], iteration_bounds = array<i64: 2, 1>, scalar_prefetch = 0 : i64, scratch_operands = 0 : i64, tpu.core_type = #tpu.core_type<tc>, window_params = [{transform_indices = @transform_0, window_bounds = array<i64: 1, 1, 288, 128>}, {pipeline_mode = #tpu.pipeline_mode<synchronous>, transform_indices = @transform_1, window_bounds = array<i64: 1, 128, 128>}, {transform_indices = @transform_2, window_bounds = array<i64: 1, 1, 288, 128>}, {transform_indices = @transform_3, window_bounds = array<i64: 1, 1, 128>}, {transform_indices = @transform_4, window_bounds = array<i64: 1, 1, 128>}]} {
    %c0 = arith.constant 0 : index
    %c0_0 = arith.constant 0 : index
    %c0_1 = arith.constant 0 : index
    %c0_2 = arith.constant 0 : index
    %0 = vector.load %arg2[%c0, %c0_0, %c0_1, %c0_2] : memref<1x1x288x128xbf16, #tpu.memory_space<vmem>>, vector<1x1x288x128xbf16>
    %1 = vector.shape_cast %0 : vector<1x1x288x128xbf16> to vector<288x128xbf16>
    %c0_3 = arith.constant 0 : index
    %c0_4 = arith.constant 0 : index
    %c0_5 = arith.constant 0 : index
    %2 = vector.load %arg3[%c0_3, %c0_4, %c0_5] : memref<1x128x128xbf16, #tpu.memory_space<vmem>>, vector<1x128x128xbf16>
    %3 = vector.shape_cast %2 : vector<1x128x128xbf16> to vector<128x128xbf16>
    %cst = arith.constant dense<0.000000e+00> : vector<288x128xf32>
    %4 = tpu.matmul %1, %3, %cst {dimension_numbers = #tpu.dot_dimension_numbers<[1], [0], [0], [1], [0, 0, 1, 1], [], []>} : vector<288x128xbf16>, vector<128x128xbf16>, vector<288x128xf32> -> vector<288x128xf32>
    %5 = arith.truncf %4 : vector<288x128xf32> to vector<288x128xbf16>
    %c0_6 = arith.constant 0 : index
    %c0_7 = arith.constant 0 : index
    %c0_8 = arith.constant 0 : index
    %c0_9 = arith.constant 0 : index
    %6 = vector.load %arg4[%c0_6, %c0_7, %c0_8, %c0_9] : memref<1x1x288x128xbf16, #tpu.memory_space<vmem>>, vector<1x1x288x128xbf16>
    %7 = vector.shape_cast %6 : vector<1x1x288x128xbf16> to vector<288x128xbf16>
    %8 = vector.shape_cast %5 : vector<288x128xbf16> to vector<1x1x288x128xbf16>
    tpu.vector_store %arg4[%c0_6, %c0_7, %c0_8, %c0_9], %8 {strides = array<i32>} : memref<1x1x288x128xbf16, #tpu.memory_space<vmem>>, vector<1x1x288x128xbf16>,
    %9 = tpu.iota {dimensions = array<i32: 0>} : vector<288x1xi32>
    %c18_i32 = arith.constant 18 : i32
    %c0_i32 = arith.constant 0 : i32
    %10 = arith.cmpi eq, %c18_i32, %c0_i32 : i32
    %c1_i32 = arith.constant 1 : i32
    %11 = arith.select %10, %c1_i32, %c18_i32 : i32
    %12 = vector.broadcast %11 : i32 to vector<288x1xi32>
    %13 = arith.remsi %9, %12 : vector<288x1xi32>
    %c0_i32_10 = arith.constant 0 : i32
    %14 = vector.broadcast %c0_i32_10 : i32 to vector<288x1xi32>
    %15 = arith.cmpi ne, %13, %14 : vector<288x1xi32>
    %c0_i32_11 = arith.constant 0 : i32
    %16 = vector.broadcast %c0_i32_11 : i32 to vector<288x1xi32>
    %17 = arith.cmpi slt, %13, %16 : vector<288x1xi32>
    %c0_i32_12 = arith.constant 0 : i32
    %18 = arith.cmpi slt, %11, %c0_i32_12 : i32
    %19 = vector.broadcast %18 : i1 to vector<288x1xi1>
    %20 = vector.broadcast %19 : vector<288x1xi1> to vector<288x1xi1>
    %21 = arith.xori %17, %20 : vector<288x1xi1>
    %22 = arith.andi %21, %15 : vector<288x1xi1>
    %23 = vector.broadcast %11 : i32 to vector<288x1xi32>
    %24 = arith.addi %13, %23 : vector<288x1xi32>
    %25 = arith.select %22, %24, %13 : vector<288x1xi1>, vector<288x1xi32>
    %c16_i32 = arith.constant 16 : i32
    %26 = vector.broadcast %c16_i32 : i32 to vector<288x1xi32>
    %27 = arith.cmpi slt, %25, %26 : vector<288x1xi32>
    %28 = arith.extui %27 : vector<288x1xi1> to vector<288x1xi32>
    %29 = arith.sitofp %28 : vector<288x1xi32> to vector<288x1xf32>
    %30 = vector.broadcast %29 : vector<288x1xf32> to vector<288x128xf32>
    %31 = arith.mulf %4, %30 : vector<288x128xf32>
    %c0_i32_13 = arith.constant 0 : i32
    %32 = arith.cmpi eq, %arg1, %c0_i32_13 : i32
    %33 = arith.extui %32 : i1 to i32
    %c0_i32_14 = arith.constant 0 : i32
    %34 = arith.cmpi ne, %33, %c0_i32_14 : i32
    scf.if %34 {
      %cst_29 = arith.constant 0.000000e+00 : f32
      %48 = vector.broadcast %cst_29 : f32 to vector<1x1x128xf32>
      %c0_30 = arith.constant 0 : index
      %c0_31 = arith.constant 0 : index
      %c0_32 = arith.constant 0 : index
      %49 = vector.load %arg5[%c0_30, %c0_31, %c0_32] : memref<1x1x128xf32, #tpu.memory_space<vmem>>, vector<1x1x128xf32>
      tpu.vector_store %arg5[%c0_30, %c0_31, %c0_32], %48 {strides = array<i32>} : memref<1x1x128xf32, #tpu.memory_space<vmem>>, vector<1x1x128xf32>,
      %cst_33 = arith.constant 0.000000e+00 : f32
      %50 = vector.broadcast %cst_33 : f32 to vector<1x1x128xf32>
      %c0_34 = arith.constant 0 : index
      %c0_35 = arith.constant 0 : index
      %c0_36 = arith.constant 0 : index
      %51 = vector.load %arg6[%c0_34, %c0_35, %c0_36] : memref<1x1x128xf32, #tpu.memory_space<vmem>>, vector<1x1x128xf32>
      tpu.vector_store %arg6[%c0_34, %c0_35, %c0_36], %50 {strides = array<i32>} : memref<1x1x128xf32, #tpu.memory_space<vmem>>, vector<1x1x128xf32>,
    } else {
    }
    %c0_15 = arith.constant 0 : index
    %c0_16 = arith.constant 0 : index
    %c0_17 = arith.constant 0 : index
    %35 = vector.load %arg5[%c0_15, %c0_16, %c0_17] : memref<1x1x128xf32, #tpu.memory_space<vmem>>, vector<1x1x128xf32>
    %cst_18 = arith.constant dense<0.000000e+00> : vector<128xf32>
    %36 = vector.multi_reduction <add>, %31, %cst_18 [0] : vector<288x128xf32> to vector<128xf32>
    %37 = vector.shape_cast %36 : vector<128xf32> to vector<1x128xf32>
    %38 = vector.shape_cast %37 : vector<1x128xf32> to vector<1x1x128xf32>
    %39 = arith.addf %35, %38 : vector<1x1x128xf32>
    %c0_19 = arith.constant 0 : index
    %c0_20 = arith.constant 0 : index
    %c0_21 = arith.constant 0 : index
    %40 = vector.load %arg5[%c0_19, %c0_20, %c0_21] : memref<1x1x128xf32, #tpu.memory_space<vmem>>, vector<1x1x128xf32>
    tpu.vector_store %arg5[%c0_19, %c0_20, %c0_21], %39 {strides = array<i32>} : memref<1x1x128xf32, #tpu.memory_space<vmem>>, vector<1x1x128xf32>,
    %c0_22 = arith.constant 0 : index
    %c0_23 = arith.constant 0 : index
    %c0_24 = arith.constant 0 : index
    %41 = vector.load %arg6[%c0_22, %c0_23, %c0_24] : memref<1x1x128xf32, #tpu.memory_space<vmem>>, vector<1x1x128xf32>
    %42 = arith.mulf %31, %4 : vector<288x128xf32>
    %cst_25 = arith.constant dense<0.000000e+00> : vector<128xf32>
    %43 = vector.multi_reduction <add>, %42, %cst_25 [0] : vector<288x128xf32> to vector<128xf32>
    %44 = vector.shape_cast %43 : vector<128xf32> to vector<1x128xf32>
    %45 = vector.shape_cast %44 : vector<1x128xf32> to vector<1x1x128xf32>
    %46 = arith.addf %41, %45 : vector<1x1x128xf32>
    %c0_26 = arith.constant 0 : index
    %c0_27 = arith.constant 0 : index
    %c0_28 = arith.constant 0 : index
    %47 = vector.load %arg6[%c0_26, %c0_27, %c0_28] : memref<1x1x128xf32, #tpu.memory_space<vmem>>, vector<1x1x128xf32>
    tpu.vector_store %arg6[%c0_26, %c0_27, %c0_28], %46 {strides = array<i32>} : memref<1x1x128xf32, #tpu.memory_space<vmem>>, vector<1x1x128xf32>,
    return
  }
  func.func @transform_0(%arg0: i32, %arg1: i32) -> (i32, i32, i32, i32) {
    %c0_i32 = arith.constant 0 : i32
    %c0_i32_0 = arith.constant 0 : i32
    %c0_i32_1 = arith.constant 0 : i32
    return %arg0, %arg1, %c0_i32, %c0_i32_0 : i32, i32, i32, i32
  }
  func.func @transform_1(%arg0: i32, %arg1: i32) -> (i32, i32, i32) {
    %c0_i32 = arith.constant 0 : i32
    %c0_i32_0 = arith.constant 0 : i32
    %c0_i32_1 = arith.constant 0 : i32
    %c0_i32_2 = arith.constant 0 : i32
    return %c0_i32, %c0_i32_0, %c0_i32_1 : i32, i32, i32
  }
  func.func @transform_2(%arg0: i32, %arg1: i32) -> (i32, i32, i32, i32) {
    %c0_i32 = arith.constant 0 : i32
    %c0_i32_0 = arith.constant 0 : i32
    %c0_i32_1 = arith.constant 0 : i32
    return %arg0, %arg1, %c0_i32, %c0_i32_0 : i32, i32, i32, i32
  }
  func.func @transform_3(%arg0: i32, %arg1: i32) -> (i32, i32, i32) {
    %c0_i32 = arith.constant 0 : i32
    %c0_i32_0 = arith.constant 0 : i32
    %c0_i32_1 = arith.constant 0 : i32
    return %arg0, %c0_i32, %c0_i32_0 : i32, i32, i32
  }
  func.func @transform_4(%arg0: i32, %arg1: i32) -> (i32, i32, i32) {
    %c0_i32 = arith.constant 0 : i32
    %c0_i32_0 = arith.constant 0 : i32
    %c0_i32_1 = arith.constant 0 : i32
    return %arg0, %c0_i32, %c0_i32_0 : i32, i32, i32
  }
}

module attributes {stable_mosaic.version = 11 : i64} {
  func.func @kernel(%arg0: i32, %arg1: i32, %arg2: memref<1x1x288x128xbf16, #tpu.memory_space<vmem>>, %arg3: memref<1x1x1x128xf32, #tpu.memory_space<vmem>>, %arg4: memref<1x1x1x128xf32, #tpu.memory_space<vmem>>, %arg5: memref<1x1x288x128xbf16, #tpu.memory_space<vmem>>) attributes {dimension_semantics = [#tpu.dimension_semantics<parallel>, #tpu.dimension_semantics<parallel>], iteration_bounds = array<i64: 2, 1>, scalar_prefetch = 0 : i64, scratch_operands = 0 : i64, tpu.core_type = #tpu.core_type<tc>, window_params = [{transform_indices = @transform_0, window_bounds = array<i64: 1, 1, 288, 128>}, {pipeline_mode = #tpu.pipeline_mode<synchronous>, transform_indices = @transform_1, window_bounds = array<i64: 1, 1, 1, 128>}, {pipeline_mode = #tpu.pipeline_mode<synchronous>, transform_indices = @transform_2, window_bounds = array<i64: 1, 1, 1, 128>}, {transform_indices = @transform_3, window_bounds = array<i64: 1, 1, 288, 128>}]} {
    %c0 = arith.constant 0 : index
    %c0_0 = arith.constant 0 : index
    %c0_1 = arith.constant 0 : index
    %c0_2 = arith.constant 0 : index
    %0 = vector.load %arg2[%c0, %c0_0, %c0_1, %c0_2] : memref<1x1x288x128xbf16, #tpu.memory_space<vmem>>, vector<1x1x288x128xbf16>
    %1 = arith.extf %0 : vector<1x1x288x128xbf16> to vector<1x1x288x128xf32>
    %c0_3 = arith.constant 0 : index
    %c0_4 = arith.constant 0 : index
    %c0_5 = arith.constant 0 : index
    %c0_6 = arith.constant 0 : index
    %2 = vector.load %arg3[%c0_3, %c0_4, %c0_5, %c0_6] : memref<1x1x1x128xf32, #tpu.memory_space<vmem>>, vector<1x1x1x128xf32>
    %3 = vector.broadcast %2 : vector<1x1x1x128xf32> to vector<1x1x288x128xf32>
    %4 = arith.mulf %1, %3 : vector<1x1x288x128xf32>
    %c0_7 = arith.constant 0 : index
    %c0_8 = arith.constant 0 : index
    %c0_9 = arith.constant 0 : index
    %c0_10 = arith.constant 0 : index
    %5 = vector.load %arg4[%c0_7, %c0_8, %c0_9, %c0_10] : memref<1x1x1x128xf32, #tpu.memory_space<vmem>>, vector<1x1x1x128xf32>
    %6 = vector.broadcast %5 : vector<1x1x1x128xf32> to vector<1x1x288x128xf32>
    %7 = arith.addf %4, %6 : vector<1x1x288x128xf32>
    %cst = arith.constant 0.000000e+00 : f32
    %8 = vector.broadcast %cst : f32 to vector<1x1x288x128xf32>
    %9 = arith.maximumf %7, %8 : vector<1x1x288x128xf32>
    %10 = tpu.iota {dimensions = array<i32: 0>} : vector<288x1xi32>
    %c18_i32 = arith.constant 18 : i32
    %c0_i32 = arith.constant 0 : i32
    %11 = arith.cmpi eq, %c18_i32, %c0_i32 : i32
    %c1_i32 = arith.constant 1 : i32
    %12 = arith.select %11, %c1_i32, %c18_i32 : i32
    %13 = vector.broadcast %12 : i32 to vector<288x1xi32>
    %14 = arith.remsi %10, %13 : vector<288x1xi32>
    %c0_i32_11 = arith.constant 0 : i32
    %15 = vector.broadcast %c0_i32_11 : i32 to vector<288x1xi32>
    %16 = arith.cmpi ne, %14, %15 : vector<288x1xi32>
    %c0_i32_12 = arith.constant 0 : i32
    %17 = vector.broadcast %c0_i32_12 : i32 to vector<288x1xi32>
    %18 = arith.cmpi slt, %14, %17 : vector<288x1xi32>
    %c0_i32_13 = arith.constant 0 : i32
    %19 = arith.cmpi slt, %12, %c0_i32_13 : i32
    %20 = vector.broadcast %19 : i1 to vector<288x1xi1>
    %21 = vector.broadcast %20 : vector<288x1xi1> to vector<288x1xi1>
    %22 = arith.xori %18, %21 : vector<288x1xi1>
    %23 = arith.andi %22, %16 : vector<288x1xi1>
    %24 = vector.broadcast %12 : i32 to vector<288x1xi32>
    %25 = arith.addi %14, %24 : vector<288x1xi32>
    %26 = arith.select %23, %25, %14 : vector<288x1xi1>, vector<288x1xi32>
    %c16_i32 = arith.constant 16 : i32
    %27 = vector.broadcast %c16_i32 : i32 to vector<288x1xi32>
    %28 = arith.cmpi slt, %26, %27 : vector<288x1xi32>
    %29 = arith.extui %28 : vector<288x1xi1> to vector<288x1xi32>
    %30 = arith.sitofp %29 : vector<288x1xi32> to vector<288x1xf32>
    %31 = vector.shape_cast %30 : vector<288x1xf32> to vector<1x1x288x1xf32>
    %32 = vector.broadcast %31 : vector<1x1x288x1xf32> to vector<1x1x288x128xf32>
    %33 = arith.mulf %9, %32 : vector<1x1x288x128xf32>
    %34 = arith.truncf %33 : vector<1x1x288x128xf32> to vector<1x1x288x128xbf16>
    %c0_14 = arith.constant 0 : index
    %c0_15 = arith.constant 0 : index
    %c0_16 = arith.constant 0 : index
    %c0_17 = arith.constant 0 : index
    %35 = vector.load %arg5[%c0_14, %c0_15, %c0_16, %c0_17] : memref<1x1x288x128xbf16, #tpu.memory_space<vmem>>, vector<1x1x288x128xbf16>
    tpu.vector_store %arg5[%c0_14, %c0_15, %c0_16, %c0_17], %34 {strides = array<i32>} : memref<1x1x288x128xbf16, #tpu.memory_space<vmem>>, vector<1x1x288x128xbf16>,
    return
  }
  func.func @transform_0(%arg0: i32, %arg1: i32) -> (i32, i32, i32, i32) {
    %c0_i32 = arith.constant 0 : i32
    %c0_i32_0 = arith.constant 0 : i32
    %c0_i32_1 = arith.constant 0 : i32
    return %arg0, %arg1, %c0_i32, %c0_i32_0 : i32, i32, i32, i32
  }
  func.func @transform_1(%arg0: i32, %arg1: i32) -> (i32, i32, i32, i32) {
    %c0_i32 = arith.constant 0 : i32
    %c0_i32_0 = arith.constant 0 : i32
    %c0_i32_1 = arith.constant 0 : i32
    %c0_i32_2 = arith.constant 0 : i32
    %c0_i32_3 = arith.constant 0 : i32
    return %c0_i32, %c0_i32_0, %c0_i32_1, %c0_i32_2 : i32, i32, i32, i32
  }
  func.func @transform_2(%arg0: i32, %arg1: i32) -> (i32, i32, i32, i32) {
    %c0_i32 = arith.constant 0 : i32
    %c0_i32_0 = arith.constant 0 : i32
    %c0_i32_1 = arith.constant 0 : i32
    %c0_i32_2 = arith.constant 0 : i32
    %c0_i32_3 = arith.constant 0 : i32
    return %c0_i32, %c0_i32_0, %c0_i32_1, %c0_i32_2 : i32, i32, i32, i32
  }
  func.func @transform_3(%arg0: i32, %arg1: i32) -> (i32, i32, i32, i32) {
    %c0_i32 = arith.constant 0 : i32
    %c0_i32_0 = arith.constant 0 : i32
    %c0_i32_1 = arith.constant 0 : i32
    return %arg0, %arg1, %c0_i32, %c0_i32_0 : i32, i32, i32, i32
  }
}

module attributes {stable_mosaic.version = 11 : i64} {
  func.func @kernel(%arg0: i32, %arg1: i32, %arg2: memref<1x1x288x128xf32, #tpu.memory_space<vmem>>, %arg3: memref<1x1x1x128xf32, #tpu.memory_space<vmem>>, %arg4: memref<1x1x1x128xf32, #tpu.memory_space<vmem>>, %arg5: memref<1x1x288x128xf32, #tpu.memory_space<vmem>>) attributes {dimension_semantics = [#tpu.dimension_semantics<parallel>, #tpu.dimension_semantics<parallel>], iteration_bounds = array<i64: 2, 1>, scalar_prefetch = 0 : i64, scratch_operands = 0 : i64, tpu.core_type = #tpu.core_type<tc>, window_params = [{transform_indices = @transform_0, window_bounds = array<i64: 1, 1, 288, 128>}, {pipeline_mode = #tpu.pipeline_mode<synchronous>, transform_indices = @transform_1, window_bounds = array<i64: 1, 1, 1, 128>}, {pipeline_mode = #tpu.pipeline_mode<synchronous>, transform_indices = @transform_2, window_bounds = array<i64: 1, 1, 1, 128>}, {transform_indices = @transform_3, window_bounds = array<i64: 1, 1, 288, 128>}]} {
    %c0 = arith.constant 0 : index
    %c0_0 = arith.constant 0 : index
    %c0_1 = arith.constant 0 : index
    %c0_2 = arith.constant 0 : index
    %0 = vector.load %arg2[%c0, %c0_0, %c0_1, %c0_2] : memref<1x1x288x128xf32, #tpu.memory_space<vmem>>, vector<1x1x288x128xf32>
    %c0_3 = arith.constant 0 : index
    %c0_4 = arith.constant 0 : index
    %c0_5 = arith.constant 0 : index
    %c0_6 = arith.constant 0 : index
    %1 = vector.load %arg3[%c0_3, %c0_4, %c0_5, %c0_6] : memref<1x1x1x128xf32, #tpu.memory_space<vmem>>, vector<1x1x1x128xf32>
    %2 = vector.broadcast %1 : vector<1x1x1x128xf32> to vector<1x1x288x128xf32>
    %3 = arith.mulf %0, %2 : vector<1x1x288x128xf32>
    %c0_7 = arith.constant 0 : index
    %c0_8 = arith.constant 0 : index
    %c0_9 = arith.constant 0 : index
    %c0_10 = arith.constant 0 : index
    %4 = vector.load %arg4[%c0_7, %c0_8, %c0_9, %c0_10] : memref<1x1x1x128xf32, #tpu.memory_space<vmem>>, vector<1x1x1x128xf32>
    %5 = vector.broadcast %4 : vector<1x1x1x128xf32> to vector<1x1x288x128xf32>
    %6 = arith.addf %3, %5 : vector<1x1x288x128xf32>
    %cst = arith.constant 0.000000e+00 : f32
    %7 = vector.broadcast %cst : f32 to vector<1x1x288x128xf32>
    %8 = arith.maximumf %6, %7 : vector<1x1x288x128xf32>
    %9 = tpu.iota {dimensions = array<i32: 0>} : vector<288x1xi32>
    %c18_i32 = arith.constant 18 : i32
    %c0_i32 = arith.constant 0 : i32
    %10 = arith.cmpi eq, %c18_i32, %c0_i32 : i32
    %c1_i32 = arith.constant 1 : i32
    %11 = arith.select %10, %c1_i32, %c18_i32 : i32
    %12 = vector.broadcast %11 : i32 to vector<288x1xi32>
    %13 = arith.remsi %9, %12 : vector<288x1xi32>
    %c0_i32_11 = arith.constant 0 : i32
    %14 = vector.broadcast %c0_i32_11 : i32 to vector<288x1xi32>
    %15 = arith.cmpi ne, %13, %14 : vector<288x1xi32>
    %c0_i32_12 = arith.constant 0 : i32
    %16 = vector.broadcast %c0_i32_12 : i32 to vector<288x1xi32>
    %17 = arith.cmpi slt, %13, %16 : vector<288x1xi32>
    %c0_i32_13 = arith.constant 0 : i32
    %18 = arith.cmpi slt, %11, %c0_i32_13 : i32
    %19 = vector.broadcast %18 : i1 to vector<288x1xi1>
    %20 = vector.broadcast %19 : vector<288x1xi1> to vector<288x1xi1>
    %21 = arith.xori %17, %20 : vector<288x1xi1>
    %22 = arith.andi %21, %15 : vector<288x1xi1>
    %23 = vector.broadcast %11 : i32 to vector<288x1xi32>
    %24 = arith.addi %13, %23 : vector<288x1xi32>
    %25 = arith.select %22, %24, %13 : vector<288x1xi1>, vector<288x1xi32>
    %c16_i32 = arith.constant 16 : i32
    %26 = vector.broadcast %c16_i32 : i32 to vector<288x1xi32>
    %27 = arith.cmpi slt, %25, %26 : vector<288x1xi32>
    %28 = arith.extui %27 : vector<288x1xi1> to vector<288x1xi32>
    %29 = arith.sitofp %28 : vector<288x1xi32> to vector<288x1xf32>
    %30 = vector.shape_cast %29 : vector<288x1xf32> to vector<1x1x288x1xf32>
    %31 = vector.broadcast %30 : vector<1x1x288x1xf32> to vector<1x1x288x128xf32>
    %32 = arith.mulf %8, %31 : vector<1x1x288x128xf32>
    %c0_14 = arith.constant 0 : index
    %c0_15 = arith.constant 0 : index
    %c0_16 = arith.constant 0 : index
    %c0_17 = arith.constant 0 : index
    %33 = vector.load %arg5[%c0_14, %c0_15, %c0_16, %c0_17] : memref<1x1x288x128xf32, #tpu.memory_space<vmem>>, vector<1x1x288x128xf32>
    tpu.vector_store %arg5[%c0_14, %c0_15, %c0_16, %c0_17], %32 {strides = array<i32>} : memref<1x1x288x128xf32, #tpu.memory_space<vmem>>, vector<1x1x288x128xf32>,
    return
  }
  func.func @transform_0(%arg0: i32, %arg1: i32) -> (i32, i32, i32, i32) {
    %c0_i32 = arith.constant 0 : i32
    %c0_i32_0 = arith.constant 0 : i32
    %c0_i32_1 = arith.constant 0 : i32
    return %arg0, %arg1, %c0_i32, %c0_i32_0 : i32, i32, i32, i32
  }
  func.func @transform_1(%arg0: i32, %arg1: i32) -> (i32, i32, i32, i32) {
    %c0_i32 = arith.constant 0 : i32
    %c0_i32_0 = arith.constant 0 : i32
    %c0_i32_1 = arith.constant 0 : i32
    %c0_i32_2 = arith.constant 0 : i32
    %c0_i32_3 = arith.constant 0 : i32
    return %c0_i32, %c0_i32_0, %c0_i32_1, %c0_i32_2 : i32, i32, i32, i32
  }
  func.func @transform_2(%arg0: i32, %arg1: i32) -> (i32, i32, i32, i32) {
    %c0_i32 = arith.constant 0 : i32
    %c0_i32_0 = arith.constant 0 : i32
    %c0_i32_1 = arith.constant 0 : i32
    %c0_i32_2 = arith.constant 0 : i32
    %c0_i32_3 = arith.constant 0 : i32
    return %c0_i32, %c0_i32_0, %c0_i32_1, %c0_i32_2 : i32, i32, i32, i32
  }
  func.func @transform_3(%arg0: i32, %arg1: i32) -> (i32, i32, i32, i32) {
    %c0_i32 = arith.constant 0 : i32
    %c0_i32_0 = arith.constant 0 : i32
    %c0_i32_1 = arith.constant 0 : i32
    return %arg0, %arg1, %c0_i32, %c0_i32_0 : i32, i32, i32, i32
  }
}

module attributes {stable_mosaic.version = 11 : i64} {
  func.func @kernel(%arg0: i32, %arg1: i32, %arg2: memref<1x1x288x128xbf16, #tpu.memory_space<vmem>>, %arg3: memref<1x128x128xbf16, #tpu.memory_space<vmem>>, %arg4: memref<1x1x288x128xf32, #tpu.memory_space<vmem>>, %arg5: memref<1x1x128xf32, #tpu.memory_space<vmem>>, %arg6: memref<1x1x128xf32, #tpu.memory_space<vmem>>) attributes {dimension_semantics = [#tpu.dimension_semantics<parallel>, #tpu.dimension_semantics<arbitrary>], iteration_bounds = array<i64: 2, 1>, scalar_prefetch = 0 : i64, scratch_operands = 0 : i64, tpu.core_type = #tpu.core_type<tc>, window_params = [{transform_indices = @transform_0, window_bounds = array<i64: 1, 1, 288, 128>}, {pipeline_mode = #tpu.pipeline_mode<synchronous>, transform_indices = @transform_1, window_bounds = array<i64: 1, 128, 128>}, {transform_indices = @transform_2, window_bounds = array<i64: 1, 1, 288, 128>}, {transform_indices = @transform_3, window_bounds = array<i64: 1, 1, 128>}, {transform_indices = @transform_4, window_bounds = array<i64: 1, 1, 128>}]} {
    %c0 = arith.constant 0 : index
    %c0_0 = arith.constant 0 : index
    %c0_1 = arith.constant 0 : index
    %c0_2 = arith.constant 0 : index
    %0 = vector.load %arg2[%c0, %c0_0, %c0_1, %c0_2] : memref<1x1x288x128xbf16, #tpu.memory_space<vmem>>, vector<1x1x288x128xbf16>
    %1 = vector.shape_cast %0 : vector<1x1x288x128xbf16> to vector<288x128xbf16>
    %c0_3 = arith.constant 0 : index
    %c0_4 = arith.constant 0 : index
    %c0_5 = arith.constant 0 : index
    %2 = vector.load %arg3[%c0_3, %c0_4, %c0_5] : memref<1x128x128xbf16, #tpu.memory_space<vmem>>, vector<1x128x128xbf16>
    %3 = vector.shape_cast %2 : vector<1x128x128xbf16> to vector<128x128xbf16>
    %cst = arith.constant dense<0.000000e+00> : vector<288x128xf32>
    %4 = tpu.matmul %1, %3, %cst {dimension_numbers = #tpu.dot_dimension_numbers<[1], [0], [0], [1], [0, 0, 1, 1], [], []>} : vector<288x128xbf16>, vector<128x128xbf16>, vector<288x128xf32> -> vector<288x128xf32>
    %c0_6 = arith.constant 0 : index
    %c0_7 = arith.constant 0 : index
    %c0_8 = arith.constant 0 : index
    %c0_9 = arith.constant 0 : index
    %5 = vector.load %arg4[%c0_6, %c0_7, %c0_8, %c0_9] : memref<1x1x288x128xf32, #tpu.memory_space<vmem>>, vector<1x1x288x128xf32>
    %6 = vector.shape_cast %5 : vector<1x1x288x128xf32> to vector<288x128xf32>
    %7 = vector.shape_cast %4 : vector<288x128xf32> to vector<1x1x288x128xf32>
    tpu.vector_store %arg4[%c0_6, %c0_7, %c0_8, %c0_9], %7 {strides = array<i32>} : memref<1x1x288x128xf32, #tpu.memory_space<vmem>>, vector<1x1x288x128xf32>,
    %8 = tpu.iota {dimensions = array<i32: 0>} : vector<288x1xi32>
    %c18_i32 = arith.constant 18 : i32
    %c0_i32 = arith.constant 0 : i32
    %9 = arith.cmpi eq, %c18_i32, %c0_i32 : i32
    %c1_i32 = arith.constant 1 : i32
    %10 = arith.select %9, %c1_i32, %c18_i32 : i32
    %11 = vector.broadcast %10 : i32 to vector<288x1xi32>
    %12 = arith.remsi %8, %11 : vector<288x1xi32>
    %c0_i32_10 = arith.constant 0 : i32
    %13 = vector.broadcast %c0_i32_10 : i32 to vector<288x1xi32>
    %14 = arith.cmpi ne, %12, %13 : vector<288x1xi32>
    %c0_i32_11 = arith.constant 0 : i32
    %15 = vector.broadcast %c0_i32_11 : i32 to vector<288x1xi32>
    %16 = arith.cmpi slt, %12, %15 : vector<288x1xi32>
    %c0_i32_12 = arith.constant 0 : i32
    %17 = arith.cmpi slt, %10, %c0_i32_12 : i32
    %18 = vector.broadcast %17 : i1 to vector<288x1xi1>
    %19 = vector.broadcast %18 : vector<288x1xi1> to vector<288x1xi1>
    %20 = arith.xori %16, %19 : vector<288x1xi1>
    %21 = arith.andi %20, %14 : vector<288x1xi1>
    %22 = vector.broadcast %10 : i32 to vector<288x1xi32>
    %23 = arith.addi %12, %22 : vector<288x1xi32>
    %24 = arith.select %21, %23, %12 : vector<288x1xi1>, vector<288x1xi32>
    %c16_i32 = arith.constant 16 : i32
    %25 = vector.broadcast %c16_i32 : i32 to vector<288x1xi32>
    %26 = arith.cmpi slt, %24, %25 : vector<288x1xi32>
    %27 = arith.extui %26 : vector<288x1xi1> to vector<288x1xi32>
    %28 = arith.sitofp %27 : vector<288x1xi32> to vector<288x1xf32>
    %29 = vector.broadcast %28 : vector<288x1xf32> to vector<288x128xf32>
    %30 = arith.mulf %4, %29 : vector<288x128xf32>
    %c0_i32_13 = arith.constant 0 : i32
    %31 = arith.cmpi eq, %arg1, %c0_i32_13 : i32
    %32 = arith.extui %31 : i1 to i32
    %c0_i32_14 = arith.constant 0 : i32
    %33 = arith.cmpi ne, %32, %c0_i32_14 : i32
    scf.if %33 {
      %cst_29 = arith.constant 0.000000e+00 : f32
      %47 = vector.broadcast %cst_29 : f32 to vector<1x1x128xf32>
      %c0_30 = arith.constant 0 : index
      %c0_31 = arith.constant 0 : index
      %c0_32 = arith.constant 0 : index
      %48 = vector.load %arg5[%c0_30, %c0_31, %c0_32] : memref<1x1x128xf32, #tpu.memory_space<vmem>>, vector<1x1x128xf32>
      tpu.vector_store %arg5[%c0_30, %c0_31, %c0_32], %47 {strides = array<i32>} : memref<1x1x128xf32, #tpu.memory_space<vmem>>, vector<1x1x128xf32>,
      %cst_33 = arith.constant 0.000000e+00 : f32
      %49 = vector.broadcast %cst_33 : f32 to vector<1x1x128xf32>
      %c0_34 = arith.constant 0 : index
      %c0_35 = arith.constant 0 : index
      %c0_36 = arith.constant 0 : index
      %50 = vector.load %arg6[%c0_34, %c0_35, %c0_36] : memref<1x1x128xf32, #tpu.memory_space<vmem>>, vector<1x1x128xf32>
      tpu.vector_store %arg6[%c0_34, %c0_35, %c0_36], %49 {strides = array<i32>} : memref<1x1x128xf32, #tpu.memory_space<vmem>>, vector<1x1x128xf32>,
    } else {
    }
    %c0_15 = arith.constant 0 : index
    %c0_16 = arith.constant 0 : index
    %c0_17 = arith.constant 0 : index
    %34 = vector.load %arg5[%c0_15, %c0_16, %c0_17] : memref<1x1x128xf32, #tpu.memory_space<vmem>>, vector<1x1x128xf32>
    %cst_18 = arith.constant dense<0.000000e+00> : vector<128xf32>
    %35 = vector.multi_reduction <add>, %30, %cst_18 [0] : vector<288x128xf32> to vector<128xf32>
    %36 = vector.shape_cast %35 : vector<128xf32> to vector<1x128xf32>
    %37 = vector.shape_cast %36 : vector<1x128xf32> to vector<1x1x128xf32>
    %38 = arith.addf %34, %37 : vector<1x1x128xf32>
    %c0_19 = arith.constant 0 : index
    %c0_20 = arith.constant 0 : index
    %c0_21 = arith.constant 0 : index
    %39 = vector.load %arg5[%c0_19, %c0_20, %c0_21] : memref<1x1x128xf32, #tpu.memory_space<vmem>>, vector<1x1x128xf32>
    tpu.vector_store %arg5[%c0_19, %c0_20, %c0_21], %38 {strides = array<i32>} : memref<1x1x128xf32, #tpu.memory_space<vmem>>, vector<1x1x128xf32>,
    %c0_22 = arith.constant 0 : index
    %c0_23 = arith.constant 0 : index
    %c0_24 = arith.constant 0 : index
    %40 = vector.load %arg6[%c0_22, %c0_23, %c0_24] : memref<1x1x128xf32, #tpu.memory_space<vmem>>, vector<1x1x128xf32>
    %41 = arith.mulf %30, %4 : vector<288x128xf32>
    %cst_25 = arith.constant dense<0.000000e+00> : vector<128xf32>
    %42 = vector.multi_reduction <add>, %41, %cst_25 [0] : vector<288x128xf32> to vector<128xf32>
    %43 = vector.shape_cast %42 : vector<128xf32> to vector<1x128xf32>
    %44 = vector.shape_cast %43 : vector<1x128xf32> to vector<1x1x128xf32>
    %45 = arith.addf %40, %44 : vector<1x1x128xf32>
    %c0_26 = arith.constant 0 : index
    %c0_27 = arith.constant 0 : index
    %c0_28 = arith.constant 0 : index
    %46 = vector.load %arg6[%c0_26, %c0_27, %c0_28] : memref<1x1x128xf32, #tpu.memory_space<vmem>>, vector<1x1x128xf32>
    tpu.vector_store %arg6[%c0_26, %c0_27, %c0_28], %45 {strides = array<i32>} : memref<1x1x128xf32, #tpu.memory_space<vmem>>, vector<1x1x128xf32>,
    return
  }
  func.func @transform_0(%arg0: i32, %arg1: i32) -> (i32, i32, i32, i32) {
    %c0_i32 = arith.constant 0 : i32
    %c0_i32_0 = arith.constant 0 : i32
    %c0_i32_1 = arith.constant 0 : i32
    return %arg0, %arg1, %c0_i32, %c0_i32_0 : i32, i32, i32, i32
  }
  func.func @transform_1(%arg0: i32, %arg1: i32) -> (i32, i32, i32) {
    %c0_i32 = arith.constant 0 : i32
    %c0_i32_0 = arith.constant 0 : i32
    %c0_i32_1 = arith.constant 0 : i32
    %c0_i32_2 = arith.constant 0 : i32
    return %c0_i32, %c0_i32_0, %c0_i32_1 : i32, i32, i32
  }
  func.func @transform_2(%arg0: i32, %arg1: i32) -> (i32, i32, i32, i32) {
    %c0_i32 = arith.constant 0 : i32
    %c0_i32_0 = arith.constant 0 : i32
    %c0_i32_1 = arith.constant 0 : i32
    return %arg0, %arg1, %c0_i32, %c0_i32_0 : i32, i32, i32, i32
  }
  func.func @transform_3(%arg0: i32, %arg1: i32) -> (i32, i32, i32) {
    %c0_i32 = arith.constant 0 : i32
    %c0_i32_0 = arith.constant 0 : i32
    %c0_i32_1 = arith.constant 0 : i32
    return %arg0, %c0_i32, %c0_i32_0 : i32, i32, i32
  }
  func.func @transform_4(%arg0: i32, %arg1: i32) -> (i32, i32, i32) {
    %c0_i32 = arith.constant 0 : i32
    %c0_i32_0 = arith.constant 0 : i32
    %c0_i32_1 = arith.constant 0 : i32
    return %arg0, %c0_i32, %c0_i32_0 : i32, i32, i32
  }
}

</mosaic_0001>

<llo_original>
// kernel: conv_block_forward.5
$region0: #{conv_block_forward.5}
  #allocation0 [shape = 'u32[]', space=smem, size = 0x4, offset = 0x4, fixed_abs, tag = 'smem constant byte address 0x4 - core index']
  #allocation1 [shape = 'u32[144,128]{1,0:T(1,128)}', space=vmem, size = 0x12000, scoped, tag = 'internal scratch']
  %s0 = inlined_call_operand.vmem [shape: bf16[2,1,288,128], index: 0, kind: input, shape index: {}, may-alias: {0,3}]
  %s1 = inlined_call_operand.vmem [shape: f32[1,1,1,128], index: 1, kind: input, shape index: {}]
  %s2 = inlined_call_operand.vmem [shape: f32[1,1,1,128], index: 2, kind: input, shape index: {}]
  %s3 = inlined_call_operand.vmem [shape: bf16[2,1,288,128], index: 3, kind: output, shape index: {}, may-alias: {0,3}]
  %s4 = sld [smem:[#allocation0]]
  $region45: #{conv_block_forward.5} parent=0
    _
  %s6 = ssub.s32 1, %s4
  %s7 = scalar_select 0, %s6, %s4
  loop: start=0, step=1, limit=4
  $region2: #{conv_block_forward.5} parent=0 // loop_pre_header
    _
  $region3: #{conv_block_forward.5} parent=0 // loop_header
    %s9 = sphi 0, %s13
    %p10 = scmp.ge.s32.totalorder %s9, 4
    %s16 = sphi 0, %s28
    %s17 = sphi 0, %s24
    %s18 = sphi 0, %s16
    %s19 = sphi 0, %s17
    %s20 = sphi 0, %s18
    %s21 = sphi 0, %s19
    %s33 = sphi 0, %s35
    %s36 = sphi 0, %s33
    %s37 = sphi 0, %s36
    %s53 = sphi 0, %s37
    %s57 = sphi 0, %s57
    %s59 = sphi 0, %s57
    %s60 = sphi 0, %s59
    %s74 = sphi 0, %s60
    %s78 = sphi 0, %s78
    %s80 = sphi 0, %s78
    %s81 = sphi 0, %s80
    %s95 = sphi 0, %s81
    %s103 = sphi 0, %s105
    %s106 = sphi 0, %s103
    %s107 = sphi 0, %s106
    %s123 = sphi 0, %s107
  $region4: #{conv_block_forward.5} parent=0 // loop_header_branch
    %12 = sbr.rel (%p10) target = $region8
  $region5: #{conv_block_forward.5} parent=0 // loop_body
    %s14 = ssub.s32 %s9, 1
    %s15 = ssub.s32 %s9, 2
    %s22 = sadd.s32 1, %s17
    %p23 = scmp.ge.s32.totalorder %s22, 1
    %s24 = scalar_select %p23, 0, %s22
    %s25 = sadd.s32 1, %s16
    %s26 = scalar_select %p23, %s25, %s16
    %p27 = scmp.ge.s32.totalorder %s26, 2
    %s28 = scalar_select %p27, 0, %s26
    %s29 = ssub.s32 %s16, %s28
    %s30 = ssub.s32 %s17, %s24
    %s31 = sor.u32 %s29, %s30
    %p32 = scmp.eq.s32.totalorder %s31, 0
    %s34 = sadd.s32 %s33, 1
    %s35 = scalar_select %p32, %s33, %s34
    %p38 = pneg %p32
    %p39 = scmp.eq.s32.totalorder %s9, 1
    %p40 = por %p38, %p39
    %p41 = scmp.ne.s32.totalorder %s33, %s36
    %p42 = scmp.eq.s32.totalorder %s9, 0
    %p43 = por %p41, %p42
    %p44 = scmp.ne.s32.totalorder %s33, %s36
    %p45 = scmp.eq.s32.totalorder %s14, 1
    %p46 = por %p44, %p45
    %p47 = scmp.ne.s32.totalorder %s36, %s37
    %p48 = scmp.eq.s32.totalorder %s14, 0
    %p49 = por %p47, %p48
    %p50 = scmp.ne.s32.totalorder %s36, %s37
    %p51 = scmp.eq.s32.totalorder %s15, 1
    %p52 = por %p50, %p51
    %p54 = scmp.ne.s32.totalorder %s37, %s53
    %p55 = scmp.eq.s32.totalorder %s15, 0
    %p56 = por %p54, %p55
    %s58 = sadd.s32 %s57, 1
    %p61 = scmp.eq.s32.totalorder %s9, 1
    %p62 = scmp.ne.s32.totalorder %s57, %s59
    %p63 = scmp.eq.s32.totalorder %s9, 0
    %p64 = por %p62, %p63
    %p65 = scmp.ne.s32.totalorder %s57, %s59
    %p66 = scmp.eq.s32.totalorder %s14, 1
    %p67 = por %p65, %p66
    %p68 = scmp.ne.s32.totalorder %s59, %s60
    %p69 = scmp.eq.s32.totalorder %s14, 0
    %p70 = por %p68, %p69
    %p71 = scmp.ne.s32.totalorder %s59, %s60
    %p72 = scmp.eq.s32.totalorder %s15, 1
    %p73 = por %p71, %p72
    %p75 = scmp.ne.s32.totalorder %s60, %s74
    %p76 = scmp.eq.s32.totalorder %s15, 0
    %p77 = por %p75, %p76
    %s79 = sadd.s32 %s78, 1
    %p82 = scmp.eq.s32.totalorder %s9, 1
    %p83 = scmp.ne.s32.totalorder %s78, %s80
    %p84 = scmp.eq.s32.totalorder %s9, 0
    %p85 = por %p83, %p84
    %p86 = scmp.ne.s32.totalorder %s78, %s80
    %p87 = scmp.eq.s32.totalorder %s14, 1
    %p88 = por %p86, %p87
    %p89 = scmp.ne.s32.totalorder %s80, %s81
    %p90 = scmp.eq.s32.totalorder %s14, 0
    %p91 = por %p89, %p90
    %p92 = scmp.ne.s32.totalorder %s80, %s81
    %p93 = scmp.eq.s32.totalorder %s15, 1
    %p94 = por %p92, %p93
    %p96 = scmp.ne.s32.totalorder %s81, %s95
    %p97 = scmp.eq.s32.totalorder %s15, 0
    %p98 = por %p96, %p97
    %s99 = ssub.s32 %s16, %s28
    %s100 = ssub.s32 %s17, %s24
    %s101 = sor.u32 %s99, %s100
    %p102 = scmp.eq.s32.totalorder %s101, 0
    %s104 = sadd.s32 %s103, 1
    %s105 = scalar_select %p102, %s103, %s104
    %p108 = pneg %p102
    %p109 = scmp.eq.s32.totalorder %s9, 1
    %p110 = por %p108, %p109
    %p111 = scmp.ne.s32.totalorder %s103, %s106
    %p112 = scmp.eq.s32.totalorder %s9, 0
    %p113 = por %p111, %p112
    %p114 = scmp.ne.s32.totalorder %s103, %s106
    %p115 = scmp.eq.s32.totalorder %s14, 1
    %p116 = por %p114, %p115
    %p117 = scmp.ne.s32.totalorder %s106, %s107
    %p118 = scmp.eq.s32.totalorder %s14, 0
    %p119 = por %p117, %p118
    %p120 = scmp.ne.s32.totalorder %s106, %s107
    %p121 = scmp.eq.s32.totalorder %s15, 1
    %p122 = por %p120, %p121
    %p124 = scmp.ne.s32.totalorder %s107, %s123
    %p125 = scmp.eq.s32.totalorder %s15, 0
    %p126 = por %p124, %p125
    %p127 = scmp.le.s32.totalorder 1, %s9
    %p128 = scmp.lt.s32.totalorder %s9, 3
    %p129 = pnand %p127, %p128
    %p130 = pneg %p129
    // Predicated region
    $region9: #{conv_block_forward.5} parent=5 // pred_check
      _
    $region10: #{conv_block_forward.5} parent=5 // pred_check_branch
      %132 = sbr.rel (%p129) target = $region12
    $region11: #{conv_block_forward.5} parent=5 // pred_region
      %s133 = ssub.s32 %s9, 1
      // Predicated region
      $region13: #{conv_block_forward.5} parent=11 // pred_check
        %p134 = pneg %p70
      $region14: #{conv_block_forward.5} parent=11 // pred_check_branch
        %136 = sbr.rel (%p134) target = $region16
      $region15: #{conv_block_forward.5} parent=11 // pred_region
        _
      $region16: #{conv_block_forward.5} parent=11 // pred_fallthru
        _
      // Predicated region
      $region17: #{conv_block_forward.5} parent=11 // pred_check
        %p137 = pneg %p91
      $region18: #{conv_block_forward.5} parent=11 // pred_check_branch
        %139 = sbr.rel (%p137) target = $region20
      $region19: #{conv_block_forward.5} parent=11 // pred_region
        _
      $region20: #{conv_block_forward.5} parent=11 // pred_fallthru
        _
    $region12: #{conv_block_forward.5} parent=5 // pred_fallthru
      _
    %p140 = scmp.lt.s32.totalorder %s9, 2
    // Predicated region
    $region21: #{conv_block_forward.5} parent=5 // pred_check
      %p141 = pneg %p140
    $region22: #{conv_block_forward.5} parent=5 // pred_check_branch
      %143 = sbr.rel (%p141) target = $region24
    $region23: #{conv_block_forward.5} parent=5 // pred_region
      // Predicated region
      $region25: #{conv_block_forward.5} parent=23 // pred_check
        %p144 = pneg %p43
      $region26: #{conv_block_forward.5} parent=23 // pred_check_branch
        %146 = sbr.rel (%p144) target = $region28
      $region27: #{conv_block_forward.5} parent=23 // pred_region
        %p147 = scmp.lt.s32.totalorder %s16, 1
        %s148 = scalar_select %p147, %s16, 1
        %p149 = scmp.lt.s32.totalorder %s17, 0
        %s150 = scalar_select %p149, %s17, 0
        %s151 = smul.addr %s150, 36
        %s152 = smul.addr %s148, 36
        %s153 = sadd.s32 %s151, %s152
        %s154 = smul.addr %s153, 4
        %s155 = scalar_lea.vmem %s0, %s154
      $region28: #{conv_block_forward.5} parent=23 // pred_fallthru
        _
    $region24: #{conv_block_forward.5} parent=5 // pred_fallthru
      _
    %p156 = scmp.le.s32.totalorder 1, %s9
    %p157 = scmp.lt.s32.totalorder %s9, 3
    %p158 = pnand %p156, %p157
    %p159 = pneg %p158
    // Predicated region
    $region29: #{conv_block_forward.5} parent=5 // pred_check
      _
    $region30: #{conv_block_forward.5} parent=5 // pred_check_branch
      %161 = sbr.rel (%p158) target = $region32
    $region31: #{conv_block_forward.5} parent=5 // pred_region
      %s162 = ssub.s32 %s9, 1
      %p163 = scmp.lt.s32.totalorder %s18, 1
      %s164 = scalar_select %p163, %s18, 1
      %p165 = scmp.lt.s32.totalorder %s19, 0
      %s166 = scalar_select %p165, %s19, 0
      %s167 = smul.addr %s166, 36
      %s168 = smul.addr %s164, 36
      %s169 = sadd.s32 %s167, %s168
      %s170 = smul.addr %s169, 4
      %s171 = scalar_lea.vmem %s0, %s170
      %p172 = pneg %p49
      %p173 = pneg %p46
      %p174 = pneg %p70
      %p175 = pneg %p67
      %p176 = pneg %p91
      %p177 = pneg %p88
      %p178 = pneg %p119
      %p179 = pneg %p116
      %p180 = scmp.lt.s32.totalorder %s18, 1
      %s181 = scalar_select %p180, %s18, 1
      %p182 = scmp.lt.s32.totalorder %s19, 0
      %s183 = scalar_select %p182, %s19, 0
      %s184 = smul.addr %s183, 36
      %s185 = smul.addr %s181, 36
      %s186 = sadd.s32 %s184, %s185
      %s187 = smul.addr %s186, 4
      %s188 = scalar_lea.vmem %s3, %s187
      %p189 = scmp.lt.s32.totalorder %s18, 1
      %s190 = scalar_select %p189, %s18, 1
      %p191 = scmp.lt.s32.totalorder %s19, 0
      %s192 = scalar_select %p191, %s19, 0
      %s193 = smul.addr %s192, 36
      %s194 = smul.addr %s190, 36
      %s195 = sadd.s32 %s193, %s194
      %s196 = smul.addr %s195, 4
      %s197 = scalar_lea.vmem %s0, %s196
      %p198 = scmp.lt.s32.totalorder %s18, 1
      %s199 = scalar_select %p198, %s18, 1
      %p200 = scmp.lt.s32.totalorder %s19, 0
      %s201 = scalar_select %p200, %s19, 0
      %s202 = smul.addr %s201, 36
      %s203 = smul.addr %s199, 36
      %s204 = sadd.s32 %s202, %s203
      %s205 = smul.addr %s204, 4
      %s206 = scalar_lea.vmem %s3, %s205
      %v207 = vld [vmem:[%s197] sm:$0xf]
      %v208 = vld [vmem:[%s197 + $0x4] sm:$0xf]
      %v209 = vld [vmem:[%s197 + $0x8] sm:$0xf]
      %v210 = vld [vmem:[%s197 + $0xc] sm:$0xf]
      %v211 = vld [vmem:[%s197 + $0x10] sm:$0xf]
      %v212 = vld [vmem:[%s197 + $0x14] sm:$0xf]
      %v213 = vld [vmem:[%s197 + $0x18] sm:$0xf]
      %v214 = vld [vmem:[%s197 + $0x1c] sm:$0xf]
      %v215 = vld [vmem:[%s197 + $0x20] sm:$0xf]
      %v216 = vld [vmem:[%s197 + $0x24] sm:$0xf]
      %v217 = vld [vmem:[%s197 + $0x28] sm:$0xf]
      %v218 = vld [vmem:[%s197 + $0x2c] sm:$0xf]
      %v219 = vld [vmem:[%s197 + $0x30] sm:$0xf]
      %v220 = vld [vmem:[%s197 + $0x34] sm:$0xf]
      %v221 = vld [vmem:[%s197 + $0x38] sm:$0xf]
      %v222 = vld [vmem:[%s197 + $0x3c] sm:$0xf]
      %v223 = vld [vmem:[%s197 + $0x40] sm:$0xf]
      %v224 = vld [vmem:[%s197 + $0x44] sm:$0xf]
      %v225 = vld [vmem:[%s197 + $0x48] sm:$0xf]
      %v226 = vld [vmem:[%s197 + $0x4c] sm:$0xf]
      %v227 = vld [vmem:[%s197 + $0x50] sm:$0xf]
      %v228 = vld [vmem:[%s197 + $0x54] sm:$0xf]
      %v229 = vld [vmem:[%s197 + $0x58] sm:$0xf]
      %v230 = vld [vmem:[%s197 + $0x5c] sm:$0xf]
      %v231 = vld [vmem:[%s197 + $0x60] sm:$0xf]
      %v232 = vld [vmem:[%s197 + $0x64] sm:$0xf]
      %v233 = vld [vmem:[%s197 + $0x68] sm:$0xf]
      %v234 = vld [vmem:[%s197 + $0x6c] sm:$0xf]
      %v235 = vld [vmem:[%s197 + $0x70] sm:$0xf]
      %v236 = vld [vmem:[%s197 + $0x74] sm:$0xf]
      %v237 = vld [vmem:[%s197 + $0x78] sm:$0xf]
      %v238 = vld [vmem:[%s197 + $0x7c] sm:$0xf]
      %v239 = vld [vmem:[%s197 + $0x80] sm:$0xf]
      %v240 = vld [vmem:[%s197 + $0x84] sm:$0xf]
      %v241 = vld [vmem:[%s197 + $0x88] sm:$0xf]
      %v242 = vld [vmem:[%s197 + $0x8c] sm:$0xf]
      %v243 = vunpack.c.l.bf16 %v207
      %v244 = vunpack.c.l.bf16 %v208
      %v245 = vunpack.c.l.bf16 %v209
      %v246 = vunpack.c.l.bf16 %v210
      %v247 = vunpack.c.l.bf16 %v211
      %v248 = vunpack.c.l.bf16 %v212
      %v249 = vunpack.c.l.bf16 %v213
      %v250 = vunpack.c.l.bf16 %v214
      %v251 = vunpack.c.l.bf16 %v215
      %v252 = vunpack.c.l.bf16 %v216
      %v253 = vunpack.c.l.bf16 %v217
      %v254 = vunpack.c.l.bf16 %v218
      %v255 = vunpack.c.l.bf16 %v219
      %v256 = vunpack.c.l.bf16 %v220
      %v257 = vunpack.c.l.bf16 %v221
      %v258 = vunpack.c.l.bf16 %v222
      %v259 = vunpack.c.l.bf16 %v223
      %v260 = vunpack.c.l.bf16 %v224
      %v261 = vunpack.c.l.bf16 %v225
      %v262 = vunpack.c.l.bf16 %v226
      %v263 = vunpack.c.l.bf16 %v227
      %v264 = vunpack.c.l.bf16 %v228
      %v265 = vunpack.c.l.bf16 %v229
      %v266 = vunpack.c.l.bf16 %v230
      %v267 = vunpack.c.l.bf16 %v231
      %v268 = vunpack.c.l.bf16 %v232
      %v269 = vunpack.c.l.bf16 %v233
      %v270 = vunpack.c.l.bf16 %v234
      %v271 = vunpack.c.l.bf16 %v235
      %v272 = vunpack.c.l.bf16 %v236
      %v273 = vunpack.c.l.bf16 %v237
      %v274 = vunpack.c.l.bf16 %v238
      %v275 = vunpack.c.l.bf16 %v239
      %v276 = vunpack.c.l.bf16 %v240
      %v277 = vunpack.c.l.bf16 %v241
      %v278 = vunpack.c.l.bf16 %v242
      %v279 = vld [vmem:[%s1] sm:$0x1]
      %v281 = vlaneseq
      %v282 = vshrl.u32 %v281, 7
      %v283 = vsub.s32 0, %v282
      %v284 = vrot.slane %v279, %v283
      %v286 = vmul.f32 %v243, %v284
      %v287 = vmul.f32 %v244, %v284
      %v288 = vmul.f32 %v245, %v284
      %v289 = vmul.f32 %v246, %v284
      %v290 = vmul.f32 %v247, %v284
      %v291 = vmul.f32 %v248, %v284
      %v292 = vmul.f32 %v249, %v284
      %v293 = vmul.f32 %v250, %v284
      %v294 = vmul.f32 %v251, %v284
      %v295 = vmul.f32 %v252, %v284
      %v296 = vmul.f32 %v253, %v284
      %v297 = vmul.f32 %v254, %v284
      %v298 = vmul.f32 %v255, %v284
      %v299 = vmul.f32 %v256, %v284
      %v300 = vmul.f32 %v257, %v284
      %v301 = vmul.f32 %v258, %v284
      %v302 = vmul.f32 %v259, %v284
      %v303 = vmul.f32 %v260, %v284
      %v304 = vmul.f32 %v261, %v284
      %v305 = vmul.f32 %v262, %v284
      %v306 = vmul.f32 %v263, %v284
      %v307 = vmul.f32 %v264, %v284
      %v308 = vmul.f32 %v265, %v284
      %v309 = vmul.f32 %v266, %v284
      %v310 = vmul.f32 %v267, %v284
      %v311 = vmul.f32 %v268, %v284
      %v312 = vmul.f32 %v269, %v284
      %v313 = vmul.f32 %v270, %v284
      %v314 = vmul.f32 %v271, %v284
      %v315 = vmul.f32 %v272, %v284
      %v316 = vmul.f32 %v273, %v284
      %v317 = vmul.f32 %v274, %v284
      %v318 = vmul.f32 %v275, %v284
      %v319 = vmul.f32 %v276, %v284
      %v320 = vmul.f32 %v277, %v284
      %v321 = vmul.f32 %v278, %v284
      %v322 = vld [vmem:[%s2] sm:$0x1]
      %v324 = vlaneseq
      %v325 = vshrl.u32 %v324, 7
      %v326 = vsub.s32 0, %v325
      %v327 = vrot.slane %v322, %v326
      %v329 = vadd.f32 %v286, %v327
      %v330 = vadd.f32 %v287, %v327
      %v331 = vadd.f32 %v288, %v327
      %v332 = vadd.f32 %v289, %v327
      %v333 = vadd.f32 %v290, %v327
      %v334 = vadd.f32 %v291, %v327
      %v335 = vadd.f32 %v292, %v327
      %v336 = vadd.f32 %v293, %v327
      %v337 = vadd.f32 %v294, %v327
      %v338 = vadd.f32 %v295, %v327
      %v339 = vadd.f32 %v296, %v327
      %v340 = vadd.f32 %v297, %v327
      %v341 = vadd.f32 %v298, %v327
      %v342 = vadd.f32 %v299, %v327
      %v343 = vadd.f32 %v300, %v327
      %v344 = vadd.f32 %v301, %v327
      %v345 = vadd.f32 %v302, %v327
      %v346 = vadd.f32 %v303, %v327
      %v347 = vadd.f32 %v304, %v327
      %v348 = vadd.f32 %v305, %v327
      %v349 = vadd.f32 %v306, %v327
      %v350 = vadd.f32 %v307, %v327
      %v351 = vadd.f32 %v308, %v327
      %v352 = vadd.f32 %v309, %v327
      %v353 = vadd.f32 %v310, %v327
      %v354 = vadd.f32 %v311, %v327
      %v355 = vadd.f32 %v312, %v327
      %v356 = vadd.f32 %v313, %v327
      %v357 = vadd.f32 %v314, %v327
      %v358 = vadd.f32 %v315, %v327
      %v359 = vadd.f32 %v316, %v327
      %v360 = vadd.f32 %v317, %v327
      %v361 = vadd.f32 %v318, %v327
      %v362 = vadd.f32 %v319, %v327
      %v363 = vadd.f32 %v320, %v327
      %v364 = vadd.f32 %v321, %v327
      %v365 = vmax.f32 %v329, 0.0
      %v366 = vmax.f32 %v330, 0.0
      %v367 = vmax.f32 %v331, 0.0
      %v368 = vmax.f32 %v332, 0.0
      %v369 = vmax.f32 %v333, 0.0
      %v370 = vmax.f32 %v334, 0.0
      %v371 = vmax.f32 %v335, 0.0
      %v372 = vmax.f32 %v336, 0.0
      %v373 = vmax.f32 %v337, 0.0
      %v374 = vmax.f32 %v338, 0.0
      %v375 = vmax.f32 %v339, 0.0
      %v376 = vmax.f32 %v340, 0.0
      %v377 = vmax.f32 %v341, 0.0
      %v378 = vmax.f32 %v342, 0.0
      %v379 = vmax.f32 %v343, 0.0
      %v380 = vmax.f32 %v344, 0.0
      %v381 = vmax.f32 %v345, 0.0
      %v382 = vmax.f32 %v346, 0.0
      %v383 = vmax.f32 %v347, 0.0
      %v384 = vmax.f32 %v348, 0.0
      %v385 = vmax.f32 %v349, 0.0
      %v386 = vmax.f32 %v350, 0.0
      %v387 = vmax.f32 %v351, 0.0
      %v388 = vmax.f32 %v352, 0.0
      %v389 = vmax.f32 %v353, 0.0
      %v390 = vmax.f32 %v354, 0.0
      %v391 = vmax.f32 %v355, 0.0
      %v392 = vmax.f32 %v356, 0.0
      %v393 = vmax.f32 %v357, 0.0
      %v394 = vmax.f32 %v358, 0.0
      %v395 = vmax.f32 %v359, 0.0
      %v396 = vmax.f32 %v360, 0.0
      %v397 = vmax.f32 %v361, 0.0
      %v398 = vmax.f32 %v362, 0.0
      %v399 = vmax.f32 %v363, 0.0
      %v400 = vmax.f32 %v364, 0.0
      %v401 = vlaneseq
      %v402 = vshrl.u32 %v401, 7
      %v403 = vadd.s32 %v402, 8
      %v404 = vadd.s32 %v402, 16
      %v405 = vadd.s32 %v402, 24
      %v406 = vadd.s32 %v402, 32
      %v407 = vadd.s32 %v402, 40
      %v408 = vadd.s32 %v402, 48
      %v409 = vadd.s32 %v402, 56
      %v410 = vadd.s32 %v402, 64
      %v411 = vadd.s32 %v402, 72
      %v412 = vadd.s32 %v402, 80
      %v413 = vadd.s32 %v402, 88
      %v414 = vadd.s32 %v402, 96
      %v415 = vadd.s32 %v402, 104
      %v416 = vadd.s32 %v402, 112
      %v417 = vadd.s32 %v402, 120
      %v418 = vadd.s32 %v402, 128
      %v419 = vadd.s32 %v402, 136
      %v420 = vadd.s32 %v402, 144
      %v421 = vadd.s32 %v402, 152
      %v422 = vadd.s32 %v402, 160
      %v423 = vadd.s32 %v402, 168
      %v424 = vadd.s32 %v402, 176
      %v425 = vadd.s32 %v402, 184
      %v426 = vadd.s32 %v402, 192
      %v427 = vadd.s32 %v402, 200
      %v428 = vadd.s32 %v402, 208
      %v429 = vadd.s32 %v402, 216
      %v430 = vadd.s32 %v402, 224
      %v431 = vadd.s32 %v402, 232
      %v432 = vadd.s32 %v402, 240
      %v433 = vadd.s32 %v402, 248
      %v434 = vadd.s32 %v402, 256
      %v435 = vadd.s32 %v402, 264
      %v436 = vadd.s32 %v402, 272
      %v437 = vadd.s32 %v402, 280
      %vm438 = vcmp.lt.s32.totalorder %v402, 0
      %v439 = vsub.s32 0, %v402
      %v440 = vsel %vm438, %v439, %v402
      %v441 = vmul.u32.u64.compose %v440, 3817748708
      %v442 = vextract.low.u32 %v441
      %v443 = vextract.high.u32 %v441
      %v444 = vshrl.u32 %v443, 4
      %v445 = vmul.u32 %v444, 18
      %v446 = vsub.s32 %v440, %v445
      %v447 = vsub.s32 0, %v446
      %v448 = vsel %vm438, %v447, %v446
      %vm449 = vcmp.lt.s32.totalorder %v403, 0
      %v450 = vsub.s32 0, %v403
      %v451 = vsel %vm449, %v450, %v403
      %v452 = vmul.u32.u64.compose %v451, 3817748708
      %v453 = vextract.low.u32 %v452
      %v454 = vextract.high.u32 %v452
      %v455 = vshrl.u32 %v454, 4
      %v456 = vmul.u32 %v455, 18
      %v457 = vsub.s32 %v451, %v456
      %v458 = vsub.s32 0, %v457
      %v459 = vsel %vm449, %v458, %v457
      %vm460 = vcmp.lt.s32.totalorder %v404, 0
      %v461 = vsub.s32 0, %v404
      %v462 = vsel %vm460, %v461, %v404
      %v463 = vmul.u32.u64.compose %v462, 3817748708
      %v464 = vextract.low.u32 %v463
      %v465 = vextract.high.u32 %v463
      %v466 = vshrl.u32 %v465, 4
      %v467 = vmul.u32 %v466, 18
      %v468 = vsub.s32 %v462, %v467
      %v469 = vsub.s32 0, %v468
      %v470 = vsel %vm460, %v469, %v468
      %vm471 = vcmp.lt.s32.totalorder %v405, 0
      %v472 = vsub.s32 0, %v405
      %v473 = vsel %vm471, %v472, %v405
      %v474 = vmul.u32.u64.compose %v473, 3817748708
      %v475 = vextract.low.u32 %v474
      %v476 = vextract.high.u32 %v474
      %v477 = vshrl.u32 %v476, 4
      %v478 = vmul.u32 %v477, 18
      %v479 = vsub.s32 %v473, %v478
      %v480 = vsub.s32 0, %v479
      %v481 = vsel %vm471, %v480, %v479
      %vm482 = vcmp.lt.s32.totalorder %v406, 0
      %v483 = vsub.s32 0, %v406
      %v484 = vsel %vm482, %v483, %v406
      %v485 = vmul.u32.u64.compose %v484, 3817748708
      %v486 = vextract.low.u32 %v485
      %v487 = vextract.high.u32 %v485
      %v488 = vshrl.u32 %v487, 4
      %v489 = vmul.u32 %v488, 18
      %v490 = vsub.s32 %v484, %v489
      %v491 = vsub.s32 0, %v490
      %v492 = vsel %vm482, %v491, %v490
      %vm493 = vcmp.lt.s32.totalorder %v407, 0
      %v494 = vsub.s32 0, %v407
      %v495 = vsel %vm493, %v494, %v407
      %v496 = vmul.u32.u64.compose %v495, 3817748708
      %v497 = vextract.low.u32 %v496
      %v498 = vextract.high.u32 %v496
      %v499 = vshrl.u32 %v498, 4
      %v500 = vmul.u32 %v499, 18
      %v501 = vsub.s32 %v495, %v500
      %v502 = vsub.s32 0, %v501
      %v503 = vsel %vm493, %v502, %v501
      %vm504 = vcmp.lt.s32.totalorder %v408, 0
      %v505 = vsub.s32 0, %v408
      %v506 = vsel %vm504, %v505, %v408
      %v507 = vmul.u32.u64.compose %v506, 3817748708
      %v508 = vextract.low.u32 %v507
      %v509 = vextract.high.u32 %v507
      %v510 = vshrl.u32 %v509, 4
      %v511 = vmul.u32 %v510, 18
      %v512 = vsub.s32 %v506, %v511
      %v513 = vsub.s32 0, %v512
      %v514 = vsel %vm504, %v513, %v512
      %vm515 = vcmp.lt.s32.totalorder %v409, 0
      %v516 = vsub.s32 0, %v409
      %v517 = vsel %vm515, %v516, %v409
      %v518 = vmul.u32.u64.compose %v517, 3817748708
      %v519 = vextract.low.u32 %v518
      %v520 = vextract.high.u32 %v518
      %v521 = vshrl.u32 %v520, 4
      %v522 = vmul.u32 %v521, 18
      %v523 = vsub.s32 %v517, %v522
      %v524 = vsub.s32 0, %v523
      %v525 = vsel %vm515, %v524, %v523
      %vm526 = vcmp.lt.s32.totalorder %v410, 0
      %v527 = vsub.s32 0, %v410
      %v528 = vsel %vm526, %v527, %v410
      %v529 = vmul.u32.u64.compose %v528, 3817748708
      %v530 = vextract.low.u32 %v529
      %v531 = vextract.high.u32 %v529
      %v532 = vshrl.u32 %v531, 4
      %v533 = vmul.u32 %v532, 18
      %v534 = vsub.s32 %v528, %v533
      %v535 = vsub.s32 0, %v534
      %v536 = vsel %vm526, %v535, %v534
      %vm537 = vcmp.lt.s32.totalorder %v411, 0
      %v538 = vsub.s32 0, %v411
      %v539 = vsel %vm537, %v538, %v411
      %v540 = vmul.u32.u64.compose %v539, 3817748708
      %v541 = vextract.low.u32 %v540
      %v542 = vextract.high.u32 %v540
      %v543 = vshrl.u32 %v542, 4
      %v544 = vmul.u32 %v543, 18
      %v545 = vsub.s32 %v539, %v544
      %v546 = vsub.s32 0, %v545
      %v547 = vsel %vm537, %v546, %v545
      %vm548 = vcmp.lt.s32.totalorder %v412, 0
      %v549 = vsub.s32 0, %v412
      %v550 = vsel %vm548, %v549, %v412
      %v551 = vmul.u32.u64.compose %v550, 3817748708
      %v552 = vextract.low.u32 %v551
      %v553 = vextract.high.u32 %v551
      %v554 = vshrl.u32 %v553, 4
      %v555 = vmul.u32 %v554, 18
      %v556 = vsub.s32 %v550, %v555
      %v557 = vsub.s32 0, %v556
      %v558 = vsel %vm548, %v557, %v556
      %vm559 = vcmp.lt.s32.totalorder %v413, 0
      %v560 = vsub.s32 0, %v413
      %v561 = vsel %vm559, %v560, %v413
      %v562 = vmul.u32.u64.compose %v561, 3817748708
      %v563 = vextract.low.u32 %v562
      %v564 = vextract.high.u32 %v562
      %v565 = vshrl.u32 %v564, 4
      %v566 = vmul.u32 %v565, 18
      %v567 = vsub.s32 %v561, %v566
      %v568 = vsub.s32 0, %v567
      %v569 = vsel %vm559, %v568, %v567
      %vm570 = vcmp.lt.s32.totalorder %v414, 0
      %v571 = vsub.s32 0, %v414
      %v572 = vsel %vm570, %v571, %v414
      %v573 = vmul.u32.u64.compose %v572, 3817748708
      %v574 = vextract.low.u32 %v573
      %v575 = vextract.high.u32 %v573
      %v576 = vshrl.u32 %v575, 4
      %v577 = vmul.u32 %v576, 18
      %v578 = vsub.s32 %v572, %v577
      %v579 = vsub.s32 0, %v578
      %v580 = vsel %vm570, %v579, %v578
      %vm581 = vcmp.lt.s32.totalorder %v415, 0
      %v582 = vsub.s32 0, %v415
      %v583 = vsel %vm581, %v582, %v415
      %v584 = vmul.u32.u64.compose %v583, 3817748708
      %v585 = vextract.low.u32 %v584
      %v586 = vextract.high.u32 %v584
      %v587 = vshrl.u32 %v586, 4
      %v588 = vmul.u32 %v587, 18
      %v589 = vsub.s32 %v583, %v588
      %v590 = vsub.s32 0, %v589
      %v591 = vsel %vm581, %v590, %v589
      %vm592 = vcmp.lt.s32.totalorder %v416, 0
      %v593 = vsub.s32 0, %v416
      %v594 = vsel %vm592, %v593, %v416
      %v595 = vmul.u32.u64.compose %v594, 3817748708
      %v596 = vextract.low.u32 %v595
      %v597 = vextract.high.u32 %v595
      %v598 = vshrl.u32 %v597, 4
      %v599 = vmul.u32 %v598, 18
      %v600 = vsub.s32 %v594, %v599
      %v601 = vsub.s32 0, %v600
      %v602 = vsel %vm592, %v601, %v600
      %vm603 = vcmp.lt.s32.totalorder %v417, 0
      %v604 = vsub.s32 0, %v417
      %v605 = vsel %vm603, %v604, %v417
      %v606 = vmul.u32.u64.compose %v605, 3817748708
      %v607 = vextract.low.u32 %v606
      %v608 = vextract.high.u32 %v606
      %v609 = vshrl.u32 %v608, 4
      %v610 = vmul.u32 %v609, 18
      %v611 = vsub.s32 %v605, %v610
      %v612 = vsub.s32 0, %v611
      %v613 = vsel %vm603, %v612, %v611
      %vm614 = vcmp.lt.s32.totalorder %v418, 0
      %v615 = vsub.s32 0, %v418
      %v616 = vsel %vm614, %v615, %v418
      %v617 = vmul.u32.u64.compose %v616, 3817748708
      %v618 = vextract.low.u32 %v617
      %v619 = vextract.high.u32 %v617
      %v620 = vshrl.u32 %v619, 4
      %v621 = vmul.u32 %v620, 18
      %v622 = vsub.s32 %v616, %v621
      %v623 = vsub.s32 0, %v622
      %v624 = vsel %vm614, %v623, %v622
      %vm625 = vcmp.lt.s32.totalorder %v419, 0
      %v626 = vsub.s32 0, %v419
      %v627 = vsel %vm625, %v626, %v419
      %v628 = vmul.u32.u64.compose %v627, 3817748708
      %v629 = vextract.low.u32 %v628
      %v630 = vextract.high.u32 %v628
      %v631 = vshrl.u32 %v630, 4
      %v632 = vmul.u32 %v631, 18
      %v633 = vsub.s32 %v627, %v632
      %v634 = vsub.s32 0, %v633
      %v635 = vsel %vm625, %v634, %v633
      %vm636 = vcmp.lt.s32.totalorder %v420, 0
      %v637 = vsub.s32 0, %v420
      %v638 = vsel %vm636, %v637, %v420
      %v639 = vmul.u32.u64.compose %v638, 3817748708
      %v640 = vextract.low.u32 %v639
      %v641 = vextract.high.u32 %v639
      %v642 = vshrl.u32 %v641, 4
      %v643 = vmul.u32 %v642, 18
      %v644 = vsub.s32 %v638, %v643
      %v645 = vsub.s32 0, %v644
      %v646 = vsel %vm636, %v645, %v644
      %vm647 = vcmp.lt.s32.totalorder %v421, 0
      %v648 = vsub.s32 0, %v421
      %v649 = vsel %vm647, %v648, %v421
      %v650 = vmul.u32.u64.compose %v649, 3817748708
      %v651 = vextract.low.u32 %v650
      %v652 = vextract.high.u32 %v650
      %v653 = vshrl.u32 %v652, 4
      %v654 = vmul.u32 %v653, 18
      %v655 = vsub.s32 %v649, %v654
      %v656 = vsub.s32 0, %v655
      %v657 = vsel %vm647, %v656, %v655
      %vm658 = vcmp.lt.s32.totalorder %v422, 0
      %v659 = vsub.s32 0, %v422
      %v660 = vsel %vm658, %v659, %v422
      %v661 = vmul.u32.u64.compose %v660, 3817748708
      %v662 = vextract.low.u32 %v661
      %v663 = vextract.high.u32 %v661
      %v664 = vshrl.u32 %v663, 4
      %v665 = vmul.u32 %v664, 18
      %v666 = vsub.s32 %v660, %v665
      %v667 = vsub.s32 0, %v666
      %v668 = vsel %vm658, %v667, %v666
      %vm669 = vcmp.lt.s32.totalorder %v423, 0
      %v670 = vsub.s32 0, %v423
      %v671 = vsel %vm669, %v670, %v423
      %v672 = vmul.u32.u64.compose %v671, 3817748708
      %v673 = vextract.low.u32 %v672
      %v674 = vextract.high.u32 %v672
      %v675 = vshrl.u32 %v674, 4
      %v676 = vmul.u32 %v675, 18
      %v677 = vsub.s32 %v671, %v676
      %v678 = vsub.s32 0, %v677
      %v679 = vsel %vm669, %v678, %v677
      %vm680 = vcmp.lt.s32.totalorder %v424, 0
      %v681 = vsub.s32 0, %v424
      %v682 = vsel %vm680, %v681, %v424
      %v683 = vmul.u32.u64.compose %v682, 3817748708
      %v684 = vextract.low.u32 %v683
      %v685 = vextract.high.u32 %v683
      %v686 = vshrl.u32 %v685, 4
      %v687 = vmul.u32 %v686, 18
      %v688 = vsub.s32 %v682, %v687
      %v689 = vsub.s32 0, %v688
      %v690 = vsel %vm680, %v689, %v688
      %vm691 = vcmp.lt.s32.totalorder %v425, 0
      %v692 = vsub.s32 0, %v425
      %v693 = vsel %vm691, %v692, %v425
      %v694 = vmul.u32.u64.compose %v693, 3817748708
      %v695 = vextract.low.u32 %v694
      %v696 = vextract.high.u32 %v694
      %v697 = vshrl.u32 %v696, 4
      %v698 = vmul.u32 %v697, 18
      %v699 = vsub.s32 %v693, %v698
      %v700 = vsub.s32 0, %v699
      %v701 = vsel %vm691, %v700, %v699
      %vm702 = vcmp.lt.s32.totalorder %v426, 0
      %v703 = vsub.s32 0, %v426
      %v704 = vsel %vm702, %v703, %v426
      %v705 = vmul.u32.u64.compose %v704, 3817748708
      %v706 = vextract.low.u32 %v705
      %v707 = vextract.high.u32 %v705
      %v708 = vshrl.u32 %v707, 4
      %v709 = vmul.u32 %v708, 18
      %v710 = vsub.s32 %v704, %v709
      %v711 = vsub.s32 0, %v710
      %v712 = vsel %vm702, %v711, %v710
      %vm713 = vcmp.lt.s32.totalorder %v427, 0
      %v714 = vsub.s32 0, %v427
      %v715 = vsel %vm713, %v714, %v427
      %v716 = vmul.u32.u64.compose %v715, 3817748708
      %v717 = vextract.low.u32 %v716
      %v718 = vextract.high.u32 %v716
      %v719 = vshrl.u32 %v718, 4
      %v720 = vmul.u32 %v719, 18
      %v721 = vsub.s32 %v715, %v720
      %v722 = vsub.s32 0, %v721
      %v723 = vsel %vm713, %v722, %v721
      %vm724 = vcmp.lt.s32.totalorder %v428, 0
      %v725 = vsub.s32 0, %v428
      %v726 = vsel %vm724, %v725, %v428
      %v727 = vmul.u32.u64.compose %v726, 3817748708
      %v728 = vextract.low.u32 %v727
      %v729 = vextract.high.u32 %v727
      %v730 = vshrl.u32 %v729, 4
      %v731 = vmul.u32 %v730, 18
      %v732 = vsub.s32 %v726, %v731
      %v733 = vsub.s32 0, %v732
      %v734 = vsel %vm724, %v733, %v732
      %vm735 = vcmp.lt.s32.totalorder %v429, 0
      %v736 = vsub.s32 0, %v429
      %v737 = vsel %vm735, %v736, %v429
      %v738 = vmul.u32.u64.compose %v737, 3817748708
      %v739 = vextract.low.u32 %v738
      %v740 = vextract.high.u32 %v738
      %v741 = vshrl.u32 %v740, 4
      %v742 = vmul.u32 %v741, 18
      %v743 = vsub.s32 %v737, %v742
      %v744 = vsub.s32 0, %v743
      %v745 = vsel %vm735, %v744, %v743
      %vm746 = vcmp.lt.s32.totalorder %v430, 0
      %v747 = vsub.s32 0, %v430
      %v748 = vsel %vm746, %v747, %v430
      %v749 = vmul.u32.u64.compose %v748, 3817748708
      %v750 = vextract.low.u32 %v749
      %v751 = vextract.high.u32 %v749
      %v752 = vshrl.u32 %v751, 4
      %v753 = vmul.u32 %v752, 18
      %v754 = vsub.s32 %v748, %v753
      %v755 = vsub.s32 0, %v754
      %v756 = vsel %vm746, %v755, %v754
      %vm757 = vcmp.lt.s32.totalorder %v431, 0
      %v758 = vsub.s32 0, %v431
      %v759 = vsel %vm757, %v758, %v431
      %v760 = vmul.u32.u64.compose %v759, 3817748708
      %v761 = vextract.low.u32 %v760
      %v762 = vextract.high.u32 %v760
      %v763 = vshrl.u32 %v762, 4
      %v764 = vmul.u32 %v763, 18
      %v765 = vsub.s32 %v759, %v764
      %v766 = vsub.s32 0, %v765
      %v767 = vsel %vm757, %v766, %v765
      %vm768 = vcmp.lt.s32.totalorder %v432, 0
      %v769 = vsub.s32 0, %v432
      %v770 = vsel %vm768, %v769, %v432
      %v771 = vmul.u32.u64.compose %v770, 3817748708
      %v772 = vextract.low.u32 %v771
      %v773 = vextract.high.u32 %v771
      %v774 = vshrl.u32 %v773, 4
      %v775 = vmul.u32 %v774, 18
      %v776 = vsub.s32 %v770, %v775
      %v777 = vsub.s32 0, %v776
      %v778 = vsel %vm768, %v777, %v776
      %vm779 = vcmp.lt.s32.totalorder %v433, 0
      %v780 = vsub.s32 0, %v433
      %v781 = vsel %vm779, %v780, %v433
      %v782 = vmul.u32.u64.compose %v781, 3817748708
      %v783 = vextract.low.u32 %v782
      %v784 = vextract.high.u32 %v782
      %v785 = vshrl.u32 %v784, 4
      %v786 = vmul.u32 %v785, 18
      %v787 = vsub.s32 %v781, %v786
      %v788 = vsub.s32 0, %v787
      %v789 = vsel %vm779, %v788, %v787
      %vm790 = vcmp.lt.s32.totalorder %v434, 0
      %v791 = vsub.s32 0, %v434
      %v792 = vsel %vm790, %v791, %v434
      %v793 = vmul.u32.u64.compose %v792, 3817748708
      %v794 = vextract.low.u32 %v793
      %v795 = vextract.high.u32 %v793
      %v796 = vshrl.u32 %v795, 4
      %v797 = vmul.u32 %v796, 18
      %v798 = vsub.s32 %v792, %v797
      %v799 = vsub.s32 0, %v798
      %v800 = vsel %vm790, %v799, %v798
      %vm801 = vcmp.lt.s32.totalorder %v435, 0
      %v802 = vsub.s32 0, %v435
      %v803 = vsel %vm801, %v802, %v435
      %v804 = vmul.u32.u64.compose %v803, 3817748708
      %v805 = vextract.low.u32 %v804
      %v806 = vextract.high.u32 %v804
      %v807 = vshrl.u32 %v806, 4
      %v808 = vmul.u32 %v807, 18
      %v809 = vsub.s32 %v803, %v808
      %v810 = vsub.s32 0, %v809
      %v811 = vsel %vm801, %v810, %v809
      %vm812 = vcmp.lt.s32.totalorder %v436, 0
      %v813 = vsub.s32 0, %v436
      %v814 = vsel %vm812, %v813, %v436
      %v815 = vmul.u32.u64.compose %v814, 3817748708
      %v816 = vextract.low.u32 %v815
      %v817 = vextract.high.u32 %v815
      %v818 = vshrl.u32 %v817, 4
      %v819 = vmul.u32 %v818, 18
      %v820 = vsub.s32 %v814, %v819
      %v821 = vsub.s32 0, %v820
      %v822 = vsel %vm812, %v821, %v820
      %vm823 = vcmp.lt.s32.totalorder %v437, 0
      %v824 = vsub.s32 0, %v437
      %v825 = vsel %vm823, %v824, %v437
      %v826 = vmul.u32.u64.compose %v825, 3817748708
      %v827 = vextract.low.u32 %v826
      %v828 = vextract.high.u32 %v826
      %v829 = vshrl.u32 %v828, 4
      %v830 = vmul.u32 %v829, 18
      %v831 = vsub.s32 %v825, %v830
      %v832 = vsub.s32 0, %v831
      %v833 = vsel %vm823, %v832, %v831
      %vm834 = vcmp.ne.s32.totalorder %v448, 0
      %vm835 = vcmp.ne.s32.totalorder %v459, 0
      %vm836 = vcmp.ne.s32.totalorder %v470, 0
      %vm837 = vcmp.ne.s32.totalorder %v481, 0
      %vm838 = vcmp.ne.s32.totalorder %v492, 0
      %vm839 = vcmp.ne.s32.totalorder %v503, 0
      %vm840 = vcmp.ne.s32.totalorder %v514, 0
      %vm841 = vcmp.ne.s32.totalorder %v525, 0
      %vm842 = vcmp.ne.s32.totalorder %v536, 0
      %vm843 = vcmp.ne.s32.totalorder %v547, 0
      %vm844 = vcmp.ne.s32.totalorder %v558, 0
      %vm845 = vcmp.ne.s32.totalorder %v569, 0
      %vm846 = vcmp.ne.s32.totalorder %v580, 0
      %vm847 = vcmp.ne.s32.totalorder %v591, 0
      %vm848 = vcmp.ne.s32.totalorder %v602, 0
      %vm849 = vcmp.ne.s32.totalorder %v613, 0
      %vm850 = vcmp.ne.s32.totalorder %v624, 0
      %vm851 = vcmp.ne.s32.totalorder %v635, 0
      %vm852 = vcmp.ne.s32.totalorder %v646, 0
      %vm853 = vcmp.ne.s32.totalorder %v657, 0
      %vm854 = vcmp.ne.s32.totalorder %v668, 0
      %vm855 = vcmp.ne.s32.totalorder %v679, 0
      %vm856 = vcmp.ne.s32.totalorder %v690, 0
      %vm857 = vcmp.ne.s32.totalorder %v701, 0
      %vm858 = vcmp.ne.s32.totalorder %v712, 0
      %vm859 = vcmp.ne.s32.totalorder %v723, 0
      %vm860 = vcmp.ne.s32.totalorder %v734, 0
      %vm861 = vcmp.ne.s32.totalorder %v745, 0
      %vm862 = vcmp.ne.s32.totalorder %v756, 0
      %vm863 = vcmp.ne.s32.totalorder %v767, 0
      %vm864 = vcmp.ne.s32.totalorder %v778, 0
      %vm865 = vcmp.ne.s32.totalorder %v789, 0
      %vm866 = vcmp.ne.s32.totalorder %v800, 0
      %vm867 = vcmp.ne.s32.totalorder %v811, 0
      %vm868 = vcmp.ne.s32.totalorder %v822, 0
      %vm869 = vcmp.ne.s32.totalorder %v833, 0
      %vm870 = vcmp.lt.s32.totalorder %v448, 0
      %vm871 = vcmp.lt.s32.totalorder %v459, 0
      %vm872 = vcmp.lt.s32.totalorder %v470, 0
      %vm873 = vcmp.lt.s32.totalorder %v481, 0
      %vm874 = vcmp.lt.s32.totalorder %v492, 0
      %vm875 = vcmp.lt.s32.totalorder %v503, 0
      %vm876 = vcmp.lt.s32.totalorder %v514, 0
      %vm877 = vcmp.lt.s32.totalorder %v525, 0
      %vm878 = vcmp.lt.s32.totalorder %v536, 0
      %vm879 = vcmp.lt.s32.totalorder %v547, 0
      %vm880 = vcmp.lt.s32.totalorder %v558, 0
      %vm881 = vcmp.lt.s32.totalorder %v569, 0
      %vm882 = vcmp.lt.s32.totalorder %v580, 0
      %vm883 = vcmp.lt.s32.totalorder %v591, 0
      %vm884 = vcmp.lt.s32.totalorder %v602, 0
      %vm885 = vcmp.lt.s32.totalorder %v613, 0
      %vm886 = vcmp.lt.s32.totalorder %v624, 0
      %vm887 = vcmp.lt.s32.totalorder %v635, 0
      %vm888 = vcmp.lt.s32.totalorder %v646, 0
      %vm889 = vcmp.lt.s32.totalorder %v657, 0
      %vm890 = vcmp.lt.s32.totalorder %v668, 0
      %vm891 = vcmp.lt.s32.totalorder %v679, 0
      %vm892 = vcmp.lt.s32.totalorder %v690, 0
      %vm893 = vcmp.lt.s32.totalorder %v701, 0
      %vm894 = vcmp.lt.s32.totalorder %v712, 0
      %vm895 = vcmp.lt.s32.totalorder %v723, 0
      %vm896 = vcmp.lt.s32.totalorder %v734, 0
      %vm897 = vcmp.lt.s32.totalorder %v745, 0
      %vm898 = vcmp.lt.s32.totalorder %v756, 0
      %vm899 = vcmp.lt.s32.totalorder %v767, 0
      %vm900 = vcmp.lt.s32.totalorder %v778, 0
      %vm901 = vcmp.lt.s32.totalorder %v789, 0
      %vm902 = vcmp.lt.s32.totalorder %v800, 0
      %vm903 = vcmp.lt.s32.totalorder %v811, 0
      %vm904 = vcmp.lt.s32.totalorder %v822, 0
      %vm905 = vcmp.lt.s32.totalorder %v833, 0
      %vm906 = vmand %vm870, %vm834
      %vm907 = vmand %vm871, %vm835
      %vm908 = vmand %vm872, %vm836
      %vm909 = vmand %vm873, %vm837
      %vm910 = vmand %vm874, %vm838
      %vm911 = vmand %vm875, %vm839
      %vm912 = vmand %vm876, %vm840
      %vm913 = vmand %vm877, %vm841
      %vm914 = vmand %vm878, %vm842
      %vm915 = vmand %vm879, %vm843
      %vm916 = vmand %vm880, %vm844
      %vm917 = vmand %vm881, %vm845
      %vm918 = vmand %vm882, %vm846
      %vm919 = vmand %vm883, %vm847
      %vm920 = vmand %vm884, %vm848
      %vm921 = vmand %vm885, %vm849
      %vm922 = vmand %vm886, %vm850
      %vm923 = vmand %vm887, %vm851
      %vm924 = vmand %vm888, %vm852
      %vm925 = vmand %vm889, %vm853
      %vm926 = vmand %vm890, %vm854
      %vm927 = vmand %vm891, %vm855
      %vm928 = vmand %vm892, %vm856
      %vm929 = vmand %vm893, %vm857
      %vm930 = vmand %vm894, %vm858
      %vm931 = vmand %vm895, %vm859
      %vm932 = vmand %vm896, %vm860
      %vm933 = vmand %vm897, %vm861
      %vm934 = vmand %vm898, %vm862
      %vm935 = vmand %vm899, %vm863
      %vm936 = vmand %vm900, %vm864
      %vm937 = vmand %vm901, %vm865
      %vm938 = vmand %vm902, %vm866
      %vm939 = vmand %vm903, %vm867
      %vm940 = vmand %vm904, %vm868
      %vm941 = vmand %vm905, %vm869
      %v942 = vadd.s32 %v448, 18
      %v943 = vadd.s32 %v459, 18
      %v944 = vadd.s32 %v470, 18
      %v945 = vadd.s32 %v481, 18
      %v946 = vadd.s32 %v492, 18
      %v947 = vadd.s32 %v503, 18
      %v948 = vadd.s32 %v514, 18
      %v949 = vadd.s32 %v525, 18
      %v950 = vadd.s32 %v536, 18
      %v951 = vadd.s32 %v547, 18
      %v952 = vadd.s32 %v558, 18
      %v953 = vadd.s32 %v569, 18
      %v954 = vadd.s32 %v580, 18
      %v955 = vadd.s32 %v591, 18
      %v956 = vadd.s32 %v602, 18
      %v957 = vadd.s32 %v613, 18
      %v958 = vadd.s32 %v624, 18
      %v959 = vadd.s32 %v635, 18
      %v960 = vadd.s32 %v646, 18
      %v961 = vadd.s32 %v657, 18
      %v962 = vadd.s32 %v668, 18
      %v963 = vadd.s32 %v679, 18
      %v964 = vadd.s32 %v690, 18
      %v965 = vadd.s32 %v701, 18
      %v966 = vadd.s32 %v712, 18
      %v967 = vadd.s32 %v723, 18
      %v968 = vadd.s32 %v734, 18
      %v969 = vadd.s32 %v745, 18
      %v970 = vadd.s32 %v756, 18
      %v971 = vadd.s32 %v767, 18
      %v972 = vadd.s32 %v778, 18
      %v973 = vadd.s32 %v789, 18
      %v974 = vadd.s32 %v800, 18
      %v975 = vadd.s32 %v811, 18
      %v976 = vadd.s32 %v822, 18
      %v977 = vadd.s32 %v833, 18
      %v978 = vsel %vm906, %v942, %v448
      %v979 = vsel %vm907, %v943, %v459
      %v980 = vsel %vm908, %v944, %v470
      %v981 = vsel %vm909, %v945, %v481
      %v982 = vsel %vm910, %v946, %v492
      %v983 = vsel %vm911, %v947, %v503
      %v984 = vsel %vm912, %v948, %v514
      %v985 = vsel %vm913, %v949, %v525
      %v986 = vsel %vm914, %v950, %v536
      %v987 = vsel %vm915, %v951, %v547
      %v988 = vsel %vm916, %v952, %v558
      %v989 = vsel %vm917, %v953, %v569
      %v990 = vsel %vm918, %v954, %v580
      %v991 = vsel %vm919, %v955, %v591
      %v992 = vsel %vm920, %v956, %v602
      %v993 = vsel %vm921, %v957, %v613
      %v994 = vsel %vm922, %v958, %v624
      %v995 = vsel %vm923, %v959, %v635
      %v996 = vsel %vm924, %v960, %v646
      %v997 = vsel %vm925, %v961, %v657
      %v998 = vsel %vm926, %v962, %v668
      %v999 = vsel %vm927, %v963, %v679
      %v1000 = vsel %vm928, %v964, %v690
      %v1001 = vsel %vm929, %v965, %v701
      %v1002 = vsel %vm930, %v966, %v712
      %v1003 = vsel %vm931, %v967, %v723
      %v1004 = vsel %vm932, %v968, %v734
      %v1005 = vsel %vm933, %v969, %v745
      %v1006 = vsel %vm934, %v970, %v756
      %v1007 = vsel %vm935, %v971, %v767
      %v1008 = vsel %vm936, %v972, %v778
      %v1009 = vsel %vm937, %v973, %v789
      %v1010 = vsel %vm938, %v974, %v800
      %v1011 = vsel %vm939, %v975, %v811
      %v1012 = vsel %vm940, %v976, %v822
      %v1013 = vsel %vm941, %v977, %v833
      %vm1014 = vcmp.lt.s32.totalorder %v978, 16
      %vm1015 = vcmp.lt.s32.totalorder %v979, 16
      %vm1016 = vcmp.lt.s32.totalorder %v980, 16
      %vm1017 = vcmp.lt.s32.totalorder %v981, 16
      %vm1018 = vcmp.lt.s32.totalorder %v982, 16
      %vm1019 = vcmp.lt.s32.totalorder %v983, 16
      %vm1020 = vcmp.lt.s32.totalorder %v984, 16
      %vm1021 = vcmp.lt.s32.totalorder %v985, 16
      %vm1022 = vcmp.lt.s32.totalorder %v986, 16
      %vm1023 = vcmp.lt.s32.totalorder %v987, 16
      %vm1024 = vcmp.lt.s32.totalorder %v988, 16
      %vm1025 = vcmp.lt.s32.totalorder %v989, 16
      %vm1026 = vcmp.lt.s32.totalorder %v990, 16
      %vm1027 = vcmp.lt.s32.totalorder %v991, 16
      %vm1028 = vcmp.lt.s32.totalorder %v992, 16
      %vm1029 = vcmp.lt.s32.totalorder %v993, 16
      %vm1030 = vcmp.lt.s32.totalorder %v994, 16
      %vm1031 = vcmp.lt.s32.totalorder %v995, 16
      %vm1032 = vcmp.lt.s32.totalorder %v996, 16
      %vm1033 = vcmp.lt.s32.totalorder %v997, 16
      %vm1034 = vcmp.lt.s32.totalorder %v998, 16
      %vm1035 = vcmp.lt.s32.totalorder %v999, 16
      %vm1036 = vcmp.lt.s32.totalorder %v1000, 16
      %vm1037 = vcmp.lt.s32.totalorder %v1001, 16
      %vm1038 = vcmp.lt.s32.totalorder %v1002, 16
      %vm1039 = vcmp.lt.s32.totalorder %v1003, 16
      %vm1040 = vcmp.lt.s32.totalorder %v1004, 16
      %vm1041 = vcmp.lt.s32.totalorder %v1005, 16
      %vm1042 = vcmp.lt.s32.totalorder %v1006, 16
      %vm1043 = vcmp.lt.s32.totalorder %v1007, 16
      %vm1044 = vcmp.lt.s32.totalorder %v1008, 16
      %vm1045 = vcmp.lt.s32.totalorder %v1009, 16
      %vm1046 = vcmp.lt.s32.totalorder %v1010, 16
      %vm1047 = vcmp.lt.s32.totalorder %v1011, 16
      %vm1048 = vcmp.lt.s32.totalorder %v1012, 16
      %vm1049 = vcmp.lt.s32.totalorder %v1013, 16
      %v1050 = vsel %vm1014, 1, 0
      %v1051 = vsel %vm1015, 1, 0
      %v1052 = vsel %vm1016, 1, 0
      %v1053 = vsel %vm1017, 1, 0
      %v1054 = vsel %vm1018, 1, 0
      %v1055 = vsel %vm1019, 1, 0
      %v1056 = vsel %vm1020, 1, 0
      %v1057 = vsel %vm1021, 1, 0
      %v1058 = vsel %vm1022, 1, 0
      %v1059 = vsel %vm1023, 1, 0
      %v1060 = vsel %vm1024, 1, 0
      %v1061 = vsel %vm1025, 1, 0
      %v1062 = vsel %vm1026, 1, 0
      %v1063 = vsel %vm1027, 1, 0
      %v1064 = vsel %vm1028, 1, 0
      %v1065 = vsel %vm1029, 1, 0
      %v1066 = vsel %vm1030, 1, 0
      %v1067 = vsel %vm1031, 1, 0
      %v1068 = vsel %vm1032, 1, 0
      %v1069 = vsel %vm1033, 1, 0
      %v1070 = vsel %vm1034, 1, 0
      %v1071 = vsel %vm1035, 1, 0
      %v1072 = vsel %vm1036, 1, 0
      %v1073 = vsel %vm1037, 1, 0
      %v1074 = vsel %vm1038, 1, 0
      %v1075 = vsel %vm1039, 1, 0
      %v1076 = vsel %vm1040, 1, 0
      %v1077 = vsel %vm1041, 1, 0
      %v1078 = vsel %vm1042, 1, 0
      %v1079 = vsel %vm1043, 1, 0
      %v1080 = vsel %vm1044, 1, 0
      %v1081 = vsel %vm1045, 1, 0
      %v1082 = vsel %vm1046, 1, 0
      %v1083 = vsel %vm1047, 1, 0
      %v1084 = vsel %vm1048, 1, 0
      %v1085 = vsel %vm1049, 1, 0
      %v1086 = vcvt.s32.f32 %v1050
      %v1087 = vcvt.s32.f32 %v1051
      %v1088 = vcvt.s32.f32 %v1052
      %v1089 = vcvt.s32.f32 %v1053
      %v1090 = vcvt.s32.f32 %v1054
      %v1091 = vcvt.s32.f32 %v1055
      %v1092 = vcvt.s32.f32 %v1056
      %v1093 = vcvt.s32.f32 %v1057
      %v1094 = vcvt.s32.f32 %v1058
      %v1095 = vcvt.s32.f32 %v1059
      %v1096 = vcvt.s32.f32 %v1060
      %v1097 = vcvt.s32.f32 %v1061
      %v1098 = vcvt.s32.f32 %v1062
      %v1099 = vcvt.s32.f32 %v1063
      %v1100 = vcvt.s32.f32 %v1064
      %v1101 = vcvt.s32.f32 %v1065
      %v1102 = vcvt.s32.f32 %v1066
      %v1103 = vcvt.s32.f32 %v1067
      %v1104 = vcvt.s32.f32 %v1068
      %v1105 = vcvt.s32.f32 %v1069
      %v1106 = vcvt.s32.f32 %v1070
      %v1107 = vcvt.s32.f32 %v1071
      %v1108 = vcvt.s32.f32 %v1072
      %v1109 = vcvt.s32.f32 %v1073
      %v1110 = vcvt.s32.f32 %v1074
      %v1111 = vcvt.s32.f32 %v1075
      %v1112 = vcvt.s32.f32 %v1076
      %v1113 = vcvt.s32.f32 %v1077
      %v1114 = vcvt.s32.f32 %v1078
      %v1115 = vcvt.s32.f32 %v1079
      %v1116 = vcvt.s32.f32 %v1080
      %v1117 = vcvt.s32.f32 %v1081
      %v1118 = vcvt.s32.f32 %v1082
      %v1119 = vcvt.s32.f32 %v1083
      %v1120 = vcvt.s32.f32 %v1084
      %v1121 = vcvt.s32.f32 %v1085
      %v1122 = vmul.f32 %v365, %v1086
      %v1123 = vmul.f32 %v366, %v1087
      %v1124 = vmul.f32 %v367, %v1088
      %v1125 = vmul.f32 %v368, %v1089
      %v1126 = vmul.f32 %v369, %v1090
      %v1127 = vmul.f32 %v370, %v1091
      %v1128 = vmul.f32 %v371, %v1092
      %v1129 = vmul.f32 %v372, %v1093
      %v1130 = vmul.f32 %v373, %v1094
      %v1131 = vmul.f32 %v374, %v1095
      %v1132 = vmul.f32 %v375, %v1096
      %v1133 = vmul.f32 %v376, %v1097
      %v1134 = vmul.f32 %v377, %v1098
      %v1135 = vmul.f32 %v378, %v1099
      %v1136 = vmul.f32 %v379, %v1100
      %v1137 = vmul.f32 %v380, %v1101
      %v1138 = vmul.f32 %v381, %v1102
      %v1139 = vmul.f32 %v382, %v1103
      %v1140 = vmul.f32 %v383, %v1104
      %v1141 = vmul.f32 %v384, %v1105
      %v1142 = vmul.f32 %v385, %v1106
      %v1143 = vmul.f32 %v386, %v1107
      %v1144 = vmul.f32 %v387, %v1108
      %v1145 = vmul.f32 %v388, %v1109
      %v1146 = vmul.f32 %v389, %v1110
      %v1147 = vmul.f32 %v390, %v1111
      %v1148 = vmul.f32 %v391, %v1112
      %v1149 = vmul.f32 %v392, %v1113
      %v1150 = vmul.f32 %v393, %v1114
      %v1151 = vmul.f32 %v394, %v1115
      %v1152 = vmul.f32 %v395, %v1116
      %v1153 = vmul.f32 %v396, %v1117
      %v1154 = vmul.f32 %v397, %v1118
      %v1155 = vmul.f32 %v398, %v1119
      %v1156 = vmul.f32 %v399, %v1120
      %v1157 = vmul.f32 %v400, %v1121
      %v1158 = vpack.c.bf16 %v1123, %v1122
      %v1159 = vpack.c.bf16 %v1125, %v1124
      %v1160 = vpack.c.bf16 %v1127, %v1126
      %v1161 = vpack.c.bf16 %v1129, %v1128
      %v1162 = vpack.c.bf16 %v1131, %v1130
      %v1163 = vpack.c.bf16 %v1133, %v1132
      %v1164 = vpack.c.bf16 %v1135, %v1134
      %v1165 = vpack.c.bf16 %v1137, %v1136
      %v1166 = vpack.c.bf16 %v1139, %v1138
      %v1167 = vpack.c.bf16 %v1141, %v1140
      %v1168 = vpack.c.bf16 %v1143, %v1142
      %v1169 = vpack.c.bf16 %v1145, %v1144
      %v1170 = vpack.c.bf16 %v1147, %v1146
      %v1171 = vpack.c.bf16 %v1149, %v1148
      %v1172 = vpack.c.bf16 %v1151, %v1150
      %v1173 = vpack.c.bf16 %v1153, %v1152
      %v1174 = vpack.c.bf16 %v1155, %v1154
      %v1175 = vpack.c.bf16 %v1157, %v1156
      %v1194 = vunpack.c.l.b16 %v1158
      %v1195 = vunpack.c.h.b16 %v1158
      %v1196 = vunpack.c.l.b16 %v1159
      %v1197 = vunpack.c.h.b16 %v1159
      %v1198 = vunpack.c.l.b16 %v1160
      %v1199 = vunpack.c.h.b16 %v1160
      %v1200 = vunpack.c.l.b16 %v1161
      %v1201 = vunpack.c.h.b16 %v1161
      %v1202 = vunpack.c.l.b16 %v1162
      %v1203 = vunpack.c.h.b16 %v1162
      %v1204 = vunpack.c.l.b16 %v1163
      %v1205 = vunpack.c.h.b16 %v1163
      %v1206 = vunpack.c.l.b16 %v1164
      %v1207 = vunpack.c.h.b16 %v1164
      %v1208 = vunpack.c.l.b16 %v1165
      %v1209 = vunpack.c.h.b16 %v1165
      %v1210 = vunpack.c.l.b16 %v1166
      %v1211 = vunpack.c.h.b16 %v1166
      %v1212 = vunpack.c.l.b16 %v1167
      %v1213 = vunpack.c.h.b16 %v1167
      %v1214 = vunpack.c.l.b16 %v1168
      %v1215 = vunpack.c.h.b16 %v1168
      %v1216 = vunpack.c.l.b16 %v1169
      %v1217 = vunpack.c.h.b16 %v1169
      %v1218 = vunpack.c.l.b16 %v1170
      %v1219 = vunpack.c.h.b16 %v1170
      %v1220 = vunpack.c.l.b16 %v1171
      %v1221 = vunpack.c.h.b16 %v1171
      %v1222 = vunpack.c.l.b16 %v1172
      %v1223 = vunpack.c.h.b16 %v1172
      %v1224 = vunpack.c.l.b16 %v1173
      %v1225 = vunpack.c.h.b16 %v1173
      %v1226 = vunpack.c.l.b16 %v1174
      %v1227 = vunpack.c.h.b16 %v1174
      %v1228 = vunpack.c.l.b16 %v1175
      %v1229 = vunpack.c.h.b16 %v1175
      %v1230 = vpack.c.b16 %v1194, %v1194
      %v1231 = vpack.c.b16 %v1195, %v1195
      %v1232 = vpack.c.b16 %v1196, %v1196
      %v1233 = vpack.c.b16 %v1197, %v1197
      %v1234 = vpack.c.b16 %v1198, %v1198
      %v1235 = vpack.c.b16 %v1199, %v1199
      %v1236 = vpack.c.b16 %v1200, %v1200
      %v1237 = vpack.c.b16 %v1201, %v1201
      %v1238 = vpack.c.b16 %v1202, %v1202
      %v1239 = vpack.c.b16 %v1203, %v1203
      %v1240 = vpack.c.b16 %v1204, %v1204
      %v1241 = vpack.c.b16 %v1205, %v1205
      %v1242 = vpack.c.b16 %v1206, %v1206
      %v1243 = vpack.c.b16 %v1207, %v1207
      %v1244 = vpack.c.b16 %v1208, %v1208
      %v1245 = vpack.c.b16 %v1209, %v1209
      %v1246 = vpack.c.b16 %v1210, %v1210
      %v1247 = vpack.c.b16 %v1211, %v1211
      %v1248 = vpack.c.b16 %v1212, %v1212
      %v1249 = vpack.c.b16 %v1213, %v1213
      %v1250 = vpack.c.b16 %v1214, %v1214
      %v1251 = vpack.c.b16 %v1215, %v1215
      %v1252 = vpack.c.b16 %v1216, %v1216
      %v1253 = vpack.c.b16 %v1217, %v1217
      %v1254 = vpack.c.b16 %v1218, %v1218
      %v1255 = vpack.c.b16 %v1219, %v1219
      %v1256 = vpack.c.b16 %v1220, %v1220
      %v1257 = vpack.c.b16 %v1221, %v1221
      %v1258 = vpack.c.b16 %v1222, %v1222
      %v1259 = vpack.c.b16 %v1223, %v1223
      %v1260 = vpack.c.b16 %v1224, %v1224
      %v1261 = vpack.c.b16 %v1225, %v1225
      %v1262 = vpack.c.b16 %v1226, %v1226
      %v1263 = vpack.c.b16 %v1227, %v1227
      %v1264 = vpack.c.b16 %v1228, %v1228
      %v1265 = vpack.c.b16 %v1229, %v1229
      %1302 = vst [vmem:[%s206] sm:$0xf] %v1230
      %1303 = vst [vmem:[%s206 + $0x4] sm:$0xf] %v1231
      %1304 = vst [vmem:[%s206 + $0x8] sm:$0xf] %v1232
      %1305 = vst [vmem:[%s206 + $0xc] sm:$0xf] %v1233
      %1306 = vst [vmem:[%s206 + $0x10] sm:$0xf] %v1234
      %1307 = vst [vmem:[%s206 + $0x14] sm:$0xf] %v1235
      %1308 = vst [vmem:[%s206 + $0x18] sm:$0xf] %v1236
      %1309 = vst [vmem:[%s206 + $0x1c] sm:$0xf] %v1237
      %1310 = vst [vmem:[%s206 + $0x20] sm:$0xf] %v1238
      %1311 = vst [vmem:[%s206 + $0x24] sm:$0xf] %v1239
      %1312 = vst [vmem:[%s206 + $0x28] sm:$0xf] %v1240
      %1313 = vst [vmem:[%s206 + $0x2c] sm:$0xf] %v1241
      %1314 = vst [vmem:[%s206 + $0x30] sm:$0xf] %v1242
      %1315 = vst [vmem:[%s206 + $0x34] sm:$0xf] %v1243
      %1316 = vst [vmem:[%s206 + $0x38] sm:$0xf] %v1244
      %1317 = vst [vmem:[%s206 + $0x3c] sm:$0xf] %v1245
      %1318 = vst [vmem:[%s206 + $0x40] sm:$0xf] %v1246
      %1319 = vst [vmem:[%s206 + $0x44] sm:$0xf] %v1247
      %1320 = vst [vmem:[%s206 + $0x48] sm:$0xf] %v1248
      %1321 = vst [vmem:[%s206 + $0x4c] sm:$0xf] %v1249
      %1322 = vst [vmem:[%s206 + $0x50] sm:$0xf] %v1250
      %1323 = vst [vmem:[%s206 + $0x54] sm:$0xf] %v1251
      %1324 = vst [vmem:[%s206 + $0x58] sm:$0xf] %v1252
      %1325 = vst [vmem:[%s206 + $0x5c] sm:$0xf] %v1253
      %1326 = vst [vmem:[%s206 + $0x60] sm:$0xf] %v1254
      %1327 = vst [vmem:[%s206 + $0x64] sm:$0xf] %v1255
      %1328 = vst [vmem:[%s206 + $0x68] sm:$0xf] %v1256
      %1329 = vst [vmem:[%s206 + $0x6c] sm:$0xf] %v1257
      %1330 = vst [vmem:[%s206 + $0x70] sm:$0xf] %v1258
      %1331 = vst [vmem:[%s206 + $0x74] sm:$0xf] %v1259
      %1332 = vst [vmem:[%s206 + $0x78] sm:$0xf] %v1260
      %1333 = vst [vmem:[%s206 + $0x7c] sm:$0xf] %v1261
      %1334 = vst [vmem:[%s206 + $0x80] sm:$0xf] %v1262
      %1335 = vst [vmem:[%s206 + $0x84] sm:$0xf] %v1263
      %1336 = vst [vmem:[%s206 + $0x88] sm:$0xf] %v1264
      %1337 = vst [vmem:[%s206 + $0x8c] sm:$0xf] %v1265
      %p1338 = scmp.lt.s32.totalorder %s18, 1
      %s1339 = scalar_select %p1338, %s18, 1
      %p1340 = scmp.lt.s32.totalorder %s19, 0
      %s1341 = scalar_select %p1340, %s19, 0
      %s1342 = smul.addr %s1341, 36
      %s1343 = smul.addr %s1339, 36
      %s1344 = sadd.s32 %s1342, %s1343
      %s1345 = smul.addr %s1344, 4
      %s1346 = scalar_lea.vmem %s3, %s1345
      // Predicated region
      $region33: #{conv_block_forward.5} parent=31 // pred_check
        %p1347 = pneg %p116
      $region34: #{conv_block_forward.5} parent=31 // pred_check_branch
        %1349 = sbr.rel (%p1347) target = $region36
      $region35: #{conv_block_forward.5} parent=31 // pred_region
        _
      $region36: #{conv_block_forward.5} parent=31 // pred_fallthru
        _
    $region32: #{conv_block_forward.5} parent=5 // pred_fallthru
      _
    %p1350 = scmp.le.s32.totalorder 2, %s9
    // Predicated region
    $region37: #{conv_block_forward.5} parent=5 // pred_check
      %p1351 = pneg %p1350
    $region38: #{conv_block_forward.5} parent=5 // pred_check_branch
      %1353 = sbr.rel (%p1351) target = $region40
    $region39: #{conv_block_forward.5} parent=5 // pred_region
      %s1354 = ssub.s32 %s9, 2
      // Predicated region
      $region41: #{conv_block_forward.5} parent=39 // pred_check
        %p1355 = pneg %p122
      $region42: #{conv_block_forward.5} parent=39 // pred_check_branch
        %1357 = sbr.rel (%p1355) target = $region44
      $region43: #{conv_block_forward.5} parent=39 // pred_region
        %p1358 = scmp.lt.s32.totalorder %s20, 1
        %s1359 = scalar_select %p1358, %s20, 1
        %p1360 = scmp.lt.s32.totalorder %s21, 0
        %s1361 = scalar_select %p1360, %s21, 0
        %s1362 = smul.addr %s1361, 36
        %s1363 = smul.addr %s1359, 36
        %s1364 = sadd.s32 %s1362, %s1363
        %s1365 = smul.addr %s1364, 4
        %s1366 = scalar_lea.vmem %s3, %s1365
      $region44: #{conv_block_forward.5} parent=39 // pred_fallthru
        _
    $region40: #{conv_block_forward.5} parent=5 // pred_fallthru
      _
  $region6: #{conv_block_forward.5} parent=0 // loop_footer
    %s13 = sadd.s32 1, %s9
  $region7: #{conv_block_forward.5} parent=0 // loop_footer_branch
    %8 = sbr.rel target = $region3
  $region8: #{conv_block_forward.5} parent=0 // loop_exit
    _

// kernel: conv_block_forward.4
$region0: #{conv_block_forward.4}
  #allocation0 [shape = 'u32[]', space=smem, size = 0x4, offset = 0x4, fixed_abs, tag = 'smem constant byte address 0x4 - core index']
  #allocation1 [shape = 'u32[144,128]{1,0:T(1,128)}', space=vmem, size = 0x12000, scoped, tag = 'internal scratch']
  %s0 = inlined_call_operand.vmem [shape: bf16[2,1,288,128], index: 0, kind: input, shape index: {}]
  %s1 = inlined_call_operand.vmem [shape: bf16[1,128,128], index: 1, kind: input, shape index: {}]
  %s2 = inlined_call_operand.vmem [shape: bf16[2,1,288,128], index: 2, kind: output, shape index: {0}]
  %s3 = inlined_call_operand.vmem [shape: f32[2,1,128], index: 3, kind: output, shape index: {1}]
  %s4 = inlined_call_operand.vmem [shape: f32[2,1,128], index: 4, kind: output, shape index: {2}]
  %5 = xla_tuple %s2, %s3, %s4
  %s6 = sld [smem:[#allocation0]]
  $region61: #{conv_block_forward.4} parent=0
    _
  %s8 = ssub.s32 1, %s6
  %s9 = scalar_select 0, %s8, %s6
  loop: start=0, step=1, limit=4
  $region2: #{conv_block_forward.4} parent=0 // loop_pre_header
    _
  $region3: #{conv_block_forward.4} parent=0 // loop_header
    %s11 = sphi 0, %s15
    %p12 = scmp.ge.s32.totalorder %s11, 4
    %s18 = sphi 0, %s30
    %s19 = sphi 0, %s26
    %s20 = sphi 0, %s18
    %s21 = sphi 0, %s19
    %s22 = sphi 0, %s20
    %s23 = sphi 0, %s21
    %s35 = sphi 0, %s37
    %s38 = sphi 0, %s35
    %s39 = sphi 0, %s38
    %s55 = sphi 0, %s39
    %s59 = sphi 0, %s59
    %s61 = sphi 0, %s59
    %s62 = sphi 0, %s61
    %s76 = sphi 0, %s62
    %s84 = sphi 0, %s86
    %s87 = sphi 0, %s84
    %s88 = sphi 0, %s87
    %s104 = sphi 0, %s88
    %s110 = sphi 0, %s112
    %s113 = sphi 0, %s110
    %s114 = sphi 0, %s113
    %s130 = sphi 0, %s114
    %s136 = sphi 0, %s138
    %s139 = sphi 0, %s136
    %s140 = sphi 0, %s139
    %s156 = sphi 0, %s140
  $region4: #{conv_block_forward.4} parent=0 // loop_header_branch
    %14 = sbr.rel (%p12) target = $region8
  $region5: #{conv_block_forward.4} parent=0 // loop_body
    %s16 = ssub.s32 %s11, 1
    %s17 = ssub.s32 %s11, 2
    %s24 = sadd.s32 1, %s19
    %p25 = scmp.ge.s32.totalorder %s24, 1
    %s26 = scalar_select %p25, 0, %s24
    %s27 = sadd.s32 1, %s18
    %s28 = scalar_select %p25, %s27, %s18
    %p29 = scmp.ge.s32.totalorder %s28, 2
    %s30 = scalar_select %p29, 0, %s28
    %s31 = ssub.s32 %s18, %s30
    %s32 = ssub.s32 %s19, %s26
    %s33 = sor.u32 %s31, %s32
    %p34 = scmp.eq.s32.totalorder %s33, 0
    %s36 = sadd.s32 %s35, 1
    %s37 = scalar_select %p34, %s35, %s36
    %p40 = pneg %p34
    %p41 = scmp.eq.s32.totalorder %s11, 1
    %p42 = por %p40, %p41
    %p43 = scmp.ne.s32.totalorder %s35, %s38
    %p44 = scmp.eq.s32.totalorder %s11, 0
    %p45 = por %p43, %p44
    %p46 = scmp.ne.s32.totalorder %s35, %s38
    %p47 = scmp.eq.s32.totalorder %s16, 1
    %p48 = por %p46, %p47
    %p49 = scmp.ne.s32.totalorder %s38, %s39
    %p50 = scmp.eq.s32.totalorder %s16, 0
    %p51 = por %p49, %p50
    %p52 = scmp.ne.s32.totalorder %s38, %s39
    %p53 = scmp.eq.s32.totalorder %s17, 1
    %p54 = por %p52, %p53
    %p56 = scmp.ne.s32.totalorder %s39, %s55
    %p57 = scmp.eq.s32.totalorder %s17, 0
    %p58 = por %p56, %p57
    %s60 = sadd.s32 %s59, 1
    %p63 = scmp.eq.s32.totalorder %s11, 1
    %p64 = scmp.ne.s32.totalorder %s59, %s61
    %p65 = scmp.eq.s32.totalorder %s11, 0
    %p66 = por %p64, %p65
    %p67 = scmp.ne.s32.totalorder %s59, %s61
    %p68 = scmp.eq.s32.totalorder %s16, 1
    %p69 = por %p67, %p68
    %p70 = scmp.ne.s32.totalorder %s61, %s62
    %p71 = scmp.eq.s32.totalorder %s16, 0
    %p72 = por %p70, %p71
    %p73 = scmp.ne.s32.totalorder %s61, %s62
    %p74 = scmp.eq.s32.totalorder %s17, 1
    %p75 = por %p73, %p74
    %p77 = scmp.ne.s32.totalorder %s62, %s76
    %p78 = scmp.eq.s32.totalorder %s17, 0
    %p79 = por %p77, %p78
    %s80 = ssub.s32 %s18, %s30
    %s81 = ssub.s32 %s19, %s26
    %s82 = sor.u32 %s80, %s81
    %p83 = scmp.eq.s32.totalorder %s82, 0
    %s85 = sadd.s32 %s84, 1
    %s86 = scalar_select %p83, %s84, %s85
    %p89 = pneg %p83
    %p90 = scmp.eq.s32.totalorder %s11, 1
    %p91 = por %p89, %p90
    %p92 = scmp.ne.s32.totalorder %s84, %s87
    %p93 = scmp.eq.s32.totalorder %s11, 0
    %p94 = por %p92, %p93
    %p95 = scmp.ne.s32.totalorder %s84, %s87
    %p96 = scmp.eq.s32.totalorder %s16, 1
    %p97 = por %p95, %p96
    %p98 = scmp.ne.s32.totalorder %s87, %s88
    %p99 = scmp.eq.s32.totalorder %s16, 0
    %p100 = por %p98, %p99
    %p101 = scmp.ne.s32.totalorder %s87, %s88
    %p102 = scmp.eq.s32.totalorder %s17, 1
    %p103 = por %p101, %p102
    %p105 = scmp.ne.s32.totalorder %s88, %s104
    %p106 = scmp.eq.s32.totalorder %s17, 0
    %p107 = por %p105, %p106
    %s108 = ssub.s32 %s18, %s30
    %p109 = scmp.eq.s32.totalorder %s108, 0
    %s111 = sadd.s32 %s110, 1
    %s112 = scalar_select %p109, %s110, %s111
    %p115 = pneg %p109
    %p116 = scmp.eq.s32.totalorder %s11, 1
    %p117 = por %p115, %p116
    %p118 = scmp.ne.s32.totalorder %s110, %s113
    %p119 = scmp.eq.s32.totalorder %s11, 0
    %p120 = por %p118, %p119
    %p121 = scmp.ne.s32.totalorder %s110, %s113
    %p122 = scmp.eq.s32.totalorder %s16, 1
    %p123 = por %p121, %p122
    %p124 = scmp.ne.s32.totalorder %s113, %s114
    %p125 = scmp.eq.s32.totalorder %s16, 0
    %p126 = por %p124, %p125
    %p127 = scmp.ne.s32.totalorder %s113, %s114
    %p128 = scmp.eq.s32.totalorder %s17, 1
    %p129 = por %p127, %p128
    %p131 = scmp.ne.s32.totalorder %s114, %s130
    %p132 = scmp.eq.s32.totalorder %s17, 0
    %p133 = por %p131, %p132
    %s134 = ssub.s32 %s18, %s30
    %p135 = scmp.eq.s32.totalorder %s134, 0
    %s137 = sadd.s32 %s136, 1
    %s138 = scalar_select %p135, %s136, %s137
    %p141 = pneg %p135
    %p142 = scmp.eq.s32.totalorder %s11, 1
    %p143 = por %p141, %p142
    %p144 = scmp.ne.s32.totalorder %s136, %s139
    %p145 = scmp.eq.s32.totalorder %s11, 0
    %p146 = por %p144, %p145
    %p147 = scmp.ne.s32.totalorder %s136, %s139
    %p148 = scmp.eq.s32.totalorder %s16, 1
    %p149 = por %p147, %p148
    %p150 = scmp.ne.s32.totalorder %s139, %s140
    %p151 = scmp.eq.s32.totalorder %s16, 0
    %p152 = por %p150, %p151
    %p153 = scmp.ne.s32.totalorder %s139, %s140
    %p154 = scmp.eq.s32.totalorder %s17, 1
    %p155 = por %p153, %p154
    %p157 = scmp.ne.s32.totalorder %s140, %s156
    %p158 = scmp.eq.s32.totalorder %s17, 0
    %p159 = por %p157, %p158
    %p160 = scmp.le.s32.totalorder 1, %s11
    %p161 = scmp.lt.s32.totalorder %s11, 3
    %p162 = pnand %p160, %p161
    %p163 = pneg %p162
    // Predicated region
    $region9: #{conv_block_forward.4} parent=5 // pred_check
      _
    $region10: #{conv_block_forward.4} parent=5 // pred_check_branch
      %165 = sbr.rel (%p162) target = $region12
    $region11: #{conv_block_forward.4} parent=5 // pred_region
      %s166 = ssub.s32 %s11, 1
      // Predicated region
      $region13: #{conv_block_forward.4} parent=11 // pred_check
        %p167 = pneg %p72
      $region14: #{conv_block_forward.4} parent=11 // pred_check_branch
        %169 = sbr.rel (%p167) target = $region16
      $region15: #{conv_block_forward.4} parent=11 // pred_region
        _
      $region16: #{conv_block_forward.4} parent=11 // pred_fallthru
        _
    $region12: #{conv_block_forward.4} parent=5 // pred_fallthru
      _
    %p170 = scmp.lt.s32.totalorder %s11, 2
    // Predicated region
    $region17: #{conv_block_forward.4} parent=5 // pred_check
      %p171 = pneg %p170
    $region18: #{conv_block_forward.4} parent=5 // pred_check_branch
      %173 = sbr.rel (%p171) target = $region20
    $region19: #{conv_block_forward.4} parent=5 // pred_region
      // Predicated region
      $region21: #{conv_block_forward.4} parent=19 // pred_check
        %p174 = pneg %p45
      $region22: #{conv_block_forward.4} parent=19 // pred_check_branch
        %176 = sbr.rel (%p174) target = $region24
      $region23: #{conv_block_forward.4} parent=19 // pred_region
        %p177 = scmp.lt.s32.totalorder %s18, 1
        %s178 = scalar_select %p177, %s18, 1
        %p179 = scmp.lt.s32.totalorder %s19, 0
        %s180 = scalar_select %p179, %s19, 0
        %s181 = smul.addr %s180, 36
        %s182 = smul.addr %s178, 36
        %s183 = sadd.s32 %s181, %s182
        %s184 = smul.addr %s183, 4
        %s185 = scalar_lea.vmem %s0, %s184
      $region24: #{conv_block_forward.4} parent=19 // pred_fallthru
        _
    $region20: #{conv_block_forward.4} parent=5 // pred_fallthru
      _
    %p186 = scmp.le.s32.totalorder 1, %s11
    %p187 = scmp.lt.s32.totalorder %s11, 3
    %p188 = pnand %p186, %p187
    %p189 = pneg %p188
    // Predicated region
    $region25: #{conv_block_forward.4} parent=5 // pred_check
      _
    $region26: #{conv_block_forward.4} parent=5 // pred_check_branch
      %191 = sbr.rel (%p188) target = $region28
    $region27: #{conv_block_forward.4} parent=5 // pred_region
      %s192 = ssub.s32 %s11, 1
      %p193 = scmp.lt.s32.totalorder %s20, 1
      %s194 = scalar_select %p193, %s20, 1
      %p195 = scmp.lt.s32.totalorder %s21, 0
      %s196 = scalar_select %p195, %s21, 0
      %s197 = smul.addr %s196, 36
      %s198 = smul.addr %s194, 36
      %s199 = sadd.s32 %s197, %s198
      %s200 = smul.addr %s199, 4
      %s201 = scalar_lea.vmem %s0, %s200
      %p202 = pneg %p51
      %p203 = pneg %p48
      %p204 = pneg %p72
      %p205 = pneg %p69
      %p206 = pneg %p100
      %p207 = pneg %p97
      %p208 = scmp.lt.s32.totalorder %s20, 1
      %s209 = scalar_select %p208, %s20, 1
      %p210 = scmp.lt.s32.totalorder %s21, 0
      %s211 = scalar_select %p210, %s21, 0
      %s212 = smul.addr %s211, 36
      %s213 = smul.addr %s209, 36
      %s214 = sadd.s32 %s212, %s213
      %s215 = smul.addr %s214, 4
      %s216 = scalar_lea.vmem %s2, %s215
      %p217 = pneg %p126
      %p218 = pneg %p123
      %p219 = scmp.lt.s32.totalorder %s20, 1
      %s220 = scalar_select %p219, %s20, 1
      %s221 = scalar_lea.vmem %s3, %s220
      %p222 = pneg %p152
      %p223 = pneg %p149
      %p224 = scmp.lt.s32.totalorder %s20, 1
      %s225 = scalar_select %p224, %s20, 1
      %s226 = scalar_lea.vmem %s4, %s225
      %p227 = scmp.lt.s32.totalorder %s20, 1
      %s228 = scalar_select %p227, %s20, 1
      %p229 = scmp.lt.s32.totalorder %s21, 0
      %s230 = scalar_select %p229, %s21, 0
      %s231 = smul.addr %s230, 36
      %s232 = smul.addr %s228, 36
      %s233 = sadd.s32 %s231, %s232
      %s234 = smul.addr %s233, 4
      %s235 = scalar_lea.vmem %s0, %s234
      %p236 = scmp.lt.s32.totalorder %s20, 1
      %s237 = scalar_select %p236, %s20, 1
      %p238 = scmp.lt.s32.totalorder %s21, 0
      %s239 = scalar_select %p238, %s21, 0
      %s240 = smul.addr %s239, 36
      %s241 = smul.addr %s237, 36
      %s242 = sadd.s32 %s240, %s241
      %s243 = smul.addr %s242, 4
      %s244 = scalar_lea.vmem %s2, %s243
      %p245 = scmp.lt.s32.totalorder %s20, 1
      %s246 = scalar_select %p245, %s20, 1
      %s247 = scalar_lea.vmem %s3, %s246
      %p248 = scmp.lt.s32.totalorder %s20, 1
      %s249 = scalar_select %p248, %s20, 1
      %s250 = scalar_lea.vmem %s4, %s249
      %v252 = vld [vmem:[%s235] sm:$0xf]
      %v253 = vld [vmem:[%s235 + $0x4] sm:$0xf]
      %v254 = vld [vmem:[%s235 + $0x8] sm:$0xf]
      %v255 = vld [vmem:[%s235 + $0xc] sm:$0xf]
      %v256 = vld [vmem:[%s235 + $0x10] sm:$0xf]
      %v257 = vld [vmem:[%s235 + $0x14] sm:$0xf]
      %v258 = vld [vmem:[%s235 + $0x18] sm:$0xf]
      %v259 = vld [vmem:[%s235 + $0x1c] sm:$0xf]
      %v260 = vld [vmem:[%s235 + $0x20] sm:$0xf]
      %v261 = vld [vmem:[%s235 + $0x24] sm:$0xf]
      %v262 = vld [vmem:[%s235 + $0x28] sm:$0xf]
      %v263 = vld [vmem:[%s235 + $0x2c] sm:$0xf]
      %v264 = vld [vmem:[%s235 + $0x30] sm:$0xf]
      %v265 = vld [vmem:[%s235 + $0x34] sm:$0xf]
      %v266 = vld [vmem:[%s235 + $0x38] sm:$0xf]
      %v267 = vld [vmem:[%s235 + $0x3c] sm:$0xf]
      %v268 = vld [vmem:[%s235 + $0x40] sm:$0xf]
      %v269 = vld [vmem:[%s235 + $0x44] sm:$0xf]
      %v270 = vld [vmem:[%s235 + $0x48] sm:$0xf]
      %v271 = vld [vmem:[%s235 + $0x4c] sm:$0xf]
      %v272 = vld [vmem:[%s235 + $0x50] sm:$0xf]
      %v273 = vld [vmem:[%s235 + $0x54] sm:$0xf]
      %v274 = vld [vmem:[%s235 + $0x58] sm:$0xf]
      %v275 = vld [vmem:[%s235 + $0x5c] sm:$0xf]
      %v276 = vld [vmem:[%s235 + $0x60] sm:$0xf]
      %v277 = vld [vmem:[%s235 + $0x64] sm:$0xf]
      %v278 = vld [vmem:[%s235 + $0x68] sm:$0xf]
      %v279 = vld [vmem:[%s235 + $0x6c] sm:$0xf]
      %v280 = vld [vmem:[%s235 + $0x70] sm:$0xf]
      %v281 = vld [vmem:[%s235 + $0x74] sm:$0xf]
      %v282 = vld [vmem:[%s235 + $0x78] sm:$0xf]
      %v283 = vld [vmem:[%s235 + $0x7c] sm:$0xf]
      %v284 = vld [vmem:[%s235 + $0x80] sm:$0xf]
      %v285 = vld [vmem:[%s235 + $0x84] sm:$0xf]
      %v286 = vld [vmem:[%s235 + $0x88] sm:$0xf]
      %v287 = vld [vmem:[%s235 + $0x8c] sm:$0xf]
      %v288 = vld [vmem:[%s1] sm:$0xf]
      %v289 = vld [vmem:[%s1 + $0x4] sm:$0xf]
      %v290 = vld [vmem:[%s1 + $0x8] sm:$0xf]
      %v291 = vld [vmem:[%s1 + $0xc] sm:$0xf]
      %v292 = vld [vmem:[%s1 + $0x10] sm:$0xf]
      %v293 = vld [vmem:[%s1 + $0x14] sm:$0xf]
      %v294 = vld [vmem:[%s1 + $0x18] sm:$0xf]
      %v295 = vld [vmem:[%s1 + $0x1c] sm:$0xf]
      %v296 = vld [vmem:[%s1 + $0x20] sm:$0xf]
      %v297 = vld [vmem:[%s1 + $0x24] sm:$0xf]
      %v298 = vld [vmem:[%s1 + $0x28] sm:$0xf]
      %v299 = vld [vmem:[%s1 + $0x2c] sm:$0xf]
      %v300 = vld [vmem:[%s1 + $0x30] sm:$0xf]
      %v301 = vld [vmem:[%s1 + $0x34] sm:$0xf]
      %v302 = vld [vmem:[%s1 + $0x38] sm:$0xf]
      %v303 = vld [vmem:[%s1 + $0x3c] sm:$0xf]
      %v340 = vunpack.c.l.b16 %v252
      %v341 = vunpack.c.l.b16 %v253
      %v342 = vunpack.c.l.b16 %v254
      %v343 = vunpack.c.l.b16 %v255
      %v344 = vunpack.c.l.b16 %v256
      %v345 = vunpack.c.l.b16 %v257
      %v346 = vunpack.c.l.b16 %v258
      %v347 = vunpack.c.l.b16 %v259
      %v348 = vunpack.c.l.b16 %v260
      %v349 = vunpack.c.l.b16 %v261
      %v350 = vunpack.c.l.b16 %v262
      %v351 = vunpack.c.l.b16 %v263
      %v352 = vunpack.c.l.b16 %v264
      %v353 = vunpack.c.l.b16 %v265
      %v354 = vunpack.c.l.b16 %v266
      %v355 = vunpack.c.l.b16 %v267
      %v356 = vunpack.c.l.b16 %v268
      %v357 = vunpack.c.l.b16 %v269
      %v358 = vunpack.c.l.b16 %v270
      %v359 = vunpack.c.l.b16 %v271
      %v360 = vunpack.c.l.b16 %v272
      %v361 = vunpack.c.l.b16 %v273
      %v362 = vunpack.c.l.b16 %v274
      %v363 = vunpack.c.l.b16 %v275
      %v364 = vunpack.c.l.b16 %v276
      %v365 = vunpack.c.l.b16 %v277
      %v366 = vunpack.c.l.b16 %v278
      %v367 = vunpack.c.l.b16 %v279
      %v368 = vunpack.c.l.b16 %v280
      %v369 = vunpack.c.l.b16 %v281
      %v370 = vunpack.c.l.b16 %v282
      %v371 = vunpack.c.l.b16 %v283
      %v372 = vunpack.c.l.b16 %v284
      %v373 = vunpack.c.l.b16 %v285
      %v374 = vunpack.c.l.b16 %v286
      %v375 = vunpack.c.l.b16 %v287
      %v376 = vpack.c.b16 %v341, %v340
      %v377 = vpack.c.b16 %v343, %v342
      %v378 = vpack.c.b16 %v345, %v344
      %v379 = vpack.c.b16 %v347, %v346
      %v380 = vpack.c.b16 %v349, %v348
      %v381 = vpack.c.b16 %v351, %v350
      %v382 = vpack.c.b16 %v353, %v352
      %v383 = vpack.c.b16 %v355, %v354
      %v384 = vpack.c.b16 %v357, %v356
      %v385 = vpack.c.b16 %v359, %v358
      %v386 = vpack.c.b16 %v361, %v360
      %v387 = vpack.c.b16 %v363, %v362
      %v388 = vpack.c.b16 %v365, %v364
      %v389 = vpack.c.b16 %v367, %v366
      %v390 = vpack.c.b16 %v369, %v368
      %v391 = vpack.c.b16 %v371, %v370
      %v392 = vpack.c.b16 %v373, %v372
      %v393 = vpack.c.b16 %v375, %v374
      %v428 = vunpack.c.l.b16 %v288
      %v429 = vunpack.c.l.b16 %v289
      %v430 = vunpack.c.l.b16 %v290
      %v431 = vunpack.c.l.b16 %v291
      %v432 = vunpack.c.l.b16 %v292
      %v433 = vunpack.c.l.b16 %v293
      %v434 = vunpack.c.l.b16 %v294
      %v435 = vunpack.c.l.b16 %v295
      %v436 = vunpack.c.l.b16 %v296
      %v437 = vunpack.c.l.b16 %v297
      %v438 = vunpack.c.l.b16 %v298
      %v439 = vunpack.c.l.b16 %v299
      %v440 = vunpack.c.l.b16 %v300
      %v441 = vunpack.c.l.b16 %v301
      %v442 = vunpack.c.l.b16 %v302
      %v443 = vunpack.c.l.b16 %v303
      %v444 = vpack.c.b16 %v429, %v428
      %v445 = vpack.c.b16 %v431, %v430
      %v446 = vpack.c.b16 %v433, %v432
      %v447 = vpack.c.b16 %v435, %v434
      %v448 = vpack.c.b16 %v437, %v436
      %v449 = vpack.c.b16 %v439, %v438
      %v450 = vpack.c.b16 %v441, %v440
      %v451 = vpack.c.b16 %v443, %v442
      %460 = vmatprep.subr.bf16.mxu0 0
      %461 = vmatpush1.bf16.msra.mxu0 %v451
      %462 = vmatprep.subr.bf16.mxu0 0
      %463 = vmatpush1.bf16.msra.mxu0 %v450
      %464 = vmatprep.subr.bf16.mxu0 0
      %465 = vmatpush1.bf16.msra.mxu0 %v449
      %466 = vmatprep.subr.bf16.mxu0 0
      %467 = vmatpush1.bf16.msra.mxu0 %v448
      %468 = vmatprep.subr.bf16.mxu0 0
      %469 = vmatpush1.bf16.msra.mxu0 %v447
      %470 = vmatprep.subr.bf16.mxu0 0
      %471 = vmatpush1.bf16.msra.mxu0 %v446
      %472 = vmatprep.subr.bf16.mxu0 0
      %473 = vmatpush1.bf16.msra.mxu0 %v445
      %474 = vmatprep.subr.bf16.mxu0 0
      %475 = vmatpush1.bf16.msra.mxu0 %v444
      %476 = vmatprep.subr.bf16.mxu0 0
      %477 = vmatpush2.bf16.msra.mxu0 0
      %478 = vmatprep.subr.bf16.mxu0 0
      %479 = vmatpush2.bf16.msra.mxu0 0
      %480 = vmatprep.subr.bf16.mxu0 0
      %481 = vmatpush2.bf16.msra.mxu0 0
      %482 = vmatprep.subr.bf16.mxu0 0
      %483 = vmatpush2.bf16.msra.mxu0 0
      %484 = vmatprep.subr.bf16.mxu0 0
      %485 = vmatpush2.bf16.msra.mxu0 0
      %486 = vmatprep.subr.bf16.mxu0 0
      %487 = vmatpush2.bf16.msra.mxu0 0
      %488 = vmatprep.subr.bf16.mxu0 0
      %489 = vmatpush2.bf16.msra.mxu0 0
      %490 = vmatprep.subr.bf16.mxu0 0
      %491 = vmatpush2.bf16.msra.mxu0 0
      %492 = vmatprep.mubr.bf16.mxu0 0
      %493 = vmatmul.mubr.bf16.gmra.mxu0 %v376
      %v494 = vpop.f32.mrf.mxu0
      %v495 = vadd.f32 0.0, %v494
      %v496 = vpop.f32.mrf.mxu0
      %v497 = vpop.f32.mrf.mxu0
      %v498 = vadd.f32 0.0, %v497
      %v499 = vpop.f32.mrf.mxu0
      %500 = vmatprep.mubr.bf16.mxu0 0
      %501 = vmatmul.mubr.bf16.gmra.mxu0 %v377
      %v502 = vpop.f32.mrf.mxu0
      %v503 = vadd.f32 0.0, %v502
      %v504 = vpop.f32.mrf.mxu0
      %v505 = vpop.f32.mrf.mxu0
      %v506 = vadd.f32 0.0, %v505
      %v507 = vpop.f32.mrf.mxu0
      %508 = vmatprep.mubr.bf16.mxu0 0
      %509 = vmatmul.mubr.bf16.gmra.mxu0 %v378
      %v510 = vpop.f32.mrf.mxu0
      %v511 = vadd.f32 0.0, %v510
      %v512 = vpop.f32.mrf.mxu0
      %v513 = vpop.f32.mrf.mxu0
      %v514 = vadd.f32 0.0, %v513
      %v515 = vpop.f32.mrf.mxu0
      %516 = vmatprep.mubr.bf16.mxu0 0
      %517 = vmatmul.mubr.bf16.gmra.mxu0 %v379
      %v518 = vpop.f32.mrf.mxu0
      %v519 = vadd.f32 0.0, %v518
      %v520 = vpop.f32.mrf.mxu0
      %v521 = vpop.f32.mrf.mxu0
      %v522 = vadd.f32 0.0, %v521
      %v523 = vpop.f32.mrf.mxu0
      %524 = vmatprep.mubr.bf16.mxu0 0
      %525 = vmatmul.mubr.bf16.gmra.mxu0 %v380
      %v526 = vpop.f32.mrf.mxu0
      %v527 = vadd.f32 0.0, %v526
      %v528 = vpop.f32.mrf.mxu0
      %v529 = vpop.f32.mrf.mxu0
      %v530 = vadd.f32 0.0, %v529
      %v531 = vpop.f32.mrf.mxu0
      %532 = vmatprep.mubr.bf16.mxu0 0
      %533 = vmatmul.mubr.bf16.gmra.mxu0 %v381
      %v534 = vpop.f32.mrf.mxu0
      %v535 = vadd.f32 0.0, %v534
      %v536 = vpop.f32.mrf.mxu0
      %v537 = vpop.f32.mrf.mxu0
      %v538 = vadd.f32 0.0, %v537
      %v539 = vpop.f32.mrf.mxu0
      %540 = vmatprep.mubr.bf16.mxu0 0
      %541 = vmatmul.mubr.bf16.gmra.mxu0 %v382
      %v542 = vpop.f32.mrf.mxu0
      %v543 = vadd.f32 0.0, %v542
      %v544 = vpop.f32.mrf.mxu0
      %v545 = vpop.f32.mrf.mxu0
      %v546 = vadd.f32 0.0, %v545
      %v547 = vpop.f32.mrf.mxu0
      %548 = vmatprep.mubr.bf16.mxu0 0
      %549 = vmatmul.mubr.bf16.gmra.mxu0 %v383
      %v550 = vpop.f32.mrf.mxu0
      %v551 = vadd.f32 0.0, %v550
      %v552 = vpop.f32.mrf.mxu0
      %v553 = vpop.f32.mrf.mxu0
      %v554 = vadd.f32 0.0, %v553
      %v555 = vpop.f32.mrf.mxu0
      %556 = vmatprep.mubr.bf16.mxu0 0
      %557 = vmatmul.mubr.bf16.gmra.mxu0 %v384
      %v558 = vpop.f32.mrf.mxu0
      %v559 = vadd.f32 0.0, %v558
      %v560 = vpop.f32.mrf.mxu0
      %v561 = vpop.f32.mrf.mxu0
      %v562 = vadd.f32 0.0, %v561
      %v563 = vpop.f32.mrf.mxu0
      %564 = vmatprep.mubr.bf16.mxu0 0
      %565 = vmatmul.mubr.bf16.gmra.mxu0 %v385
      %v566 = vpop.f32.mrf.mxu0
      %v567 = vadd.f32 0.0, %v566
      %v568 = vpop.f32.mrf.mxu0
      %v569 = vpop.f32.mrf.mxu0
      %v570 = vadd.f32 0.0, %v569
      %v571 = vpop.f32.mrf.mxu0
      %572 = vmatprep.mubr.bf16.mxu0 0
      %573 = vmatmul.mubr.bf16.gmra.mxu0 %v386
      %v574 = vpop.f32.mrf.mxu0
      %v575 = vadd.f32 0.0, %v574
      %v576 = vpop.f32.mrf.mxu0
      %v577 = vpop.f32.mrf.mxu0
      %v578 = vadd.f32 0.0, %v577
      %v579 = vpop.f32.mrf.mxu0
      %580 = vmatprep.mubr.bf16.mxu0 0
      %581 = vmatmul.mubr.bf16.gmra.mxu0 %v387
      %v582 = vpop.f32.mrf.mxu0
      %v583 = vadd.f32 0.0, %v582
      %v584 = vpop.f32.mrf.mxu0
      %v585 = vpop.f32.mrf.mxu0
      %v586 = vadd.f32 0.0, %v585
      %v587 = vpop.f32.mrf.mxu0
      %588 = vmatprep.mubr.bf16.mxu0 0
      %589 = vmatmul.mubr.bf16.gmra.mxu0 %v388
      %v590 = vpop.f32.mrf.mxu0
      %v591 = vadd.f32 0.0, %v590
      %v592 = vpop.f32.mrf.mxu0
      %v593 = vpop.f32.mrf.mxu0
      %v594 = vadd.f32 0.0, %v593
      %v595 = vpop.f32.mrf.mxu0
      %596 = vmatprep.mubr.bf16.mxu0 0
      %597 = vmatmul.mubr.bf16.gmra.mxu0 %v389
      %v598 = vpop.f32.mrf.mxu0
      %v599 = vadd.f32 0.0, %v598
      %v600 = vpop.f32.mrf.mxu0
      %v601 = vpop.f32.mrf.mxu0
      %v602 = vadd.f32 0.0, %v601
      %v603 = vpop.f32.mrf.mxu0
      %604 = vmatprep.mubr.bf16.mxu0 0
      %605 = vmatmul.mubr.bf16.gmra.mxu0 %v390
      %v606 = vpop.f32.mrf.mxu0
      %v607 = vadd.f32 0.0, %v606
      %v608 = vpop.f32.mrf.mxu0
      %v609 = vpop.f32.mrf.mxu0
      %v610 = vadd.f32 0.0, %v609
      %v611 = vpop.f32.mrf.mxu0
      %612 = vmatprep.mubr.bf16.mxu0 0
      %613 = vmatmul.mubr.bf16.gmra.mxu0 %v391
      %v614 = vpop.f32.mrf.mxu0
      %v615 = vadd.f32 0.0, %v614
      %v616 = vpop.f32.mrf.mxu0
      %v617 = vpop.f32.mrf.mxu0
      %v618 = vadd.f32 0.0, %v617
      %v619 = vpop.f32.mrf.mxu0
      %620 = vmatprep.mubr.bf16.mxu0 0
      %621 = vmatmul.mubr.bf16.gmra.mxu0 %v392
      %v622 = vpop.f32.mrf.mxu0
      %v623 = vadd.f32 0.0, %v622
      %v624 = vpop.f32.mrf.mxu0
      %v625 = vpop.f32.mrf.mxu0
      %v626 = vadd.f32 0.0, %v625
      %v627 = vpop.f32.mrf.mxu0
      %628 = vmatprep.mubr.bf16.mxu0 0
      %629 = vmatmul.mubr.bf16.gmra.mxu0 %v393
      %v630 = vpop.f32.mrf.mxu0
      %v631 = vadd.f32 0.0, %v630
      %v632 = vpop.f32.mrf.mxu0
      %v633 = vpop.f32.mrf.mxu0
      %v634 = vadd.f32 0.0, %v633
      %v635 = vpop.f32.mrf.mxu0
      %636 = vdwg.mxu0
      %v637 = vpack.c.bf16 %v498, %v495
      %v638 = vpack.c.bf16 %v506, %v503
      %v639 = vpack.c.bf16 %v514, %v511
      %v640 = vpack.c.bf16 %v522, %v519
      %v641 = vpack.c.bf16 %v530, %v527
      %v642 = vpack.c.bf16 %v538, %v535
      %v643 = vpack.c.bf16 %v546, %v543
      %v644 = vpack.c.bf16 %v554, %v551
      %v645 = vpack.c.bf16 %v562, %v559
      %v646 = vpack.c.bf16 %v570, %v567
      %v647 = vpack.c.bf16 %v578, %v575
      %v648 = vpack.c.bf16 %v586, %v583
      %v649 = vpack.c.bf16 %v594, %v591
      %v650 = vpack.c.bf16 %v602, %v599
      %v651 = vpack.c.bf16 %v610, %v607
      %v652 = vpack.c.bf16 %v618, %v615
      %v653 = vpack.c.bf16 %v626, %v623
      %v654 = vpack.c.bf16 %v634, %v631
      %v673 = vunpack.c.l.b16 %v637
      %v674 = vunpack.c.h.b16 %v637
      %v675 = vunpack.c.l.b16 %v638
      %v676 = vunpack.c.h.b16 %v638
      %v677 = vunpack.c.l.b16 %v639
      %v678 = vunpack.c.h.b16 %v639
      %v679 = vunpack.c.l.b16 %v640
      %v680 = vunpack.c.h.b16 %v640
      %v681 = vunpack.c.l.b16 %v641
      %v682 = vunpack.c.h.b16 %v641
      %v683 = vunpack.c.l.b16 %v642
      %v684 = vunpack.c.h.b16 %v642
      %v685 = vunpack.c.l.b16 %v643
      %v686 = vunpack.c.h.b16 %v643
      %v687 = vunpack.c.l.b16 %v644
      %v688 = vunpack.c.h.b16 %v644
      %v689 = vunpack.c.l.b16 %v645
      %v690 = vunpack.c.h.b16 %v645
      %v691 = vunpack.c.l.b16 %v646
      %v692 = vunpack.c.h.b16 %v646
      %v693 = vunpack.c.l.b16 %v647
      %v694 = vunpack.c.h.b16 %v647
      %v695 = vunpack.c.l.b16 %v648
      %v696 = vunpack.c.h.b16 %v648
      %v697 = vunpack.c.l.b16 %v649
      %v698 = vunpack.c.h.b16 %v649
      %v699 = vunpack.c.l.b16 %v650
      %v700 = vunpack.c.h.b16 %v650
      %v701 = vunpack.c.l.b16 %v651
      %v702 = vunpack.c.h.b16 %v651
      %v703 = vunpack.c.l.b16 %v652
      %v704 = vunpack.c.h.b16 %v652
      %v705 = vunpack.c.l.b16 %v653
      %v706 = vunpack.c.h.b16 %v653
      %v707 = vunpack.c.l.b16 %v654
      %v708 = vunpack.c.h.b16 %v654
      %v709 = vpack.c.b16 %v673, %v673
      %v710 = vpack.c.b16 %v674, %v674
      %v711 = vpack.c.b16 %v675, %v675
      %v712 = vpack.c.b16 %v676, %v676
      %v713 = vpack.c.b16 %v677, %v677
      %v714 = vpack.c.b16 %v678, %v678
      %v715 = vpack.c.b16 %v679, %v679
      %v716 = vpack.c.b16 %v680, %v680
      %v717 = vpack.c.b16 %v681, %v681
      %v718 = vpack.c.b16 %v682, %v682
      %v719 = vpack.c.b16 %v683, %v683
      %v720 = vpack.c.b16 %v684, %v684
      %v721 = vpack.c.b16 %v685, %v685
      %v722 = vpack.c.b16 %v686, %v686
      %v723 = vpack.c.b16 %v687, %v687
      %v724 = vpack.c.b16 %v688, %v688
      %v725 = vpack.c.b16 %v689, %v689
      %v726 = vpack.c.b16 %v690, %v690
      %v727 = vpack.c.b16 %v691, %v691
      %v728 = vpack.c.b16 %v692, %v692
      %v729 = vpack.c.b16 %v693, %v693
      %v730 = vpack.c.b16 %v694, %v694
      %v731 = vpack.c.b16 %v695, %v695
      %v732 = vpack.c.b16 %v696, %v696
      %v733 = vpack.c.b16 %v697, %v697
      %v734 = vpack.c.b16 %v698, %v698
      %v735 = vpack.c.b16 %v699, %v699
      %v736 = vpack.c.b16 %v700, %v700
      %v737 = vpack.c.b16 %v701, %v701
      %v738 = vpack.c.b16 %v702, %v702
      %v739 = vpack.c.b16 %v703, %v703
      %v740 = vpack.c.b16 %v704, %v704
      %v741 = vpack.c.b16 %v705, %v705
      %v742 = vpack.c.b16 %v706, %v706
      %v743 = vpack.c.b16 %v707, %v707
      %v744 = vpack.c.b16 %v708, %v708
      %781 = vst [vmem:[%s244] sm:$0xf] %v709
      %782 = vst [vmem:[%s244 + $0x4] sm:$0xf] %v710
      %783 = vst [vmem:[%s244 + $0x8] sm:$0xf] %v711
      %784 = vst [vmem:[%s244 + $0xc] sm:$0xf] %v712
      %785 = vst [vmem:[%s244 + $0x10] sm:$0xf] %v713
      %786 = vst [vmem:[%s244 + $0x14] sm:$0xf] %v714
      %787 = vst [vmem:[%s244 + $0x18] sm:$0xf] %v715
      %788 = vst [vmem:[%s244 + $0x1c] sm:$0xf] %v716
      %789 = vst [vmem:[%s244 + $0x20] sm:$0xf] %v717
      %790 = vst [vmem:[%s244 + $0x24] sm:$0xf] %v718
      %791 = vst [vmem:[%s244 + $0x28] sm:$0xf] %v719
      %792 = vst [vmem:[%s244 + $0x2c] sm:$0xf] %v720
      %793 = vst [vmem:[%s244 + $0x30] sm:$0xf] %v721
      %794 = vst [vmem:[%s244 + $0x34] sm:$0xf] %v722
      %795 = vst [vmem:[%s244 + $0x38] sm:$0xf] %v723
      %796 = vst [vmem:[%s244 + $0x3c] sm:$0xf] %v724
      %797 = vst [vmem:[%s244 + $0x40] sm:$0xf] %v725
      %798 = vst [vmem:[%s244 + $0x44] sm:$0xf] %v726
      %799 = vst [vmem:[%s244 + $0x48] sm:$0xf] %v727
      %800 = vst [vmem:[%s244 + $0x4c] sm:$0xf] %v728
      %801 = vst [vmem:[%s244 + $0x50] sm:$0xf] %v729
      %802 = vst [vmem:[%s244 + $0x54] sm:$0xf] %v730
      %803 = vst [vmem:[%s244 + $0x58] sm:$0xf] %v731
      %804 = vst [vmem:[%s244 + $0x5c] sm:$0xf] %v732
      %805 = vst [vmem:[%s244 + $0x60] sm:$0xf] %v733
      %806 = vst [vmem:[%s244 + $0x64] sm:$0xf] %v734
      %807 = vst [vmem:[%s244 + $0x68] sm:$0xf] %v735
      %808 = vst [vmem:[%s244 + $0x6c] sm:$0xf] %v736
      %809 = vst [vmem:[%s244 + $0x70] sm:$0xf] %v737
      %810 = vst [vmem:[%s244 + $0x74] sm:$0xf] %v738
      %811 = vst [vmem:[%s244 + $0x78] sm:$0xf] %v739
      %812 = vst [vmem:[%s244 + $0x7c] sm:$0xf] %v740
      %813 = vst [vmem:[%s244 + $0x80] sm:$0xf] %v741
      %814 = vst [vmem:[%s244 + $0x84] sm:$0xf] %v742
      %815 = vst [vmem:[%s244 + $0x88] sm:$0xf] %v743
      %816 = vst [vmem:[%s244 + $0x8c] sm:$0xf] %v744
      %v817 = vlaneseq
      %v818 = vshrl.u32 %v817, 7
      %v819 = vadd.s32 %v818, 8
      %v820 = vadd.s32 %v818, 16
      %v821 = vadd.s32 %v818, 24
      %v822 = vadd.s32 %v818, 32
      %v823 = vadd.s32 %v818, 40
      %v824 = vadd.s32 %v818, 48
      %v825 = vadd.s32 %v818, 56
      %v826 = vadd.s32 %v818, 64
      %v827 = vadd.s32 %v818, 72
      %v828 = vadd.s32 %v818, 80
      %v829 = vadd.s32 %v818, 88
      %v830 = vadd.s32 %v818, 96
      %v831 = vadd.s32 %v818, 104
      %v832 = vadd.s32 %v818, 112
      %v833 = vadd.s32 %v818, 120
      %v834 = vadd.s32 %v818, 128
      %v835 = vadd.s32 %v818, 136
      %v836 = vadd.s32 %v818, 144
      %v837 = vadd.s32 %v818, 152
      %v838 = vadd.s32 %v818, 160
      %v839 = vadd.s32 %v818, 168
      %v840 = vadd.s32 %v818, 176
      %v841 = vadd.s32 %v818, 184
      %v842 = vadd.s32 %v818, 192
      %v843 = vadd.s32 %v818, 200
      %v844 = vadd.s32 %v818, 208
      %v845 = vadd.s32 %v818, 216
      %v846 = vadd.s32 %v818, 224
      %v847 = vadd.s32 %v818, 232
      %v848 = vadd.s32 %v818, 240
      %v849 = vadd.s32 %v818, 248
      %v850 = vadd.s32 %v818, 256
      %v851 = vadd.s32 %v818, 264
      %v852 = vadd.s32 %v818, 272
      %v853 = vadd.s32 %v818, 280
      %vm854 = vcmp.lt.s32.totalorder %v818, 0
      %v855 = vsub.s32 0, %v818
      %v856 = vsel %vm854, %v855, %v818
      %v857 = vmul.u32.u64.compose %v856, 3817748708
      %v858 = vextract.low.u32 %v857
      %v859 = vextract.high.u32 %v857
      %v860 = vshrl.u32 %v859, 4
      %v861 = vmul.u32 %v860, 18
      %v862 = vsub.s32 %v856, %v861
      %v863 = vsub.s32 0, %v862
      %v864 = vsel %vm854, %v863, %v862
      %vm865 = vcmp.lt.s32.totalorder %v819, 0
      %v866 = vsub.s32 0, %v819
      %v867 = vsel %vm865, %v866, %v819
      %v868 = vmul.u32.u64.compose %v867, 3817748708
      %v869 = vextract.low.u32 %v868
      %v870 = vextract.high.u32 %v868
      %v871 = vshrl.u32 %v870, 4
      %v872 = vmul.u32 %v871, 18
      %v873 = vsub.s32 %v867, %v872
      %v874 = vsub.s32 0, %v873
      %v875 = vsel %vm865, %v874, %v873
      %vm876 = vcmp.lt.s32.totalorder %v820, 0
      %v877 = vsub.s32 0, %v820
      %v878 = vsel %vm876, %v877, %v820
      %v879 = vmul.u32.u64.compose %v878, 3817748708
      %v880 = vextract.low.u32 %v879
      %v881 = vextract.high.u32 %v879
      %v882 = vshrl.u32 %v881, 4
      %v883 = vmul.u32 %v882, 18
      %v884 = vsub.s32 %v878, %v883
      %v885 = vsub.s32 0, %v884
      %v886 = vsel %vm876, %v885, %v884
      %vm887 = vcmp.lt.s32.totalorder %v821, 0
      %v888 = vsub.s32 0, %v821
      %v889 = vsel %vm887, %v888, %v821
      %v890 = vmul.u32.u64.compose %v889, 3817748708
      %v891 = vextract.low.u32 %v890
      %v892 = vextract.high.u32 %v890
      %v893 = vshrl.u32 %v892, 4
      %v894 = vmul.u32 %v893, 18
      %v895 = vsub.s32 %v889, %v894
      %v896 = vsub.s32 0, %v895
      %v897 = vsel %vm887, %v896, %v895
      %vm898 = vcmp.lt.s32.totalorder %v822, 0
      %v899 = vsub.s32 0, %v822
      %v900 = vsel %vm898, %v899, %v822
      %v901 = vmul.u32.u64.compose %v900, 3817748708
      %v902 = vextract.low.u32 %v901
      %v903 = vextract.high.u32 %v901
      %v904 = vshrl.u32 %v903, 4
      %v905 = vmul.u32 %v904, 18
      %v906 = vsub.s32 %v900, %v905
      %v907 = vsub.s32 0, %v906
      %v908 = vsel %vm898, %v907, %v906
      %vm909 = vcmp.lt.s32.totalorder %v823, 0
      %v910 = vsub.s32 0, %v823
      %v911 = vsel %vm909, %v910, %v823
      %v912 = vmul.u32.u64.compose %v911, 3817748708
      %v913 = vextract.low.u32 %v912
      %v914 = vextract.high.u32 %v912
      %v915 = vshrl.u32 %v914, 4
      %v916 = vmul.u32 %v915, 18
      %v917 = vsub.s32 %v911, %v916
      %v918 = vsub.s32 0, %v917
      %v919 = vsel %vm909, %v918, %v917
      %vm920 = vcmp.lt.s32.totalorder %v824, 0
      %v921 = vsub.s32 0, %v824
      %v922 = vsel %vm920, %v921, %v824
      %v923 = vmul.u32.u64.compose %v922, 3817748708
      %v924 = vextract.low.u32 %v923
      %v925 = vextract.high.u32 %v923
      %v926 = vshrl.u32 %v925, 4
      %v927 = vmul.u32 %v926, 18
      %v928 = vsub.s32 %v922, %v927
      %v929 = vsub.s32 0, %v928
      %v930 = vsel %vm920, %v929, %v928
      %vm931 = vcmp.lt.s32.totalorder %v825, 0
      %v932 = vsub.s32 0, %v825
      %v933 = vsel %vm931, %v932, %v825
      %v934 = vmul.u32.u64.compose %v933, 3817748708
      %v935 = vextract.low.u32 %v934
      %v936 = vextract.high.u32 %v934
      %v937 = vshrl.u32 %v936, 4
      %v938 = vmul.u32 %v937, 18
      %v939 = vsub.s32 %v933, %v938
      %v940 = vsub.s32 0, %v939
      %v941 = vsel %vm931, %v940, %v939
      %vm942 = vcmp.lt.s32.totalorder %v826, 0
      %v943 = vsub.s32 0, %v826
      %v944 = vsel %vm942, %v943, %v826
      %v945 = vmul.u32.u64.compose %v944, 3817748708
      %v946 = vextract.low.u32 %v945
      %v947 = vextract.high.u32 %v945
      %v948 = vshrl.u32 %v947, 4
      %v949 = vmul.u32 %v948, 18
      %v950 = vsub.s32 %v944, %v949
      %v951 = vsub.s32 0, %v950
      %v952 = vsel %vm942, %v951, %v950
      %vm953 = vcmp.lt.s32.totalorder %v827, 0
      %v954 = vsub.s32 0, %v827
      %v955 = vsel %vm953, %v954, %v827
      %v956 = vmul.u32.u64.compose %v955, 3817748708
      %v957 = vextract.low.u32 %v956
      %v958 = vextract.high.u32 %v956
      %v959 = vshrl.u32 %v958, 4
      %v960 = vmul.u32 %v959, 18
      %v961 = vsub.s32 %v955, %v960
      %v962 = vsub.s32 0, %v961
      %v963 = vsel %vm953, %v962, %v961
      %vm964 = vcmp.lt.s32.totalorder %v828, 0
      %v965 = vsub.s32 0, %v828
      %v966 = vsel %vm964, %v965, %v828
      %v967 = vmul.u32.u64.compose %v966, 3817748708
      %v968 = vextract.low.u32 %v967
      %v969 = vextract.high.u32 %v967
      %v970 = vshrl.u32 %v969, 4
      %v971 = vmul.u32 %v970, 18
      %v972 = vsub.s32 %v966, %v971
      %v973 = vsub.s32 0, %v972
      %v974 = vsel %vm964, %v973, %v972
      %vm975 = vcmp.lt.s32.totalorder %v829, 0
      %v976 = vsub.s32 0, %v829
      %v977 = vsel %vm975, %v976, %v829
      %v978 = vmul.u32.u64.compose %v977, 3817748708
      %v979 = vextract.low.u32 %v978
      %v980 = vextract.high.u32 %v978
      %v981 = vshrl.u32 %v980, 4
      %v982 = vmul.u32 %v981, 18
      %v983 = vsub.s32 %v977, %v982
      %v984 = vsub.s32 0, %v983
      %v985 = vsel %vm975, %v984, %v983
      %vm986 = vcmp.lt.s32.totalorder %v830, 0
      %v987 = vsub.s32 0, %v830
      %v988 = vsel %vm986, %v987, %v830
      %v989 = vmul.u32.u64.compose %v988, 3817748708
      %v990 = vextract.low.u32 %v989
      %v991 = vextract.high.u32 %v989
      %v992 = vshrl.u32 %v991, 4
      %v993 = vmul.u32 %v992, 18
      %v994 = vsub.s32 %v988, %v993
      %v995 = vsub.s32 0, %v994
      %v996 = vsel %vm986, %v995, %v994
      %vm997 = vcmp.lt.s32.totalorder %v831, 0
      %v998 = vsub.s32 0, %v831
      %v999 = vsel %vm997, %v998, %v831
      %v1000 = vmul.u32.u64.compose %v999, 3817748708
      %v1001 = vextract.low.u32 %v1000
      %v1002 = vextract.high.u32 %v1000
      %v1003 = vshrl.u32 %v1002, 4
      %v1004 = vmul.u32 %v1003, 18
      %v1005 = vsub.s32 %v999, %v1004
      %v1006 = vsub.s32 0, %v1005
      %v1007 = vsel %vm997, %v1006, %v1005
      %vm1008 = vcmp.lt.s32.totalorder %v832, 0
      %v1009 = vsub.s32 0, %v832
      %v1010 = vsel %vm1008, %v1009, %v832
      %v1011 = vmul.u32.u64.compose %v1010, 3817748708
      %v1012 = vextract.low.u32 %v1011
      %v1013 = vextract.high.u32 %v1011
      %v1014 = vshrl.u32 %v1013, 4
      %v1015 = vmul.u32 %v1014, 18
      %v1016 = vsub.s32 %v1010, %v1015
      %v1017 = vsub.s32 0, %v1016
      %v1018 = vsel %vm1008, %v1017, %v1016
      %vm1019 = vcmp.lt.s32.totalorder %v833, 0
      %v1020 = vsub.s32 0, %v833
      %v1021 = vsel %vm1019, %v1020, %v833
      %v1022 = vmul.u32.u64.compose %v1021, 3817748708
      %v1023 = vextract.low.u32 %v1022
      %v1024 = vextract.high.u32 %v1022
      %v1025 = vshrl.u32 %v1024, 4
      %v1026 = vmul.u32 %v1025, 18
      %v1027 = vsub.s32 %v1021, %v1026
      %v1028 = vsub.s32 0, %v1027
      %v1029 = vsel %vm1019, %v1028, %v1027
      %vm1030 = vcmp.lt.s32.totalorder %v834, 0
      %v1031 = vsub.s32 0, %v834
      %v1032 = vsel %vm1030, %v1031, %v834
      %v1033 = vmul.u32.u64.compose %v1032, 3817748708
      %v1034 = vextract.low.u32 %v1033
      %v1035 = vextract.high.u32 %v1033
      %v1036 = vshrl.u32 %v1035, 4
      %v1037 = vmul.u32 %v1036, 18
      %v1038 = vsub.s32 %v1032, %v1037
      %v1039 = vsub.s32 0, %v1038
      %v1040 = vsel %vm1030, %v1039, %v1038
      %vm1041 = vcmp.lt.s32.totalorder %v835, 0
      %v1042 = vsub.s32 0, %v835
      %v1043 = vsel %vm1041, %v1042, %v835
      %v1044 = vmul.u32.u64.compose %v1043, 3817748708
      %v1045 = vextract.low.u32 %v1044
      %v1046 = vextract.high.u32 %v1044
      %v1047 = vshrl.u32 %v1046, 4
      %v1048 = vmul.u32 %v1047, 18
      %v1049 = vsub.s32 %v1043, %v1048
      %v1050 = vsub.s32 0, %v1049
      %v1051 = vsel %vm1041, %v1050, %v1049
      %vm1052 = vcmp.lt.s32.totalorder %v836, 0
      %v1053 = vsub.s32 0, %v836
      %v1054 = vsel %vm1052, %v1053, %v836
      %v1055 = vmul.u32.u64.compose %v1054, 3817748708
      %v1056 = vextract.low.u32 %v1055
      %v1057 = vextract.high.u32 %v1055
      %v1058 = vshrl.u32 %v1057, 4
      %v1059 = vmul.u32 %v1058, 18
      %v1060 = vsub.s32 %v1054, %v1059
      %v1061 = vsub.s32 0, %v1060
      %v1062 = vsel %vm1052, %v1061, %v1060
      %vm1063 = vcmp.lt.s32.totalorder %v837, 0
      %v1064 = vsub.s32 0, %v837
      %v1065 = vsel %vm1063, %v1064, %v837
      %v1066 = vmul.u32.u64.compose %v1065, 3817748708
      %v1067 = vextract.low.u32 %v1066
      %v1068 = vextract.high.u32 %v1066
      %v1069 = vshrl.u32 %v1068, 4
      %v1070 = vmul.u32 %v1069, 18
      %v1071 = vsub.s32 %v1065, %v1070
      %v1072 = vsub.s32 0, %v1071
      %v1073 = vsel %vm1063, %v1072, %v1071
      %vm1074 = vcmp.lt.s32.totalorder %v838, 0
      %v1075 = vsub.s32 0, %v838
      %v1076 = vsel %vm1074, %v1075, %v838
      %v1077 = vmul.u32.u64.compose %v1076, 3817748708
      %v1078 = vextract.low.u32 %v1077
      %v1079 = vextract.high.u32 %v1077
      %v1080 = vshrl.u32 %v1079, 4
      %v1081 = vmul.u32 %v1080, 18
      %v1082 = vsub.s32 %v1076, %v1081
      %v1083 = vsub.s32 0, %v1082
      %v1084 = vsel %vm1074, %v1083, %v1082
      %vm1085 = vcmp.lt.s32.totalorder %v839, 0
      %v1086 = vsub.s32 0, %v839
      %v1087 = vsel %vm1085, %v1086, %v839
      %v1088 = vmul.u32.u64.compose %v1087, 3817748708
      %v1089 = vextract.low.u32 %v1088
      %v1090 = vextract.high.u32 %v1088
      %v1091 = vshrl.u32 %v1090, 4
      %v1092 = vmul.u32 %v1091, 18
      %v1093 = vsub.s32 %v1087, %v1092
      %v1094 = vsub.s32 0, %v1093
      %v1095 = vsel %vm1085, %v1094, %v1093
      %vm1096 = vcmp.lt.s32.totalorder %v840, 0
      %v1097 = vsub.s32 0, %v840
      %v1098 = vsel %vm1096, %v1097, %v840
      %v1099 = vmul.u32.u64.compose %v1098, 3817748708
      %v1100 = vextract.low.u32 %v1099
      %v1101 = vextract.high.u32 %v1099
      %v1102 = vshrl.u32 %v1101, 4
      %v1103 = vmul.u32 %v1102, 18
      %v1104 = vsub.s32 %v1098, %v1103
      %v1105 = vsub.s32 0, %v1104
      %v1106 = vsel %vm1096, %v1105, %v1104
      %vm1107 = vcmp.lt.s32.totalorder %v841, 0
      %v1108 = vsub.s32 0, %v841
      %v1109 = vsel %vm1107, %v1108, %v841
      %v1110 = vmul.u32.u64.compose %v1109, 3817748708
      %v1111 = vextract.low.u32 %v1110
      %v1112 = vextract.high.u32 %v1110
      %v1113 = vshrl.u32 %v1112, 4
      %v1114 = vmul.u32 %v1113, 18
      %v1115 = vsub.s32 %v1109, %v1114
      %v1116 = vsub.s32 0, %v1115
      %v1117 = vsel %vm1107, %v1116, %v1115
      %vm1118 = vcmp.lt.s32.totalorder %v842, 0
      %v1119 = vsub.s32 0, %v842
      %v1120 = vsel %vm1118, %v1119, %v842
      %v1121 = vmul.u32.u64.compose %v1120, 3817748708
      %v1122 = vextract.low.u32 %v1121
      %v1123 = vextract.high.u32 %v1121
      %v1124 = vshrl.u32 %v1123, 4
      %v1125 = vmul.u32 %v1124, 18
      %v1126 = vsub.s32 %v1120, %v1125
      %v1127 = vsub.s32 0, %v1126
      %v1128 = vsel %vm1118, %v1127, %v1126
      %vm1129 = vcmp.lt.s32.totalorder %v843, 0
      %v1130 = vsub.s32 0, %v843
      %v1131 = vsel %vm1129, %v1130, %v843
      %v1132 = vmul.u32.u64.compose %v1131, 3817748708
      %v1133 = vextract.low.u32 %v1132
      %v1134 = vextract.high.u32 %v1132
      %v1135 = vshrl.u32 %v1134, 4
      %v1136 = vmul.u32 %v1135, 18
      %v1137 = vsub.s32 %v1131, %v1136
      %v1138 = vsub.s32 0, %v1137
      %v1139 = vsel %vm1129, %v1138, %v1137
      %vm1140 = vcmp.lt.s32.totalorder %v844, 0
      %v1141 = vsub.s32 0, %v844
      %v1142 = vsel %vm1140, %v1141, %v844
      %v1143 = vmul.u32.u64.compose %v1142, 3817748708
      %v1144 = vextract.low.u32 %v1143
      %v1145 = vextract.high.u32 %v1143
      %v1146 = vshrl.u32 %v1145, 4
      %v1147 = vmul.u32 %v1146, 18
      %v1148 = vsub.s32 %v1142, %v1147
      %v1149 = vsub.s32 0, %v1148
      %v1150 = vsel %vm1140, %v1149, %v1148
      %vm1151 = vcmp.lt.s32.totalorder %v845, 0
      %v1152 = vsub.s32 0, %v845
      %v1153 = vsel %vm1151, %v1152, %v845
      %v1154 = vmul.u32.u64.compose %v1153, 3817748708
      %v1155 = vextract.low.u32 %v1154
      %v1156 = vextract.high.u32 %v1154
      %v1157 = vshrl.u32 %v1156, 4
      %v1158 = vmul.u32 %v1157, 18
      %v1159 = vsub.s32 %v1153, %v1158
      %v1160 = vsub.s32 0, %v1159
      %v1161 = vsel %vm1151, %v1160, %v1159
      %vm1162 = vcmp.lt.s32.totalorder %v846, 0
      %v1163 = vsub.s32 0, %v846
      %v1164 = vsel %vm1162, %v1163, %v846
      %v1165 = vmul.u32.u64.compose %v1164, 3817748708
      %v1166 = vextract.low.u32 %v1165
      %v1167 = vextract.high.u32 %v1165
      %v1168 = vshrl.u32 %v1167, 4
      %v1169 = vmul.u32 %v1168, 18
      %v1170 = vsub.s32 %v1164, %v1169
      %v1171 = vsub.s32 0, %v1170
      %v1172 = vsel %vm1162, %v1171, %v1170
      %vm1173 = vcmp.lt.s32.totalorder %v847, 0
      %v1174 = vsub.s32 0, %v847
      %v1175 = vsel %vm1173, %v1174, %v847
      %v1176 = vmul.u32.u64.compose %v1175, 3817748708
      %v1177 = vextract.low.u32 %v1176
      %v1178 = vextract.high.u32 %v1176
      %v1179 = vshrl.u32 %v1178, 4
      %v1180 = vmul.u32 %v1179, 18
      %v1181 = vsub.s32 %v1175, %v1180
      %v1182 = vsub.s32 0, %v1181
      %v1183 = vsel %vm1173, %v1182, %v1181
      %vm1184 = vcmp.lt.s32.totalorder %v848, 0
      %v1185 = vsub.s32 0, %v848
      %v1186 = vsel %vm1184, %v1185, %v848
      %v1187 = vmul.u32.u64.compose %v1186, 3817748708
      %v1188 = vextract.low.u32 %v1187
      %v1189 = vextract.high.u32 %v1187
      %v1190 = vshrl.u32 %v1189, 4
      %v1191 = vmul.u32 %v1190, 18
      %v1192 = vsub.s32 %v1186, %v1191
      %v1193 = vsub.s32 0, %v1192
      %v1194 = vsel %vm1184, %v1193, %v1192
      %vm1195 = vcmp.lt.s32.totalorder %v849, 0
      %v1196 = vsub.s32 0, %v849
      %v1197 = vsel %vm1195, %v1196, %v849
      %v1198 = vmul.u32.u64.compose %v1197, 3817748708
      %v1199 = vextract.low.u32 %v1198
      %v1200 = vextract.high.u32 %v1198
      %v1201 = vshrl.u32 %v1200, 4
      %v1202 = vmul.u32 %v1201, 18
      %v1203 = vsub.s32 %v1197, %v1202
      %v1204 = vsub.s32 0, %v1203
      %v1205 = vsel %vm1195, %v1204, %v1203
      %vm1206 = vcmp.lt.s32.totalorder %v850, 0
      %v1207 = vsub.s32 0, %v850
      %v1208 = vsel %vm1206, %v1207, %v850
      %v1209 = vmul.u32.u64.compose %v1208, 3817748708
      %v1210 = vextract.low.u32 %v1209
      %v1211 = vextract.high.u32 %v1209
      %v1212 = vshrl.u32 %v1211, 4
      %v1213 = vmul.u32 %v1212, 18
      %v1214 = vsub.s32 %v1208, %v1213
      %v1215 = vsub.s32 0, %v1214
      %v1216 = vsel %vm1206, %v1215, %v1214
      %vm1217 = vcmp.lt.s32.totalorder %v851, 0
      %v1218 = vsub.s32 0, %v851
      %v1219 = vsel %vm1217, %v1218, %v851
      %v1220 = vmul.u32.u64.compose %v1219, 3817748708
      %v1221 = vextract.low.u32 %v1220
      %v1222 = vextract.high.u32 %v1220
      %v1223 = vshrl.u32 %v1222, 4
      %v1224 = vmul.u32 %v1223, 18
      %v1225 = vsub.s32 %v1219, %v1224
      %v1226 = vsub.s32 0, %v1225
      %v1227 = vsel %vm1217, %v1226, %v1225
      %vm1228 = vcmp.lt.s32.totalorder %v852, 0
      %v1229 = vsub.s32 0, %v852
      %v1230 = vsel %vm1228, %v1229, %v852
      %v1231 = vmul.u32.u64.compose %v1230, 3817748708
      %v1232 = vextract.low.u32 %v1231
      %v1233 = vextract.high.u32 %v1231
      %v1234 = vshrl.u32 %v1233, 4
      %v1235 = vmul.u32 %v1234, 18
      %v1236 = vsub.s32 %v1230, %v1235
      %v1237 = vsub.s32 0, %v1236
      %v1238 = vsel %vm1228, %v1237, %v1236
      %vm1239 = vcmp.lt.s32.totalorder %v853, 0
      %v1240 = vsub.s32 0, %v853
      %v1241 = vsel %vm1239, %v1240, %v853
      %v1242 = vmul.u32.u64.compose %v1241, 3817748708
      %v1243 = vextract.low.u32 %v1242
      %v1244 = vextract.high.u32 %v1242
      %v1245 = vshrl.u32 %v1244, 4
      %v1246 = vmul.u32 %v1245, 18
      %v1247 = vsub.s32 %v1241, %v1246
      %v1248 = vsub.s32 0, %v1247
      %v1249 = vsel %vm1239, %v1248, %v1247
      %vm1250 = vcmp.ne.s32.totalorder %v864, 0
      %vm1251 = vcmp.ne.s32.totalorder %v875, 0
      %vm1252 = vcmp.ne.s32.totalorder %v886, 0
      %vm1253 = vcmp.ne.s32.totalorder %v897, 0
      %vm1254 = vcmp.ne.s32.totalorder %v908, 0
      %vm1255 = vcmp.ne.s32.totalorder %v919, 0
      %vm1256 = vcmp.ne.s32.totalorder %v930, 0
      %vm1257 = vcmp.ne.s32.totalorder %v941, 0
      %vm1258 = vcmp.ne.s32.totalorder %v952, 0
      %vm1259 = vcmp.ne.s32.totalorder %v963, 0
      %vm1260 = vcmp.ne.s32.totalorder %v974, 0
      %vm1261 = vcmp.ne.s32.totalorder %v985, 0
      %vm1262 = vcmp.ne.s32.totalorder %v996, 0
      %vm1263 = vcmp.ne.s32.totalorder %v1007, 0
      %vm1264 = vcmp.ne.s32.totalorder %v1018, 0
      %vm1265 = vcmp.ne.s32.totalorder %v1029, 0
      %vm1266 = vcmp.ne.s32.totalorder %v1040, 0
      %vm1267 = vcmp.ne.s32.totalorder %v1051, 0
      %vm1268 = vcmp.ne.s32.totalorder %v1062, 0
      %vm1269 = vcmp.ne.s32.totalorder %v1073, 0
      %vm1270 = vcmp.ne.s32.totalorder %v1084, 0
      %vm1271 = vcmp.ne.s32.totalorder %v1095, 0
      %vm1272 = vcmp.ne.s32.totalorder %v1106, 0
      %vm1273 = vcmp.ne.s32.totalorder %v1117, 0
      %vm1274 = vcmp.ne.s32.totalorder %v1128, 0
      %vm1275 = vcmp.ne.s32.totalorder %v1139, 0
      %vm1276 = vcmp.ne.s32.totalorder %v1150, 0
      %vm1277 = vcmp.ne.s32.totalorder %v1161, 0
      %vm1278 = vcmp.ne.s32.totalorder %v1172, 0
      %vm1279 = vcmp.ne.s32.totalorder %v1183, 0
      %vm1280 = vcmp.ne.s32.totalorder %v1194, 0
      %vm1281 = vcmp.ne.s32.totalorder %v1205, 0
      %vm1282 = vcmp.ne.s32.totalorder %v1216, 0
      %vm1283 = vcmp.ne.s32.totalorder %v1227, 0
      %vm1284 = vcmp.ne.s32.totalorder %v1238, 0
      %vm1285 = vcmp.ne.s32.totalorder %v1249, 0
      %vm1286 = vcmp.lt.s32.totalorder %v864, 0
      %vm1287 = vcmp.lt.s32.totalorder %v875, 0
      %vm1288 = vcmp.lt.s32.totalorder %v886, 0
      %vm1289 = vcmp.lt.s32.totalorder %v897, 0
      %vm1290 = vcmp.lt.s32.totalorder %v908, 0
      %vm1291 = vcmp.lt.s32.totalorder %v919, 0
      %vm1292 = vcmp.lt.s32.totalorder %v930, 0
      %vm1293 = vcmp.lt.s32.totalorder %v941, 0
      %vm1294 = vcmp.lt.s32.totalorder %v952, 0
      %vm1295 = vcmp.lt.s32.totalorder %v963, 0
      %vm1296 = vcmp.lt.s32.totalorder %v974, 0
      %vm1297 = vcmp.lt.s32.totalorder %v985, 0
      %vm1298 = vcmp.lt.s32.totalorder %v996, 0
      %vm1299 = vcmp.lt.s32.totalorder %v1007, 0
      %vm1300 = vcmp.lt.s32.totalorder %v1018, 0
      %vm1301 = vcmp.lt.s32.totalorder %v1029, 0
      %vm1302 = vcmp.lt.s32.totalorder %v1040, 0
      %vm1303 = vcmp.lt.s32.totalorder %v1051, 0
      %vm1304 = vcmp.lt.s32.totalorder %v1062, 0
      %vm1305 = vcmp.lt.s32.totalorder %v1073, 0
      %vm1306 = vcmp.lt.s32.totalorder %v1084, 0
      %vm1307 = vcmp.lt.s32.totalorder %v1095, 0
      %vm1308 = vcmp.lt.s32.totalorder %v1106, 0
      %vm1309 = vcmp.lt.s32.totalorder %v1117, 0
      %vm1310 = vcmp.lt.s32.totalorder %v1128, 0
      %vm1311 = vcmp.lt.s32.totalorder %v1139, 0
      %vm1312 = vcmp.lt.s32.totalorder %v1150, 0
      %vm1313 = vcmp.lt.s32.totalorder %v1161, 0
      %vm1314 = vcmp.lt.s32.totalorder %v1172, 0
      %vm1315 = vcmp.lt.s32.totalorder %v1183, 0
      %vm1316 = vcmp.lt.s32.totalorder %v1194, 0
      %vm1317 = vcmp.lt.s32.totalorder %v1205, 0
      %vm1318 = vcmp.lt.s32.totalorder %v1216, 0
      %vm1319 = vcmp.lt.s32.totalorder %v1227, 0
      %vm1320 = vcmp.lt.s32.totalorder %v1238, 0
      %vm1321 = vcmp.lt.s32.totalorder %v1249, 0
      %vm1322 = vmand %vm1286, %vm1250
      %vm1323 = vmand %vm1287, %vm1251
      %vm1324 = vmand %vm1288, %vm1252
      %vm1325 = vmand %vm1289, %vm1253
      %vm1326 = vmand %vm1290, %vm1254
      %vm1327 = vmand %vm1291, %vm1255
      %vm1328 = vmand %vm1292, %vm1256
      %vm1329 = vmand %vm1293, %vm1257
      %vm1330 = vmand %vm1294, %vm1258
      %vm1331 = vmand %vm1295, %vm1259
      %vm1332 = vmand %vm1296, %vm1260
      %vm1333 = vmand %vm1297, %vm1261
      %vm1334 = vmand %vm1298, %vm1262
      %vm1335 = vmand %vm1299, %vm1263
      %vm1336 = vmand %vm1300, %vm1264
      %vm1337 = vmand %vm1301, %vm1265
      %vm1338 = vmand %vm1302, %vm1266
      %vm1339 = vmand %vm1303, %vm1267
      %vm1340 = vmand %vm1304, %vm1268
      %vm1341 = vmand %vm1305, %vm1269
      %vm1342 = vmand %vm1306, %vm1270
      %vm1343 = vmand %vm1307, %vm1271
      %vm1344 = vmand %vm1308, %vm1272
      %vm1345 = vmand %vm1309, %vm1273
      %vm1346 = vmand %vm1310, %vm1274
      %vm1347 = vmand %vm1311, %vm1275
      %vm1348 = vmand %vm1312, %vm1276
      %vm1349 = vmand %vm1313, %vm1277
      %vm1350 = vmand %vm1314, %vm1278
      %vm1351 = vmand %vm1315, %vm1279
      %vm1352 = vmand %vm1316, %vm1280
      %vm1353 = vmand %vm1317, %vm1281
      %vm1354 = vmand %vm1318, %vm1282
      %vm1355 = vmand %vm1319, %vm1283
      %vm1356 = vmand %vm1320, %vm1284
      %vm1357 = vmand %vm1321, %vm1285
      %v1358 = vadd.s32 %v864, 18
      %v1359 = vadd.s32 %v875, 18
      %v1360 = vadd.s32 %v886, 18
      %v1361 = vadd.s32 %v897, 18
      %v1362 = vadd.s32 %v908, 18
      %v1363 = vadd.s32 %v919, 18
      %v1364 = vadd.s32 %v930, 18
      %v1365 = vadd.s32 %v941, 18
      %v1366 = vadd.s32 %v952, 18
      %v1367 = vadd.s32 %v963, 18
      %v1368 = vadd.s32 %v974, 18
      %v1369 = vadd.s32 %v985, 18
      %v1370 = vadd.s32 %v996, 18
      %v1371 = vadd.s32 %v1007, 18
      %v1372 = vadd.s32 %v1018, 18
      %v1373 = vadd.s32 %v1029, 18
      %v1374 = vadd.s32 %v1040, 18
      %v1375 = vadd.s32 %v1051, 18
      %v1376 = vadd.s32 %v1062, 18
      %v1377 = vadd.s32 %v1073, 18
      %v1378 = vadd.s32 %v1084, 18
      %v1379 = vadd.s32 %v1095, 18
      %v1380 = vadd.s32 %v1106, 18
      %v1381 = vadd.s32 %v1117, 18
      %v1382 = vadd.s32 %v1128, 18
      %v1383 = vadd.s32 %v1139, 18
      %v1384 = vadd.s32 %v1150, 18
      %v1385 = vadd.s32 %v1161, 18
      %v1386 = vadd.s32 %v1172, 18
      %v1387 = vadd.s32 %v1183, 18
      %v1388 = vadd.s32 %v1194, 18
      %v1389 = vadd.s32 %v1205, 18
      %v1390 = vadd.s32 %v1216, 18
      %v1391 = vadd.s32 %v1227, 18
      %v1392 = vadd.s32 %v1238, 18
      %v1393 = vadd.s32 %v1249, 18
      %v1394 = vsel %vm1322, %v1358, %v864
      %v1395 = vsel %vm1323, %v1359, %v875
      %v1396 = vsel %vm1324, %v1360, %v886
      %v1397 = vsel %vm1325, %v1361, %v897
      %v1398 = vsel %vm1326, %v1362, %v908
      %v1399 = vsel %vm1327, %v1363, %v919
      %v1400 = vsel %vm1328, %v1364, %v930
      %v1401 = vsel %vm1329, %v1365, %v941
      %v1402 = vsel %vm1330, %v1366, %v952
      %v1403 = vsel %vm1331, %v1367, %v963
      %v1404 = vsel %vm1332, %v1368, %v974
      %v1405 = vsel %vm1333, %v1369, %v985
      %v1406 = vsel %vm1334, %v1370, %v996
      %v1407 = vsel %vm1335, %v1371, %v1007
      %v1408 = vsel %vm1336, %v1372, %v1018
      %v1409 = vsel %vm1337, %v1373, %v1029
      %v1410 = vsel %vm1338, %v1374, %v1040
      %v1411 = vsel %vm1339, %v1375, %v1051
      %v1412 = vsel %vm1340, %v1376, %v1062
      %v1413 = vsel %vm1341, %v1377, %v1073
      %v1414 = vsel %vm1342, %v1378, %v1084
      %v1415 = vsel %vm1343, %v1379, %v1095
      %v1416 = vsel %vm1344, %v1380, %v1106
      %v1417 = vsel %vm1345, %v1381, %v1117
      %v1418 = vsel %vm1346, %v1382, %v1128
      %v1419 = vsel %vm1347, %v1383, %v1139
      %v1420 = vsel %vm1348, %v1384, %v1150
      %v1421 = vsel %vm1349, %v1385, %v1161
      %v1422 = vsel %vm1350, %v1386, %v1172
      %v1423 = vsel %vm1351, %v1387, %v1183
      %v1424 = vsel %vm1352, %v1388, %v1194
      %v1425 = vsel %vm1353, %v1389, %v1205
      %v1426 = vsel %vm1354, %v1390, %v1216
      %v1427 = vsel %vm1355, %v1391, %v1227
      %v1428 = vsel %vm1356, %v1392, %v1238
      %v1429 = vsel %vm1357, %v1393, %v1249
      %vm1430 = vcmp.lt.s32.totalorder %v1394, 16
      %vm1431 = vcmp.lt.s32.totalorder %v1395, 16
      %vm1432 = vcmp.lt.s32.totalorder %v1396, 16
      %vm1433 = vcmp.lt.s32.totalorder %v1397, 16
      %vm1434 = vcmp.lt.s32.totalorder %v1398, 16
      %vm1435 = vcmp.lt.s32.totalorder %v1399, 16
      %vm1436 = vcmp.lt.s32.totalorder %v1400, 16
      %vm1437 = vcmp.lt.s32.totalorder %v1401, 16
      %vm1438 = vcmp.lt.s32.totalorder %v1402, 16
      %vm1439 = vcmp.lt.s32.totalorder %v1403, 16
      %vm1440 = vcmp.lt.s32.totalorder %v1404, 16
      %vm1441 = vcmp.lt.s32.totalorder %v1405, 16
      %vm1442 = vcmp.lt.s32.totalorder %v1406, 16
      %vm1443 = vcmp.lt.s32.totalorder %v1407, 16
      %vm1444 = vcmp.lt.s32.totalorder %v1408, 16
      %vm1445 = vcmp.lt.s32.totalorder %v1409, 16
      %vm1446 = vcmp.lt.s32.totalorder %v1410, 16
      %vm1447 = vcmp.lt.s32.totalorder %v1411, 16
      %vm1448 = vcmp.lt.s32.totalorder %v1412, 16
      %vm1449 = vcmp.lt.s32.totalorder %v1413, 16
      %vm1450 = vcmp.lt.s32.totalorder %v1414, 16
      %vm1451 = vcmp.lt.s32.totalorder %v1415, 16
      %vm1452 = vcmp.lt.s32.totalorder %v1416, 16
      %vm1453 = vcmp.lt.s32.totalorder %v1417, 16
      %vm1454 = vcmp.lt.s32.totalorder %v1418, 16
      %vm1455 = vcmp.lt.s32.totalorder %v1419, 16
      %vm1456 = vcmp.lt.s32.totalorder %v1420, 16
      %vm1457 = vcmp.lt.s32.totalorder %v1421, 16
      %vm1458 = vcmp.lt.s32.totalorder %v1422, 16
      %vm1459 = vcmp.lt.s32.totalorder %v1423, 16
      %vm1460 = vcmp.lt.s32.totalorder %v1424, 16
      %vm1461 = vcmp.lt.s32.totalorder %v1425, 16
      %vm1462 = vcmp.lt.s32.totalorder %v1426, 16
      %vm1463 = vcmp.lt.s32.totalorder %v1427, 16
      %vm1464 = vcmp.lt.s32.totalorder %v1428, 16
      %vm1465 = vcmp.lt.s32.totalorder %v1429, 16
      %v1466 = vsel %vm1430, 1, 0
      %v1467 = vsel %vm1431, 1, 0
      %v1468 = vsel %vm1432, 1, 0
      %v1469 = vsel %vm1433, 1, 0
      %v1470 = vsel %vm1434, 1, 0
      %v1471 = vsel %vm1435, 1, 0
      %v1472 = vsel %vm1436, 1, 0
      %v1473 = vsel %vm1437, 1, 0
      %v1474 = vsel %vm1438, 1, 0
      %v1475 = vsel %vm1439, 1, 0
      %v1476 = vsel %vm1440, 1, 0
      %v1477 = vsel %vm1441, 1, 0
      %v1478 = vsel %vm1442, 1, 0
      %v1479 = vsel %vm1443, 1, 0
      %v1480 = vsel %vm1444, 1, 0
      %v1481 = vsel %vm1445, 1, 0
      %v1482 = vsel %vm1446, 1, 0
      %v1483 = vsel %vm1447, 1, 0
      %v1484 = vsel %vm1448, 1, 0
      %v1485 = vsel %vm1449, 1, 0
      %v1486 = vsel %vm1450, 1, 0
      %v1487 = vsel %vm1451, 1, 0
      %v1488 = vsel %vm1452, 1, 0
      %v1489 = vsel %vm1453, 1, 0
      %v1490 = vsel %vm1454, 1, 0
      %v1491 = vsel %vm1455, 1, 0
      %v1492 = vsel %vm1456, 1, 0
      %v1493 = vsel %vm1457, 1, 0
      %v1494 = vsel %vm1458, 1, 0
      %v1495 = vsel %vm1459, 1, 0
      %v1496 = vsel %vm1460, 1, 0
      %v1497 = vsel %vm1461, 1, 0
      %v1498 = vsel %vm1462, 1, 0
      %v1499 = vsel %vm1463, 1, 0
      %v1500 = vsel %vm1464, 1, 0
      %v1501 = vsel %vm1465, 1, 0
      %v1502 = vcvt.s32.f32 %v1466
      %v1503 = vcvt.s32.f32 %v1467
      %v1504 = vcvt.s32.f32 %v1468
      %v1505 = vcvt.s32.f32 %v1469
      %v1506 = vcvt.s32.f32 %v1470
      %v1507 = vcvt.s32.f32 %v1471
      %v1508 = vcvt.s32.f32 %v1472
      %v1509 = vcvt.s32.f32 %v1473
      %v1510 = vcvt.s32.f32 %v1474
      %v1511 = vcvt.s32.f32 %v1475
      %v1512 = vcvt.s32.f32 %v1476
      %v1513 = vcvt.s32.f32 %v1477
      %v1514 = vcvt.s32.f32 %v1478
      %v1515 = vcvt.s32.f32 %v1479
      %v1516 = vcvt.s32.f32 %v1480
      %v1517 = vcvt.s32.f32 %v1481
      %v1518 = vcvt.s32.f32 %v1482
      %v1519 = vcvt.s32.f32 %v1483
      %v1520 = vcvt.s32.f32 %v1484
      %v1521 = vcvt.s32.f32 %v1485
      %v1522 = vcvt.s32.f32 %v1486
      %v1523 = vcvt.s32.f32 %v1487
      %v1524 = vcvt.s32.f32 %v1488
      %v1525 = vcvt.s32.f32 %v1489
      %v1526 = vcvt.s32.f32 %v1490
      %v1527 = vcvt.s32.f32 %v1491
      %v1528 = vcvt.s32.f32 %v1492
      %v1529 = vcvt.s32.f32 %v1493
      %v1530 = vcvt.s32.f32 %v1494
      %v1531 = vcvt.s32.f32 %v1495
      %v1532 = vcvt.s32.f32 %v1496
      %v1533 = vcvt.s32.f32 %v1497
      %v1534 = vcvt.s32.f32 %v1498
      %v1535 = vcvt.s32.f32 %v1499
      %v1536 = vcvt.s32.f32 %v1500
      %v1537 = vcvt.s32.f32 %v1501
      %v1538 = vmul.f32 %v495, %v1502
      %v1539 = vmul.f32 %v498, %v1503
      %v1540 = vmul.f32 %v503, %v1504
      %v1541 = vmul.f32 %v506, %v1505
      %v1542 = vmul.f32 %v511, %v1506
      %v1543 = vmul.f32 %v514, %v1507
      %v1544 = vmul.f32 %v519, %v1508
      %v1545 = vmul.f32 %v522, %v1509
      %v1546 = vmul.f32 %v527, %v1510
      %v1547 = vmul.f32 %v530, %v1511
      %v1548 = vmul.f32 %v535, %v1512
      %v1549 = vmul.f32 %v538, %v1513
      %v1550 = vmul.f32 %v543, %v1514
      %v1551 = vmul.f32 %v546, %v1515
      %v1552 = vmul.f32 %v551, %v1516
      %v1553 = vmul.f32 %v554, %v1517
      %v1554 = vmul.f32 %v559, %v1518
      %v1555 = vmul.f32 %v562, %v1519
      %v1556 = vmul.f32 %v567, %v1520
      %v1557 = vmul.f32 %v570, %v1521
      %v1558 = vmul.f32 %v575, %v1522
      %v1559 = vmul.f32 %v578, %v1523
      %v1560 = vmul.f32 %v583, %v1524
      %v1561 = vmul.f32 %v586, %v1525
      %v1562 = vmul.f32 %v591, %v1526
      %v1563 = vmul.f32 %v594, %v1527
      %v1564 = vmul.f32 %v599, %v1528
      %v1565 = vmul.f32 %v602, %v1529
      %v1566 = vmul.f32 %v607, %v1530
      %v1567 = vmul.f32 %v610, %v1531
      %v1568 = vmul.f32 %v615, %v1532
      %v1569 = vmul.f32 %v618, %v1533
      %v1570 = vmul.f32 %v623, %v1534
      %v1571 = vmul.f32 %v626, %v1535
      %v1572 = vmul.f32 %v631, %v1536
      %v1573 = vmul.f32 %v634, %v1537
      %p1574 = scmp.eq.s32.totalorder %s21, 0
      // Predicated region
      $region29: #{conv_block_forward.4} parent=27 // pred_check
        %p1575 = pneg %p1574
      $region30: #{conv_block_forward.4} parent=27 // pred_check_branch
        %1577 = sbr.rel (%p1575) target = $region32
      $region31: #{conv_block_forward.4} parent=27 // pred_region
        %1578 = vst [vmem:[%s247] sm:$0x1] 0.0
        %1579 = vst [vmem:[%s250] sm:$0x1] 0.0
      $region32: #{conv_block_forward.4} parent=27 // pred_fallthru
        _
      %v1580 = vld [vmem:[%s247] sm:$0x1]
      %v1581 = vadd.f32 %v1538, %v1539
      %v1582 = vadd.f32 %v1581, %v1540
      %v1583 = vadd.f32 %v1582, %v1541
      %v1584 = vadd.f32 %v1583, %v1542
      %v1585 = vadd.f32 %v1584, %v1543
      %v1586 = vadd.f32 %v1585, %v1544
      %v1587 = vadd.f32 %v1586, %v1545
      %v1588 = vadd.f32 %v1587, %v1546
      %v1589 = vadd.f32 %v1588, %v1547
      %v1590 = vadd.f32 %v1589, %v1548
      %v1591 = vadd.f32 %v1590, %v1549
      %v1592 = vadd.f32 %v1591, %v1550
      %v1593 = vadd.f32 %v1592, %v1551
      %v1594 = vadd.f32 %v1593, %v1552
      %v1595 = vadd.f32 %v1594, %v1553
      %v1596 = vadd.f32 %v1595, %v1554
      %v1597 = vadd.f32 %v1596, %v1555
      %v1598 = vadd.f32 %v1597, %v1556
      %v1599 = vadd.f32 %v1598, %v1557
      %v1600 = vadd.f32 %v1599, %v1558
      %v1601 = vadd.f32 %v1600, %v1559
      %v1602 = vadd.f32 %v1601, %v1560
      %v1603 = vadd.f32 %v1602, %v1561
      %v1604 = vadd.f32 %v1603, %v1562
      %v1605 = vadd.f32 %v1604, %v1563
      %v1606 = vadd.f32 %v1605, %v1564
      %v1607 = vadd.f32 %v1606, %v1565
      %v1608 = vadd.f32 %v1607, %v1566
      %v1609 = vadd.f32 %v1608, %v1567
      %v1610 = vadd.f32 %v1609, %v1568
      %v1611 = vadd.f32 %v1610, %v1569
      %v1612 = vadd.f32 %v1611, %v1570
      %v1613 = vadd.f32 %v1612, %v1571
      %v1614 = vadd.f32 %v1613, %v1572
      %v1615 = vadd.f32 %v1614, %v1573
      %v1616 = vrot.slane %v1615, 4
      %v1617 = vadd.f32 %v1615, %v1616
      %v1618 = vrot.slane %v1617, 2
      %v1619 = vadd.f32 %v1617, %v1618
      %v1620 = vrot.slane %v1619, 1
      %v1621 = vadd.f32 %v1619, %v1620
      %v1622 = vadd.f32 %v1580, %v1621
      %1623 = vst [vmem:[%s247] sm:$0x1] %v1622
      %v1624 = vld [vmem:[%s250] sm:$0x1]
      %v1625 = vmul.f32 %v1538, %v495
      %v1626 = vmul.f32 %v1539, %v498
      %v1627 = vmul.f32 %v1540, %v503
      %v1628 = vmul.f32 %v1541, %v506
      %v1629 = vmul.f32 %v1542, %v511
      %v1630 = vmul.f32 %v1543, %v514
      %v1631 = vmul.f32 %v1544, %v519
      %v1632 = vmul.f32 %v1545, %v522
      %v1633 = vmul.f32 %v1546, %v527
      %v1634 = vmul.f32 %v1547, %v530
      %v1635 = vmul.f32 %v1548, %v535
      %v1636 = vmul.f32 %v1549, %v538
      %v1637 = vmul.f32 %v1550, %v543
      %v1638 = vmul.f32 %v1551, %v546
      %v1639 = vmul.f32 %v1552, %v551
      %v1640 = vmul.f32 %v1553, %v554
      %v1641 = vmul.f32 %v1554, %v559
      %v1642 = vmul.f32 %v1555, %v562
      %v1643 = vmul.f32 %v1556, %v567
      %v1644 = vmul.f32 %v1557, %v570
      %v1645 = vmul.f32 %v1558, %v575
      %v1646 = vmul.f32 %v1559, %v578
      %v1647 = vmul.f32 %v1560, %v583
      %v1648 = vmul.f32 %v1561, %v586
      %v1649 = vmul.f32 %v1562, %v591
      %v1650 = vmul.f32 %v1563, %v594
      %v1651 = vmul.f32 %v1564, %v599
      %v1652 = vmul.f32 %v1565, %v602
      %v1653 = vmul.f32 %v1566, %v607
      %v1654 = vmul.f32 %v1567, %v610
      %v1655 = vmul.f32 %v1568, %v615
      %v1656 = vmul.f32 %v1569, %v618
      %v1657 = vmul.f32 %v1570, %v623
      %v1658 = vmul.f32 %v1571, %v626
      %v1659 = vmul.f32 %v1572, %v631
      %v1660 = vmul.f32 %v1573, %v634
      %v1661 = vadd.f32 %v1625, %v1626
      %v1662 = vadd.f32 %v1661, %v1627
      %v1663 = vadd.f32 %v1662, %v1628
      %v1664 = vadd.f32 %v1663, %v1629
      %v1665 = vadd.f32 %v1664, %v1630
      %v1666 = vadd.f32 %v1665, %v1631
      %v1667 = vadd.f32 %v1666, %v1632
      %v1668 = vadd.f32 %v1667, %v1633
      %v1669 = vadd.f32 %v1668, %v1634
      %v1670 = vadd.f32 %v1669, %v1635
      %v1671 = vadd.f32 %v1670, %v1636
      %v1672 = vadd.f32 %v1671, %v1637
      %v1673 = vadd.f32 %v1672, %v1638
      %v1674 = vadd.f32 %v1673, %v1639
      %v1675 = vadd.f32 %v1674, %v1640
      %v1676 = vadd.f32 %v1675, %v1641
      %v1677 = vadd.f32 %v1676, %v1642
      %v1678 = vadd.f32 %v1677, %v1643
      %v1679 = vadd.f32 %v1678, %v1644
      %v1680 = vadd.f32 %v1679, %v1645
      %v1681 = vadd.f32 %v1680, %v1646
      %v1682 = vadd.f32 %v1681, %v1647
      %v1683 = vadd.f32 %v1682, %v1648
      %v1684 = vadd.f32 %v1683, %v1649
      %v1685 = vadd.f32 %v1684, %v1650
      %v1686 = vadd.f32 %v1685, %v1651
      %v1687 = vadd.f32 %v1686, %v1652
      %v1688 = vadd.f32 %v1687, %v1653
      %v1689 = vadd.f32 %v1688, %v1654
      %v1690 = vadd.f32 %v1689, %v1655
      %v1691 = vadd.f32 %v1690, %v1656
      %v1692 = vadd.f32 %v1691, %v1657
      %v1693 = vadd.f32 %v1692, %v1658
      %v1694 = vadd.f32 %v1693, %v1659
      %v1695 = vadd.f32 %v1694, %v1660
      %v1696 = vrot.slane %v1695, 4
      %v1697 = vadd.f32 %v1695, %v1696
      %v1698 = vrot.slane %v1697, 2
      %v1699 = vadd.f32 %v1697, %v1698
      %v1700 = vrot.slane %v1699, 1
      %v1701 = vadd.f32 %v1699, %v1700
      %v1702 = vadd.f32 %v1624, %v1701
      %1703 = vst [vmem:[%s250] sm:$0x1] %v1702
      %p1704 = scmp.lt.s32.totalorder %s20, 1
      %s1705 = scalar_select %p1704, %s20, 1
      %p1706 = scmp.lt.s32.totalorder %s21, 0
      %s1707 = scalar_select %p1706, %s21, 0
      %s1708 = smul.addr %s1707, 36
      %s1709 = smul.addr %s1705, 36
      %s1710 = sadd.s32 %s1708, %s1709
      %s1711 = smul.addr %s1710, 4
      %s1712 = scalar_lea.vmem %s2, %s1711
      %p1713 = scmp.lt.s32.totalorder %s20, 1
      %s1714 = scalar_select %p1713, %s20, 1
      %s1715 = scalar_lea.vmem %s3, %s1714
      %p1716 = scmp.lt.s32.totalorder %s20, 1
      %s1717 = scalar_select %p1716, %s20, 1
      %s1718 = scalar_lea.vmem %s4, %s1717
      // Predicated region
      $region33: #{conv_block_forward.4} parent=27 // pred_check
        %p1719 = pneg %p97
      $region34: #{conv_block_forward.4} parent=27 // pred_check_branch
        %1721 = sbr.rel (%p1719) target = $region36
      $region35: #{conv_block_forward.4} parent=27 // pred_region
        _
      $region36: #{conv_block_forward.4} parent=27 // pred_fallthru
        _
      // Predicated region
      $region37: #{conv_block_forward.4} parent=27 // pred_check
        %p1722 = pneg %p123
      $region38: #{conv_block_forward.4} parent=27 // pred_check_branch
        %1724 = sbr.rel (%p1722) target = $region40
      $region39: #{conv_block_forward.4} parent=27 // pred_region
        _
      $region40: #{conv_block_forward.4} parent=27 // pred_fallthru
        _
      // Predicated region
      $region41: #{conv_block_forward.4} parent=27 // pred_check
        %p1725 = pneg %p149
      $region42: #{conv_block_forward.4} parent=27 // pred_check_branch
        %1727 = sbr.rel (%p1725) target = $region44
      $region43: #{conv_block_forward.4} parent=27 // pred_region
        _
      $region44: #{conv_block_forward.4} parent=27 // pred_fallthru
        _
    $region28: #{conv_block_forward.4} parent=5 // pred_fallthru
      _
    %p1728 = scmp.le.s32.totalorder 2, %s11
    // Predicated region
    $region45: #{conv_block_forward.4} parent=5 // pred_check
      %p1729 = pneg %p1728
    $region46: #{conv_block_forward.4} parent=5 // pred_check_branch
      %1731 = sbr.rel (%p1729) target = $region48
    $region47: #{conv_block_forward.4} parent=5 // pred_region
      %s1732 = ssub.s32 %s11, 2
      // Predicated region
      $region49: #{conv_block_forward.4} parent=47 // pred_check
        %p1733 = pneg %p103
      $region50: #{conv_block_forward.4} parent=47 // pred_check_branch
        %1735 = sbr.rel (%p1733) target = $region52
      $region51: #{conv_block_forward.4} parent=47 // pred_region
        %p1736 = scmp.lt.s32.totalorder %s22, 1
        %s1737 = scalar_select %p1736, %s22, 1
        %p1738 = scmp.lt.s32.totalorder %s23, 0
        %s1739 = scalar_select %p1738, %s23, 0
        %s1740 = smul.addr %s1739, 36
        %s1741 = smul.addr %s1737, 36
        %s1742 = sadd.s32 %s1740, %s1741
        %s1743 = smul.addr %s1742, 4
        %s1744 = scalar_lea.vmem %s2, %s1743
      $region52: #{conv_block_forward.4} parent=47 // pred_fallthru
        _
      // Predicated region
      $region53: #{conv_block_forward.4} parent=47 // pred_check
        %p1745 = pneg %p129
      $region54: #{conv_block_forward.4} parent=47 // pred_check_branch
        %1747 = sbr.rel (%p1745) target = $region56
      $region55: #{conv_block_forward.4} parent=47 // pred_region
        %p1748 = scmp.lt.s32.totalorder %s22, 1
        %s1749 = scalar_select %p1748, %s22, 1
        %s1750 = scalar_lea.vmem %s3, %s1749
      $region56: #{conv_block_forward.4} parent=47 // pred_fallthru
        _
      // Predicated region
      $region57: #{conv_block_forward.4} parent=47 // pred_check
        %p1751 = pneg %p155
      $region58: #{conv_block_forward.4} parent=47 // pred_check_branch
        %1753 = sbr.rel (%p1751) target = $region60
      $region59: #{conv_block_forward.4} parent=47 // pred_region
        %p1754 = scmp.lt.s32.totalorder %s22, 1
        %s1755 = scalar_select %p1754, %s22, 1
        %s1756 = scalar_lea.vmem %s4, %s1755
      $region60: #{conv_block_forward.4} parent=47 // pred_fallthru
        _
    $region48: #{conv_block_forward.4} parent=5 // pred_fallthru
      _
  $region6: #{conv_block_forward.4} parent=0 // loop_footer
    %s15 = sadd.s32 1, %s11
  $region7: #{conv_block_forward.4} parent=0 // loop_footer_branch
    %10 = sbr.rel target = $region3
  $region8: #{conv_block_forward.4} parent=0 // loop_exit
    _

// kernel: conv_block_forward.7
$region0: #{conv_block_forward.7}
  #allocation0 [shape = 'u32[]', space=smem, size = 0x4, offset = 0x4, fixed_abs, tag = 'smem constant byte address 0x4 - core index']
  #allocation1 [shape = 'u32[144,128]{1,0:T(1,128)}', space=vmem, size = 0x12000, scoped, tag = 'internal scratch']
  %s0 = inlined_call_operand.vmem [shape: f32[2,1,288,128], index: 0, kind: input, shape index: {}, may-alias: {0,3}]
  %s1 = inlined_call_operand.vmem [shape: f32[1,1,1,128], index: 1, kind: input, shape index: {}]
  %s2 = inlined_call_operand.vmem [shape: f32[1,1,1,128], index: 2, kind: input, shape index: {}]
  %s3 = inlined_call_operand.vmem [shape: f32[2,1,288,128], index: 3, kind: output, shape index: {}, may-alias: {0,3}]
  %s4 = sld [smem:[#allocation0]]
  $region45: #{conv_block_forward.7} parent=0
    _
  %s6 = ssub.s32 1, %s4
  %s7 = scalar_select 0, %s6, %s4
  loop: start=0, step=1, limit=4
  $region2: #{conv_block_forward.7} parent=0 // loop_pre_header
    _
  $region3: #{conv_block_forward.7} parent=0 // loop_header
    %s9 = sphi 0, %s13
    %p10 = scmp.ge.s32.totalorder %s9, 4
    %s16 = sphi 0, %s28
    %s17 = sphi 0, %s24
    %s18 = sphi 0, %s16
    %s19 = sphi 0, %s17
    %s20 = sphi 0, %s18
    %s21 = sphi 0, %s19
    %s33 = sphi 0, %s35
    %s36 = sphi 0, %s33
    %s37 = sphi 0, %s36
    %s53 = sphi 0, %s37
    %s57 = sphi 0, %s57
    %s59 = sphi 0, %s57
    %s60 = sphi 0, %s59
    %s74 = sphi 0, %s60
    %s78 = sphi 0, %s78
    %s80 = sphi 0, %s78
    %s81 = sphi 0, %s80
    %s95 = sphi 0, %s81
    %s103 = sphi 0, %s105
    %s106 = sphi 0, %s103
    %s107 = sphi 0, %s106
    %s123 = sphi 0, %s107
  $region4: #{conv_block_forward.7} parent=0 // loop_header_branch
    %12 = sbr.rel (%p10) target = $region8
  $region5: #{conv_block_forward.7} parent=0 // loop_body
    %s14 = ssub.s32 %s9, 1
    %s15 = ssub.s32 %s9, 2
    %s22 = sadd.s32 1, %s17
    %p23 = scmp.ge.s32.totalorder %s22, 1
    %s24 = scalar_select %p23, 0, %s22
    %s25 = sadd.s32 1, %s16
    %s26 = scalar_select %p23, %s25, %s16
    %p27 = scmp.ge.s32.totalorder %s26, 2
    %s28 = scalar_select %p27, 0, %s26
    %s29 = ssub.s32 %s16, %s28
    %s30 = ssub.s32 %s17, %s24
    %s31 = sor.u32 %s29, %s30
    %p32 = scmp.eq.s32.totalorder %s31, 0
    %s34 = sadd.s32 %s33, 1
    %s35 = scalar_select %p32, %s33, %s34
    %p38 = pneg %p32
    %p39 = scmp.eq.s32.totalorder %s9, 1
    %p40 = por %p38, %p39
    %p41 = scmp.ne.s32.totalorder %s33, %s36
    %p42 = scmp.eq.s32.totalorder %s9, 0
    %p43 = por %p41, %p42
    %p44 = scmp.ne.s32.totalorder %s33, %s36
    %p45 = scmp.eq.s32.totalorder %s14, 1
    %p46 = por %p44, %p45
    %p47 = scmp.ne.s32.totalorder %s36, %s37
    %p48 = scmp.eq.s32.totalorder %s14, 0
    %p49 = por %p47, %p48
    %p50 = scmp.ne.s32.totalorder %s36, %s37
    %p51 = scmp.eq.s32.totalorder %s15, 1
    %p52 = por %p50, %p51
    %p54 = scmp.ne.s32.totalorder %s37, %s53
    %p55 = scmp.eq.s32.totalorder %s15, 0
    %p56 = por %p54, %p55
    %s58 = sadd.s32 %s57, 1
    %p61 = scmp.eq.s32.totalorder %s9, 1
    %p62 = scmp.ne.s32.totalorder %s57, %s59
    %p63 = scmp.eq.s32.totalorder %s9, 0
    %p64 = por %p62, %p63
    %p65 = scmp.ne.s32.totalorder %s57, %s59
    %p66 = scmp.eq.s32.totalorder %s14, 1
    %p67 = por %p65, %p66
    %p68 = scmp.ne.s32.totalorder %s59, %s60
    %p69 = scmp.eq.s32.totalorder %s14, 0
    %p70 = por %p68, %p69
    %p71 = scmp.ne.s32.totalorder %s59, %s60
    %p72 = scmp.eq.s32.totalorder %s15, 1
    %p73 = por %p71, %p72
    %p75 = scmp.ne.s32.totalorder %s60, %s74
    %p76 = scmp.eq.s32.totalorder %s15, 0
    %p77 = por %p75, %p76
    %s79 = sadd.s32 %s78, 1
    %p82 = scmp.eq.s32.totalorder %s9, 1
    %p83 = scmp.ne.s32.totalorder %s78, %s80
    %p84 = scmp.eq.s32.totalorder %s9, 0
    %p85 = por %p83, %p84
    %p86 = scmp.ne.s32.totalorder %s78, %s80
    %p87 = scmp.eq.s32.totalorder %s14, 1
    %p88 = por %p86, %p87
    %p89 = scmp.ne.s32.totalorder %s80, %s81
    %p90 = scmp.eq.s32.totalorder %s14, 0
    %p91 = por %p89, %p90
    %p92 = scmp.ne.s32.totalorder %s80, %s81
    %p93 = scmp.eq.s32.totalorder %s15, 1
    %p94 = por %p92, %p93
    %p96 = scmp.ne.s32.totalorder %s81, %s95
    %p97 = scmp.eq.s32.totalorder %s15, 0
    %p98 = por %p96, %p97
    %s99 = ssub.s32 %s16, %s28
    %s100 = ssub.s32 %s17, %s24
    %s101 = sor.u32 %s99, %s100
    %p102 = scmp.eq.s32.totalorder %s101, 0
    %s104 = sadd.s32 %s103, 1
    %s105 = scalar_select %p102, %s103, %s104
    %p108 = pneg %p102
    %p109 = scmp.eq.s32.totalorder %s9, 1
    %p110 = por %p108, %p109
    %p111 = scmp.ne.s32.totalorder %s103, %s106
    %p112 = scmp.eq.s32.totalorder %s9, 0
    %p113 = por %p111, %p112
    %p114 = scmp.ne.s32.totalorder %s103, %s106
    %p115 = scmp.eq.s32.totalorder %s14, 1
    %p116 = por %p114, %p115
    %p117 = scmp.ne.s32.totalorder %s106, %s107
    %p118 = scmp.eq.s32.totalorder %s14, 0
    %p119 = por %p117, %p118
    %p120 = scmp.ne.s32.totalorder %s106, %s107
    %p121 = scmp.eq.s32.totalorder %s15, 1
    %p122 = por %p120, %p121
    %p124 = scmp.ne.s32.totalorder %s107, %s123
    %p125 = scmp.eq.s32.totalorder %s15, 0
    %p126 = por %p124, %p125
    %p127 = scmp.le.s32.totalorder 1, %s9
    %p128 = scmp.lt.s32.totalorder %s9, 3
    %p129 = pnand %p127, %p128
    %p130 = pneg %p129
    // Predicated region
    $region9: #{conv_block_forward.7} parent=5 // pred_check
      _
    $region10: #{conv_block_forward.7} parent=5 // pred_check_branch
      %132 = sbr.rel (%p129) target = $region12
    $region11: #{conv_block_forward.7} parent=5 // pred_region
      %s133 = ssub.s32 %s9, 1
      // Predicated region
      $region13: #{conv_block_forward.7} parent=11 // pred_check
        %p134 = pneg %p70
      $region14: #{conv_block_forward.7} parent=11 // pred_check_branch
        %136 = sbr.rel (%p134) target = $region16
      $region15: #{conv_block_forward.7} parent=11 // pred_region
        _
      $region16: #{conv_block_forward.7} parent=11 // pred_fallthru
        _
      // Predicated region
      $region17: #{conv_block_forward.7} parent=11 // pred_check
        %p137 = pneg %p91
      $region18: #{conv_block_forward.7} parent=11 // pred_check_branch
        %139 = sbr.rel (%p137) target = $region20
      $region19: #{conv_block_forward.7} parent=11 // pred_region
        _
      $region20: #{conv_block_forward.7} parent=11 // pred_fallthru
        _
    $region12: #{conv_block_forward.7} parent=5 // pred_fallthru
      _
    %p140 = scmp.lt.s32.totalorder %s9, 2
    // Predicated region
    $region21: #{conv_block_forward.7} parent=5 // pred_check
      %p141 = pneg %p140
    $region22: #{conv_block_forward.7} parent=5 // pred_check_branch
      %143 = sbr.rel (%p141) target = $region24
    $region23: #{conv_block_forward.7} parent=5 // pred_region
      // Predicated region
      $region25: #{conv_block_forward.7} parent=23 // pred_check
        %p144 = pneg %p43
      $region26: #{conv_block_forward.7} parent=23 // pred_check_branch
        %146 = sbr.rel (%p144) target = $region28
      $region27: #{conv_block_forward.7} parent=23 // pred_region
        %p147 = scmp.lt.s32.totalorder %s16, 1
        %s148 = scalar_select %p147, %s16, 1
        %p149 = scmp.lt.s32.totalorder %s17, 0
        %s150 = scalar_select %p149, %s17, 0
        %s151 = smul.addr %s150, 36
        %s152 = smul.addr %s148, 36
        %s153 = sadd.s32 %s151, %s152
        %s154 = smul.addr %s153, 8
        %s155 = scalar_lea.vmem %s0, %s154
      $region28: #{conv_block_forward.7} parent=23 // pred_fallthru
        _
    $region24: #{conv_block_forward.7} parent=5 // pred_fallthru
      _
    %p156 = scmp.le.s32.totalorder 1, %s9
    %p157 = scmp.lt.s32.totalorder %s9, 3
    %p158 = pnand %p156, %p157
    %p159 = pneg %p158
    // Predicated region
    $region29: #{conv_block_forward.7} parent=5 // pred_check
      _
    $region30: #{conv_block_forward.7} parent=5 // pred_check_branch
      %161 = sbr.rel (%p158) target = $region32
    $region31: #{conv_block_forward.7} parent=5 // pred_region
      %s162 = ssub.s32 %s9, 1
      %p163 = scmp.lt.s32.totalorder %s18, 1
      %s164 = scalar_select %p163, %s18, 1
      %p165 = scmp.lt.s32.totalorder %s19, 0
      %s166 = scalar_select %p165, %s19, 0
      %s167 = smul.addr %s166, 36
      %s168 = smul.addr %s164, 36
      %s169 = sadd.s32 %s167, %s168
      %s170 = smul.addr %s169, 8
      %s171 = scalar_lea.vmem %s0, %s170
      %p172 = pneg %p49
      %p173 = pneg %p46
      %p174 = pneg %p70
      %p175 = pneg %p67
      %p176 = pneg %p91
      %p177 = pneg %p88
      %p178 = pneg %p119
      %p179 = pneg %p116
      %p180 = scmp.lt.s32.totalorder %s18, 1
      %s181 = scalar_select %p180, %s18, 1
      %p182 = scmp.lt.s32.totalorder %s19, 0
      %s183 = scalar_select %p182, %s19, 0
      %s184 = smul.addr %s183, 36
      %s185 = smul.addr %s181, 36
      %s186 = sadd.s32 %s184, %s185
      %s187 = smul.addr %s186, 8
      %s188 = scalar_lea.vmem %s3, %s187
      %p189 = scmp.lt.s32.totalorder %s18, 1
      %s190 = scalar_select %p189, %s18, 1
      %p191 = scmp.lt.s32.totalorder %s19, 0
      %s192 = scalar_select %p191, %s19, 0
      %s193 = smul.addr %s192, 36
      %s194 = smul.addr %s190, 36
      %s195 = sadd.s32 %s193, %s194
      %s196 = smul.addr %s195, 8
      %s197 = scalar_lea.vmem %s0, %s196
      %p198 = scmp.lt.s32.totalorder %s18, 1
      %s199 = scalar_select %p198, %s18, 1
      %p200 = scmp.lt.s32.totalorder %s19, 0
      %s201 = scalar_select %p200, %s19, 0
      %s202 = smul.addr %s201, 36
      %s203 = smul.addr %s199, 36
      %s204 = sadd.s32 %s202, %s203
      %s205 = smul.addr %s204, 8
      %s206 = scalar_lea.vmem %s3, %s205
      %v207 = vld [vmem:[%s197] sm:$0xff]
      %v208 = vld [vmem:[%s197 + $0x8] sm:$0xff]
      %v209 = vld [vmem:[%s197 + $0x10] sm:$0xff]
      %v210 = vld [vmem:[%s197 + $0x18] sm:$0xff]
      %v211 = vld [vmem:[%s197 + $0x20] sm:$0xff]
      %v212 = vld [vmem:[%s197 + $0x28] sm:$0xff]
      %v213 = vld [vmem:[%s197 + $0x30] sm:$0xff]
      %v214 = vld [vmem:[%s197 + $0x38] sm:$0xff]
      %v215 = vld [vmem:[%s197 + $0x40] sm:$0xff]
      %v216 = vld [vmem:[%s197 + $0x48] sm:$0xff]
      %v217 = vld [vmem:[%s197 + $0x50] sm:$0xff]
      %v218 = vld [vmem:[%s197 + $0x58] sm:$0xff]
      %v219 = vld [vmem:[%s197 + $0x60] sm:$0xff]
      %v220 = vld [vmem:[%s197 + $0x68] sm:$0xff]
      %v221 = vld [vmem:[%s197 + $0x70] sm:$0xff]
      %v222 = vld [vmem:[%s197 + $0x78] sm:$0xff]
      %v223 = vld [vmem:[%s197 + $0x80] sm:$0xff]
      %v224 = vld [vmem:[%s197 + $0x88] sm:$0xff]
      %v225 = vld [vmem:[%s197 + $0x90] sm:$0xff]
      %v226 = vld [vmem:[%s197 + $0x98] sm:$0xff]
      %v227 = vld [vmem:[%s197 + $0xa0] sm:$0xff]
      %v228 = vld [vmem:[%s197 + $0xa8] sm:$0xff]
      %v229 = vld [vmem:[%s197 + $0xb0] sm:$0xff]
      %v230 = vld [vmem:[%s197 + $0xb8] sm:$0xff]
      %v231 = vld [vmem:[%s197 + $0xc0] sm:$0xff]
      %v232 = vld [vmem:[%s197 + $0xc8] sm:$0xff]
      %v233 = vld [vmem:[%s197 + $0xd0] sm:$0xff]
      %v234 = vld [vmem:[%s197 + $0xd8] sm:$0xff]
      %v235 = vld [vmem:[%s197 + $0xe0] sm:$0xff]
      %v236 = vld [vmem:[%s197 + $0xe8] sm:$0xff]
      %v237 = vld [vmem:[%s197 + $0xf0] sm:$0xff]
      %v238 = vld [vmem:[%s197 + $0xf8] sm:$0xff]
      %v239 = vld [vmem:[%s197 + $0x100] sm:$0xff]
      %v240 = vld [vmem:[%s197 + $0x108] sm:$0xff]
      %v241 = vld [vmem:[%s197 + $0x110] sm:$0xff]
      %v242 = vld [vmem:[%s197 + $0x118] sm:$0xff]
      %v243 = vld [vmem:[%s1] sm:$0x1]
      %v245 = vlaneseq
      %v246 = vshrl.u32 %v245, 7
      %v247 = vsub.s32 0, %v246
      %v248 = vrot.slane %v243, %v247
      %v250 = vmul.f32 %v207, %v248
      %v251 = vmul.f32 %v208, %v248
      %v252 = vmul.f32 %v209, %v248
      %v253 = vmul.f32 %v210, %v248
      %v254 = vmul.f32 %v211, %v248
      %v255 = vmul.f32 %v212, %v248
      %v256 = vmul.f32 %v213, %v248
      %v257 = vmul.f32 %v214, %v248
      %v258 = vmul.f32 %v215, %v248
      %v259 = vmul.f32 %v216, %v248
      %v260 = vmul.f32 %v217, %v248
      %v261 = vmul.f32 %v218, %v248
      %v262 = vmul.f32 %v219, %v248
      %v263 = vmul.f32 %v220, %v248
      %v264 = vmul.f32 %v221, %v248
      %v265 = vmul.f32 %v222, %v248
      %v266 = vmul.f32 %v223, %v248
      %v267 = vmul.f32 %v224, %v248
      %v268 = vmul.f32 %v225, %v248
      %v269 = vmul.f32 %v226, %v248
      %v270 = vmul.f32 %v227, %v248
      %v271 = vmul.f32 %v228, %v248
      %v272 = vmul.f32 %v229, %v248
      %v273 = vmul.f32 %v230, %v248
      %v274 = vmul.f32 %v231, %v248
      %v275 = vmul.f32 %v232, %v248
      %v276 = vmul.f32 %v233, %v248
      %v277 = vmul.f32 %v234, %v248
      %v278 = vmul.f32 %v235, %v248
      %v279 = vmul.f32 %v236, %v248
      %v280 = vmul.f32 %v237, %v248
      %v281 = vmul.f32 %v238, %v248
      %v282 = vmul.f32 %v239, %v248
      %v283 = vmul.f32 %v240, %v248
      %v284 = vmul.f32 %v241, %v248
      %v285 = vmul.f32 %v242, %v248
      %v286 = vld [vmem:[%s2] sm:$0x1]
      %v288 = vlaneseq
      %v289 = vshrl.u32 %v288, 7
      %v290 = vsub.s32 0, %v289
      %v291 = vrot.slane %v286, %v290
      %v293 = vadd.f32 %v250, %v291
      %v294 = vadd.f32 %v251, %v291
      %v295 = vadd.f32 %v252, %v291
      %v296 = vadd.f32 %v253, %v291
      %v297 = vadd.f32 %v254, %v291
      %v298 = vadd.f32 %v255, %v291
      %v299 = vadd.f32 %v256, %v291
      %v300 = vadd.f32 %v257, %v291
      %v301 = vadd.f32 %v258, %v291
      %v302 = vadd.f32 %v259, %v291
      %v303 = vadd.f32 %v260, %v291
      %v304 = vadd.f32 %v261, %v291
      %v305 = vadd.f32 %v262, %v291
      %v306 = vadd.f32 %v263, %v291
      %v307 = vadd.f32 %v264, %v291
      %v308 = vadd.f32 %v265, %v291
      %v309 = vadd.f32 %v266, %v291
      %v310 = vadd.f32 %v267, %v291
      %v311 = vadd.f32 %v268, %v291
      %v312 = vadd.f32 %v269, %v291
      %v313 = vadd.f32 %v270, %v291
      %v314 = vadd.f32 %v271, %v291
      %v315 = vadd.f32 %v272, %v291
      %v316 = vadd.f32 %v273, %v291
      %v317 = vadd.f32 %v274, %v291
      %v318 = vadd.f32 %v275, %v291
      %v319 = vadd.f32 %v276, %v291
      %v320 = vadd.f32 %v277, %v291
      %v321 = vadd.f32 %v278, %v291
      %v322 = vadd.f32 %v279, %v291
      %v323 = vadd.f32 %v280, %v291
      %v324 = vadd.f32 %v281, %v291
      %v325 = vadd.f32 %v282, %v291
      %v326 = vadd.f32 %v283, %v291
      %v327 = vadd.f32 %v284, %v291
      %v328 = vadd.f32 %v285, %v291
      %v329 = vmax.f32 %v293, 0.0
      %v330 = vmax.f32 %v294, 0.0
      %v331 = vmax.f32 %v295, 0.0
      %v332 = vmax.f32 %v296, 0.0
      %v333 = vmax.f32 %v297, 0.0
      %v334 = vmax.f32 %v298, 0.0
      %v335 = vmax.f32 %v299, 0.0
      %v336 = vmax.f32 %v300, 0.0
      %v337 = vmax.f32 %v301, 0.0
      %v338 = vmax.f32 %v302, 0.0
      %v339 = vmax.f32 %v303, 0.0
      %v340 = vmax.f32 %v304, 0.0
      %v341 = vmax.f32 %v305, 0.0
      %v342 = vmax.f32 %v306, 0.0
      %v343 = vmax.f32 %v307, 0.0
      %v344 = vmax.f32 %v308, 0.0
      %v345 = vmax.f32 %v309, 0.0
      %v346 = vmax.f32 %v310, 0.0
      %v347 = vmax.f32 %v311, 0.0
      %v348 = vmax.f32 %v312, 0.0
      %v349 = vmax.f32 %v313, 0.0
      %v350 = vmax.f32 %v314, 0.0
      %v351 = vmax.f32 %v315, 0.0
      %v352 = vmax.f32 %v316, 0.0
      %v353 = vmax.f32 %v317, 0.0
      %v354 = vmax.f32 %v318, 0.0
      %v355 = vmax.f32 %v319, 0.0
      %v356 = vmax.f32 %v320, 0.0
      %v357 = vmax.f32 %v321, 0.0
      %v358 = vmax.f32 %v322, 0.0
      %v359 = vmax.f32 %v323, 0.0
      %v360 = vmax.f32 %v324, 0.0
      %v361 = vmax.f32 %v325, 0.0
      %v362 = vmax.f32 %v326, 0.0
      %v363 = vmax.f32 %v327, 0.0
      %v364 = vmax.f32 %v328, 0.0
      %v365 = vlaneseq
      %v366 = vshrl.u32 %v365, 7
      %v367 = vadd.s32 %v366, 8
      %v368 = vadd.s32 %v366, 16
      %v369 = vadd.s32 %v366, 24
      %v370 = vadd.s32 %v366, 32
      %v371 = vadd.s32 %v366, 40
      %v372 = vadd.s32 %v366, 48
      %v373 = vadd.s32 %v366, 56
      %v374 = vadd.s32 %v366, 64
      %v375 = vadd.s32 %v366, 72
      %v376 = vadd.s32 %v366, 80
      %v377 = vadd.s32 %v366, 88
      %v378 = vadd.s32 %v366, 96
      %v379 = vadd.s32 %v366, 104
      %v380 = vadd.s32 %v366, 112
      %v381 = vadd.s32 %v366, 120
      %v382 = vadd.s32 %v366, 128
      %v383 = vadd.s32 %v366, 136
      %v384 = vadd.s32 %v366, 144
      %v385 = vadd.s32 %v366, 152
      %v386 = vadd.s32 %v366, 160
      %v387 = vadd.s32 %v366, 168
      %v388 = vadd.s32 %v366, 176
      %v389 = vadd.s32 %v366, 184
      %v390 = vadd.s32 %v366, 192
      %v391 = vadd.s32 %v366, 200
      %v392 = vadd.s32 %v366, 208
      %v393 = vadd.s32 %v366, 216
      %v394 = vadd.s32 %v366, 224
      %v395 = vadd.s32 %v366, 232
      %v396 = vadd.s32 %v366, 240
      %v397 = vadd.s32 %v366, 248
      %v398 = vadd.s32 %v366, 256
      %v399 = vadd.s32 %v366, 264
      %v400 = vadd.s32 %v366, 272
      %v401 = vadd.s32 %v366, 280
      %vm402 = vcmp.lt.s32.totalorder %v366, 0
      %v403 = vsub.s32 0, %v366
      %v404 = vsel %vm402, %v403, %v366
      %v405 = vmul.u32.u64.compose %v404, 3817748708
      %v406 = vextract.low.u32 %v405
      %v407 = vextract.high.u32 %v405
      %v408 = vshrl.u32 %v407, 4
      %v409 = vmul.u32 %v408, 18
      %v410 = vsub.s32 %v404, %v409
      %v411 = vsub.s32 0, %v410
      %v412 = vsel %vm402, %v411, %v410
      %vm413 = vcmp.lt.s32.totalorder %v367, 0
      %v414 = vsub.s32 0, %v367
      %v415 = vsel %vm413, %v414, %v367
      %v416 = vmul.u32.u64.compose %v415, 3817748708
      %v417 = vextract.low.u32 %v416
      %v418 = vextract.high.u32 %v416
      %v419 = vshrl.u32 %v418, 4
      %v420 = vmul.u32 %v419, 18
      %v421 = vsub.s32 %v415, %v420
      %v422 = vsub.s32 0, %v421
      %v423 = vsel %vm413, %v422, %v421
      %vm424 = vcmp.lt.s32.totalorder %v368, 0
      %v425 = vsub.s32 0, %v368
      %v426 = vsel %vm424, %v425, %v368
      %v427 = vmul.u32.u64.compose %v426, 3817748708
      %v428 = vextract.low.u32 %v427
      %v429 = vextract.high.u32 %v427
      %v430 = vshrl.u32 %v429, 4
      %v431 = vmul.u32 %v430, 18
      %v432 = vsub.s32 %v426, %v431
      %v433 = vsub.s32 0, %v432
      %v434 = vsel %vm424, %v433, %v432
      %vm435 = vcmp.lt.s32.totalorder %v369, 0
      %v436 = vsub.s32 0, %v369
      %v437 = vsel %vm435, %v436, %v369
      %v438 = vmul.u32.u64.compose %v437, 3817748708
      %v439 = vextract.low.u32 %v438
      %v440 = vextract.high.u32 %v438
      %v441 = vshrl.u32 %v440, 4
      %v442 = vmul.u32 %v441, 18
      %v443 = vsub.s32 %v437, %v442
      %v444 = vsub.s32 0, %v443
      %v445 = vsel %vm435, %v444, %v443
      %vm446 = vcmp.lt.s32.totalorder %v370, 0
      %v447 = vsub.s32 0, %v370
      %v448 = vsel %vm446, %v447, %v370
      %v449 = vmul.u32.u64.compose %v448, 3817748708
      %v450 = vextract.low.u32 %v449
      %v451 = vextract.high.u32 %v449
      %v452 = vshrl.u32 %v451, 4
      %v453 = vmul.u32 %v452, 18
      %v454 = vsub.s32 %v448, %v453
      %v455 = vsub.s32 0, %v454
      %v456 = vsel %vm446, %v455, %v454
      %vm457 = vcmp.lt.s32.totalorder %v371, 0
      %v458 = vsub.s32 0, %v371
      %v459 = vsel %vm457, %v458, %v371
      %v460 = vmul.u32.u64.compose %v459, 3817748708
      %v461 = vextract.low.u32 %v460
      %v462 = vextract.high.u32 %v460
      %v463 = vshrl.u32 %v462, 4
      %v464 = vmul.u32 %v463, 18
      %v465 = vsub.s32 %v459, %v464
      %v466 = vsub.s32 0, %v465
      %v467 = vsel %vm457, %v466, %v465
      %vm468 = vcmp.lt.s32.totalorder %v372, 0
      %v469 = vsub.s32 0, %v372
      %v470 = vsel %vm468, %v469, %v372
      %v471 = vmul.u32.u64.compose %v470, 3817748708
      %v472 = vextract.low.u32 %v471
      %v473 = vextract.high.u32 %v471
      %v474 = vshrl.u32 %v473, 4
      %v475 = vmul.u32 %v474, 18
      %v476 = vsub.s32 %v470, %v475
      %v477 = vsub.s32 0, %v476
      %v478 = vsel %vm468, %v477, %v476
      %vm479 = vcmp.lt.s32.totalorder %v373, 0
      %v480 = vsub.s32 0, %v373
      %v481 = vsel %vm479, %v480, %v373
      %v482 = vmul.u32.u64.compose %v481, 3817748708
      %v483 = vextract.low.u32 %v482
      %v484 = vextract.high.u32 %v482
      %v485 = vshrl.u32 %v484, 4
      %v486 = vmul.u32 %v485, 18
      %v487 = vsub.s32 %v481, %v486
      %v488 = vsub.s32 0, %v487
      %v489 = vsel %vm479, %v488, %v487
      %vm490 = vcmp.lt.s32.totalorder %v374, 0
      %v491 = vsub.s32 0, %v374
      %v492 = vsel %vm490, %v491, %v374
      %v493 = vmul.u32.u64.compose %v492, 3817748708
      %v494 = vextract.low.u32 %v493
      %v495 = vextract.high.u32 %v493
      %v496 = vshrl.u32 %v495, 4
      %v497 = vmul.u32 %v496, 18
      %v498 = vsub.s32 %v492, %v497
      %v499 = vsub.s32 0, %v498
      %v500 = vsel %vm490, %v499, %v498
      %vm501 = vcmp.lt.s32.totalorder %v375, 0
      %v502 = vsub.s32 0, %v375
      %v503 = vsel %vm501, %v502, %v375
      %v504 = vmul.u32.u64.compose %v503, 3817748708
      %v505 = vextract.low.u32 %v504
      %v506 = vextract.high.u32 %v504
      %v507 = vshrl.u32 %v506, 4
      %v508 = vmul.u32 %v507, 18
      %v509 = vsub.s32 %v503, %v508
      %v510 = vsub.s32 0, %v509
      %v511 = vsel %vm501, %v510, %v509
      %vm512 = vcmp.lt.s32.totalorder %v376, 0
      %v513 = vsub.s32 0, %v376
      %v514 = vsel %vm512, %v513, %v376
      %v515 = vmul.u32.u64.compose %v514, 3817748708
      %v516 = vextract.low.u32 %v515
      %v517 = vextract.high.u32 %v515
      %v518 = vshrl.u32 %v517, 4
      %v519 = vmul.u32 %v518, 18
      %v520 = vsub.s32 %v514, %v519
      %v521 = vsub.s32 0, %v520
      %v522 = vsel %vm512, %v521, %v520
      %vm523 = vcmp.lt.s32.totalorder %v377, 0
      %v524 = vsub.s32 0, %v377
      %v525 = vsel %vm523, %v524, %v377
      %v526 = vmul.u32.u64.compose %v525, 3817748708
      %v527 = vextract.low.u32 %v526
      %v528 = vextract.high.u32 %v526
      %v529 = vshrl.u32 %v528, 4
      %v530 = vmul.u32 %v529, 18
      %v531 = vsub.s32 %v525, %v530
      %v532 = vsub.s32 0, %v531
      %v533 = vsel %vm523, %v532, %v531
      %vm534 = vcmp.lt.s32.totalorder %v378, 0
      %v535 = vsub.s32 0, %v378
      %v536 = vsel %vm534, %v535, %v378
      %v537 = vmul.u32.u64.compose %v536, 3817748708
      %v538 = vextract.low.u32 %v537
      %v539 = vextract.high.u32 %v537
      %v540 = vshrl.u32 %v539, 4
      %v541 = vmul.u32 %v540, 18
      %v542 = vsub.s32 %v536, %v541
      %v543 = vsub.s32 0, %v542
      %v544 = vsel %vm534, %v543, %v542
      %vm545 = vcmp.lt.s32.totalorder %v379, 0
      %v546 = vsub.s32 0, %v379
      %v547 = vsel %vm545, %v546, %v379
      %v548 = vmul.u32.u64.compose %v547, 3817748708
      %v549 = vextract.low.u32 %v548
      %v550 = vextract.high.u32 %v548
      %v551 = vshrl.u32 %v550, 4
      %v552 = vmul.u32 %v551, 18
      %v553 = vsub.s32 %v547, %v552
      %v554 = vsub.s32 0, %v553
      %v555 = vsel %vm545, %v554, %v553
      %vm556 = vcmp.lt.s32.totalorder %v380, 0
      %v557 = vsub.s32 0, %v380
      %v558 = vsel %vm556, %v557, %v380
      %v559 = vmul.u32.u64.compose %v558, 3817748708
      %v560 = vextract.low.u32 %v559
      %v561 = vextract.high.u32 %v559
      %v562 = vshrl.u32 %v561, 4
      %v563 = vmul.u32 %v562, 18
      %v564 = vsub.s32 %v558, %v563
      %v565 = vsub.s32 0, %v564
      %v566 = vsel %vm556, %v565, %v564
      %vm567 = vcmp.lt.s32.totalorder %v381, 0
      %v568 = vsub.s32 0, %v381
      %v569 = vsel %vm567, %v568, %v381
      %v570 = vmul.u32.u64.compose %v569, 3817748708
      %v571 = vextract.low.u32 %v570
      %v572 = vextract.high.u32 %v570
      %v573 = vshrl.u32 %v572, 4
      %v574 = vmul.u32 %v573, 18
      %v575 = vsub.s32 %v569, %v574
      %v576 = vsub.s32 0, %v575
      %v577 = vsel %vm567, %v576, %v575
      %vm578 = vcmp.lt.s32.totalorder %v382, 0
      %v579 = vsub.s32 0, %v382
      %v580 = vsel %vm578, %v579, %v382
      %v581 = vmul.u32.u64.compose %v580, 3817748708
      %v582 = vextract.low.u32 %v581
      %v583 = vextract.high.u32 %v581
      %v584 = vshrl.u32 %v583, 4
      %v585 = vmul.u32 %v584, 18
      %v586 = vsub.s32 %v580, %v585
      %v587 = vsub.s32 0, %v586
      %v588 = vsel %vm578, %v587, %v586
      %vm589 = vcmp.lt.s32.totalorder %v383, 0
      %v590 = vsub.s32 0, %v383
      %v591 = vsel %vm589, %v590, %v383
      %v592 = vmul.u32.u64.compose %v591, 3817748708
      %v593 = vextract.low.u32 %v592
      %v594 = vextract.high.u32 %v592
      %v595 = vshrl.u32 %v594, 4
      %v596 = vmul.u32 %v595, 18
      %v597 = vsub.s32 %v591, %v596
      %v598 = vsub.s32 0, %v597
      %v599 = vsel %vm589, %v598, %v597
      %vm600 = vcmp.lt.s32.totalorder %v384, 0
      %v601 = vsub.s32 0, %v384
      %v602 = vsel %vm600, %v601, %v384
      %v603 = vmul.u32.u64.compose %v602, 3817748708
      %v604 = vextract.low.u32 %v603
      %v605 = vextract.high.u32 %v603
      %v606 = vshrl.u32 %v605, 4
      %v607 = vmul.u32 %v606, 18
      %v608 = vsub.s32 %v602, %v607
      %v609 = vsub.s32 0, %v608
      %v610 = vsel %vm600, %v609, %v608
      %vm611 = vcmp.lt.s32.totalorder %v385, 0
      %v612 = vsub.s32 0, %v385
      %v613 = vsel %vm611, %v612, %v385
      %v614 = vmul.u32.u64.compose %v613, 3817748708
      %v615 = vextract.low.u32 %v614
      %v616 = vextract.high.u32 %v614
      %v617 = vshrl.u32 %v616, 4
      %v618 = vmul.u32 %v617, 18
      %v619 = vsub.s32 %v613, %v618
      %v620 = vsub.s32 0, %v619
      %v621 = vsel %vm611, %v620, %v619
      %vm622 = vcmp.lt.s32.totalorder %v386, 0
      %v623 = vsub.s32 0, %v386
      %v624 = vsel %vm622, %v623, %v386
      %v625 = vmul.u32.u64.compose %v624, 3817748708
      %v626 = vextract.low.u32 %v625
      %v627 = vextract.high.u32 %v625
      %v628 = vshrl.u32 %v627, 4
      %v629 = vmul.u32 %v628, 18
      %v630 = vsub.s32 %v624, %v629
      %v631 = vsub.s32 0, %v630
      %v632 = vsel %vm622, %v631, %v630
      %vm633 = vcmp.lt.s32.totalorder %v387, 0
      %v634 = vsub.s32 0, %v387
      %v635 = vsel %vm633, %v634, %v387
      %v636 = vmul.u32.u64.compose %v635, 3817748708
      %v637 = vextract.low.u32 %v636
      %v638 = vextract.high.u32 %v636
      %v639 = vshrl.u32 %v638, 4
      %v640 = vmul.u32 %v639, 18
      %v641 = vsub.s32 %v635, %v640
      %v642 = vsub.s32 0, %v641
      %v643 = vsel %vm633, %v642, %v641
      %vm644 = vcmp.lt.s32.totalorder %v388, 0
      %v645 = vsub.s32 0, %v388
      %v646 = vsel %vm644, %v645, %v388
      %v647 = vmul.u32.u64.compose %v646, 3817748708
      %v648 = vextract.low.u32 %v647
      %v649 = vextract.high.u32 %v647
      %v650 = vshrl.u32 %v649, 4
      %v651 = vmul.u32 %v650, 18
      %v652 = vsub.s32 %v646, %v651
      %v653 = vsub.s32 0, %v652
      %v654 = vsel %vm644, %v653, %v652
      %vm655 = vcmp.lt.s32.totalorder %v389, 0
      %v656 = vsub.s32 0, %v389
      %v657 = vsel %vm655, %v656, %v389
      %v658 = vmul.u32.u64.compose %v657, 3817748708
      %v659 = vextract.low.u32 %v658
      %v660 = vextract.high.u32 %v658
      %v661 = vshrl.u32 %v660, 4
      %v662 = vmul.u32 %v661, 18
      %v663 = vsub.s32 %v657, %v662
      %v664 = vsub.s32 0, %v663
      %v665 = vsel %vm655, %v664, %v663
      %vm666 = vcmp.lt.s32.totalorder %v390, 0
      %v667 = vsub.s32 0, %v390
      %v668 = vsel %vm666, %v667, %v390
      %v669 = vmul.u32.u64.compose %v668, 3817748708
      %v670 = vextract.low.u32 %v669
      %v671 = vextract.high.u32 %v669
      %v672 = vshrl.u32 %v671, 4
      %v673 = vmul.u32 %v672, 18
      %v674 = vsub.s32 %v668, %v673
      %v675 = vsub.s32 0, %v674
      %v676 = vsel %vm666, %v675, %v674
      %vm677 = vcmp.lt.s32.totalorder %v391, 0
      %v678 = vsub.s32 0, %v391
      %v679 = vsel %vm677, %v678, %v391
      %v680 = vmul.u32.u64.compose %v679, 3817748708
      %v681 = vextract.low.u32 %v680
      %v682 = vextract.high.u32 %v680
      %v683 = vshrl.u32 %v682, 4
      %v684 = vmul.u32 %v683, 18
      %v685 = vsub.s32 %v679, %v684
      %v686 = vsub.s32 0, %v685
      %v687 = vsel %vm677, %v686, %v685
      %vm688 = vcmp.lt.s32.totalorder %v392, 0
      %v689 = vsub.s32 0, %v392
      %v690 = vsel %vm688, %v689, %v392
      %v691 = vmul.u32.u64.compose %v690, 3817748708
      %v692 = vextract.low.u32 %v691
      %v693 = vextract.high.u32 %v691
      %v694 = vshrl.u32 %v693, 4
      %v695 = vmul.u32 %v694, 18
      %v696 = vsub.s32 %v690, %v695
      %v697 = vsub.s32 0, %v696
      %v698 = vsel %vm688, %v697, %v696
      %vm699 = vcmp.lt.s32.totalorder %v393, 0
      %v700 = vsub.s32 0, %v393
      %v701 = vsel %vm699, %v700, %v393
      %v702 = vmul.u32.u64.compose %v701, 3817748708
      %v703 = vextract.low.u32 %v702
      %v704 = vextract.high.u32 %v702
      %v705 = vshrl.u32 %v704, 4
      %v706 = vmul.u32 %v705, 18
      %v707 = vsub.s32 %v701, %v706
      %v708 = vsub.s32 0, %v707
      %v709 = vsel %vm699, %v708, %v707
      %vm710 = vcmp.lt.s32.totalorder %v394, 0
      %v711 = vsub.s32 0, %v394
      %v712 = vsel %vm710, %v711, %v394
      %v713 = vmul.u32.u64.compose %v712, 3817748708
      %v714 = vextract.low.u32 %v713
      %v715 = vextract.high.u32 %v713
      %v716 = vshrl.u32 %v715, 4
      %v717 = vmul.u32 %v716, 18
      %v718 = vsub.s32 %v712, %v717
      %v719 = vsub.s32 0, %v718
      %v720 = vsel %vm710, %v719, %v718
      %vm721 = vcmp.lt.s32.totalorder %v395, 0
      %v722 = vsub.s32 0, %v395
      %v723 = vsel %vm721, %v722, %v395
      %v724 = vmul.u32.u64.compose %v723, 3817748708
      %v725 = vextract.low.u32 %v724
      %v726 = vextract.high.u32 %v724
      %v727 = vshrl.u32 %v726, 4
      %v728 = vmul.u32 %v727, 18
      %v729 = vsub.s32 %v723, %v728
      %v730 = vsub.s32 0, %v729
      %v731 = vsel %vm721, %v730, %v729
      %vm732 = vcmp.lt.s32.totalorder %v396, 0
      %v733 = vsub.s32 0, %v396
      %v734 = vsel %vm732, %v733, %v396
      %v735 = vmul.u32.u64.compose %v734, 3817748708
      %v736 = vextract.low.u32 %v735
      %v737 = vextract.high.u32 %v735
      %v738 = vshrl.u32 %v737, 4
      %v739 = vmul.u32 %v738, 18
      %v740 = vsub.s32 %v734, %v739
      %v741 = vsub.s32 0, %v740
      %v742 = vsel %vm732, %v741, %v740
      %vm743 = vcmp.lt.s32.totalorder %v397, 0
      %v744 = vsub.s32 0, %v397
      %v745 = vsel %vm743, %v744, %v397
      %v746 = vmul.u32.u64.compose %v745, 3817748708
      %v747 = vextract.low.u32 %v746
      %v748 = vextract.high.u32 %v746
      %v749 = vshrl.u32 %v748, 4
      %v750 = vmul.u32 %v749, 18
      %v751 = vsub.s32 %v745, %v750
      %v752 = vsub.s32 0, %v751
      %v753 = vsel %vm743, %v752, %v751
      %vm754 = vcmp.lt.s32.totalorder %v398, 0
      %v755 = vsub.s32 0, %v398
      %v756 = vsel %vm754, %v755, %v398
      %v757 = vmul.u32.u64.compose %v756, 3817748708
      %v758 = vextract.low.u32 %v757
      %v759 = vextract.high.u32 %v757
      %v760 = vshrl.u32 %v759, 4
      %v761 = vmul.u32 %v760, 18
      %v762 = vsub.s32 %v756, %v761
      %v763 = vsub.s32 0, %v762
      %v764 = vsel %vm754, %v763, %v762
      %vm765 = vcmp.lt.s32.totalorder %v399, 0
      %v766 = vsub.s32 0, %v399
      %v767 = vsel %vm765, %v766, %v399
      %v768 = vmul.u32.u64.compose %v767, 3817748708
      %v769 = vextract.low.u32 %v768
      %v770 = vextract.high.u32 %v768
      %v771 = vshrl.u32 %v770, 4
      %v772 = vmul.u32 %v771, 18
      %v773 = vsub.s32 %v767, %v772
      %v774 = vsub.s32 0, %v773
      %v775 = vsel %vm765, %v774, %v773
      %vm776 = vcmp.lt.s32.totalorder %v400, 0
      %v777 = vsub.s32 0, %v400
      %v778 = vsel %vm776, %v777, %v400
      %v779 = vmul.u32.u64.compose %v778, 3817748708
      %v780 = vextract.low.u32 %v779
      %v781 = vextract.high.u32 %v779
      %v782 = vshrl.u32 %v781, 4
      %v783 = vmul.u32 %v782, 18
      %v784 = vsub.s32 %v778, %v783
      %v785 = vsub.s32 0, %v784
      %v786 = vsel %vm776, %v785, %v784
      %vm787 = vcmp.lt.s32.totalorder %v401, 0
      %v788 = vsub.s32 0, %v401
      %v789 = vsel %vm787, %v788, %v401
      %v790 = vmul.u32.u64.compose %v789, 3817748708
      %v791 = vextract.low.u32 %v790
      %v792 = vextract.high.u32 %v790
      %v793 = vshrl.u32 %v792, 4
      %v794 = vmul.u32 %v793, 18
      %v795 = vsub.s32 %v789, %v794
      %v796 = vsub.s32 0, %v795
      %v797 = vsel %vm787, %v796, %v795
      %vm798 = vcmp.ne.s32.totalorder %v412, 0
      %vm799 = vcmp.ne.s32.totalorder %v423, 0
      %vm800 = vcmp.ne.s32.totalorder %v434, 0
      %vm801 = vcmp.ne.s32.totalorder %v445, 0
      %vm802 = vcmp.ne.s32.totalorder %v456, 0
      %vm803 = vcmp.ne.s32.totalorder %v467, 0
      %vm804 = vcmp.ne.s32.totalorder %v478, 0
      %vm805 = vcmp.ne.s32.totalorder %v489, 0
      %vm806 = vcmp.ne.s32.totalorder %v500, 0
      %vm807 = vcmp.ne.s32.totalorder %v511, 0
      %vm808 = vcmp.ne.s32.totalorder %v522, 0
      %vm809 = vcmp.ne.s32.totalorder %v533, 0
      %vm810 = vcmp.ne.s32.totalorder %v544, 0
      %vm811 = vcmp.ne.s32.totalorder %v555, 0
      %vm812 = vcmp.ne.s32.totalorder %v566, 0
      %vm813 = vcmp.ne.s32.totalorder %v577, 0
      %vm814 = vcmp.ne.s32.totalorder %v588, 0
      %vm815 = vcmp.ne.s32.totalorder %v599, 0
      %vm816 = vcmp.ne.s32.totalorder %v610, 0
      %vm817 = vcmp.ne.s32.totalorder %v621, 0
      %vm818 = vcmp.ne.s32.totalorder %v632, 0
      %vm819 = vcmp.ne.s32.totalorder %v643, 0
      %vm820 = vcmp.ne.s32.totalorder %v654, 0
      %vm821 = vcmp.ne.s32.totalorder %v665, 0
      %vm822 = vcmp.ne.s32.totalorder %v676, 0
      %vm823 = vcmp.ne.s32.totalorder %v687, 0
      %vm824 = vcmp.ne.s32.totalorder %v698, 0
      %vm825 = vcmp.ne.s32.totalorder %v709, 0
      %vm826 = vcmp.ne.s32.totalorder %v720, 0
      %vm827 = vcmp.ne.s32.totalorder %v731, 0
      %vm828 = vcmp.ne.s32.totalorder %v742, 0
      %vm829 = vcmp.ne.s32.totalorder %v753, 0
      %vm830 = vcmp.ne.s32.totalorder %v764, 0
      %vm831 = vcmp.ne.s32.totalorder %v775, 0
      %vm832 = vcmp.ne.s32.totalorder %v786, 0
      %vm833 = vcmp.ne.s32.totalorder %v797, 0
      %vm834 = vcmp.lt.s32.totalorder %v412, 0
      %vm835 = vcmp.lt.s32.totalorder %v423, 0
      %vm836 = vcmp.lt.s32.totalorder %v434, 0
      %vm837 = vcmp.lt.s32.totalorder %v445, 0
      %vm838 = vcmp.lt.s32.totalorder %v456, 0
      %vm839 = vcmp.lt.s32.totalorder %v467, 0
      %vm840 = vcmp.lt.s32.totalorder %v478, 0
      %vm841 = vcmp.lt.s32.totalorder %v489, 0
      %vm842 = vcmp.lt.s32.totalorder %v500, 0
      %vm843 = vcmp.lt.s32.totalorder %v511, 0
      %vm844 = vcmp.lt.s32.totalorder %v522, 0
      %vm845 = vcmp.lt.s32.totalorder %v533, 0
      %vm846 = vcmp.lt.s32.totalorder %v544, 0
      %vm847 = vcmp.lt.s32.totalorder %v555, 0
      %vm848 = vcmp.lt.s32.totalorder %v566, 0
      %vm849 = vcmp.lt.s32.totalorder %v577, 0
      %vm850 = vcmp.lt.s32.totalorder %v588, 0
      %vm851 = vcmp.lt.s32.totalorder %v599, 0
      %vm852 = vcmp.lt.s32.totalorder %v610, 0
      %vm853 = vcmp.lt.s32.totalorder %v621, 0
      %vm854 = vcmp.lt.s32.totalorder %v632, 0
      %vm855 = vcmp.lt.s32.totalorder %v643, 0
      %vm856 = vcmp.lt.s32.totalorder %v654, 0
      %vm857 = vcmp.lt.s32.totalorder %v665, 0
      %vm858 = vcmp.lt.s32.totalorder %v676, 0
      %vm859 = vcmp.lt.s32.totalorder %v687, 0
      %vm860 = vcmp.lt.s32.totalorder %v698, 0
      %vm861 = vcmp.lt.s32.totalorder %v709, 0
      %vm862 = vcmp.lt.s32.totalorder %v720, 0
      %vm863 = vcmp.lt.s32.totalorder %v731, 0
      %vm864 = vcmp.lt.s32.totalorder %v742, 0
      %vm865 = vcmp.lt.s32.totalorder %v753, 0
      %vm866 = vcmp.lt.s32.totalorder %v764, 0
      %vm867 = vcmp.lt.s32.totalorder %v775, 0
      %vm868 = vcmp.lt.s32.totalorder %v786, 0
      %vm869 = vcmp.lt.s32.totalorder %v797, 0
      %vm870 = vmand %vm834, %vm798
      %vm871 = vmand %vm835, %vm799
      %vm872 = vmand %vm836, %vm800
      %vm873 = vmand %vm837, %vm801
      %vm874 = vmand %vm838, %vm802
      %vm875 = vmand %vm839, %vm803
      %vm876 = vmand %vm840, %vm804
      %vm877 = vmand %vm841, %vm805
      %vm878 = vmand %vm842, %vm806
      %vm879 = vmand %vm843, %vm807
      %vm880 = vmand %vm844, %vm808
      %vm881 = vmand %vm845, %vm809
      %vm882 = vmand %vm846, %vm810
      %vm883 = vmand %vm847, %vm811
      %vm884 = vmand %vm848, %vm812
      %vm885 = vmand %vm849, %vm813
      %vm886 = vmand %vm850, %vm814
      %vm887 = vmand %vm851, %vm815
      %vm888 = vmand %vm852, %vm816
      %vm889 = vmand %vm853, %vm817
      %vm890 = vmand %vm854, %vm818
      %vm891 = vmand %vm855, %vm819
      %vm892 = vmand %vm856, %vm820
      %vm893 = vmand %vm857, %vm821
      %vm894 = vmand %vm858, %vm822
      %vm895 = vmand %vm859, %vm823
      %vm896 = vmand %vm860, %vm824
      %vm897 = vmand %vm861, %vm825
      %vm898 = vmand %vm862, %vm826
      %vm899 = vmand %vm863, %vm827
      %vm900 = vmand %vm864, %vm828
      %vm901 = vmand %vm865, %vm829
      %vm902 = vmand %vm866, %vm830
      %vm903 = vmand %vm867, %vm831
      %vm904 = vmand %vm868, %vm832
      %vm905 = vmand %vm869, %vm833
      %v906 = vadd.s32 %v412, 18
      %v907 = vadd.s32 %v423, 18
      %v908 = vadd.s32 %v434, 18
      %v909 = vadd.s32 %v445, 18
      %v910 = vadd.s32 %v456, 18
      %v911 = vadd.s32 %v467, 18
      %v912 = vadd.s32 %v478, 18
      %v913 = vadd.s32 %v489, 18
      %v914 = vadd.s32 %v500, 18
      %v915 = vadd.s32 %v511, 18
      %v916 = vadd.s32 %v522, 18
      %v917 = vadd.s32 %v533, 18
      %v918 = vadd.s32 %v544, 18
      %v919 = vadd.s32 %v555, 18
      %v920 = vadd.s32 %v566, 18
      %v921 = vadd.s32 %v577, 18
      %v922 = vadd.s32 %v588, 18
      %v923 = vadd.s32 %v599, 18
      %v924 = vadd.s32 %v610, 18
      %v925 = vadd.s32 %v621, 18
      %v926 = vadd.s32 %v632, 18
      %v927 = vadd.s32 %v643, 18
      %v928 = vadd.s32 %v654, 18
      %v929 = vadd.s32 %v665, 18
      %v930 = vadd.s32 %v676, 18
      %v931 = vadd.s32 %v687, 18
      %v932 = vadd.s32 %v698, 18
      %v933 = vadd.s32 %v709, 18
      %v934 = vadd.s32 %v720, 18
      %v935 = vadd.s32 %v731, 18
      %v936 = vadd.s32 %v742, 18
      %v937 = vadd.s32 %v753, 18
      %v938 = vadd.s32 %v764, 18
      %v939 = vadd.s32 %v775, 18
      %v940 = vadd.s32 %v786, 18
      %v941 = vadd.s32 %v797, 18
      %v942 = vsel %vm870, %v906, %v412
      %v943 = vsel %vm871, %v907, %v423
      %v944 = vsel %vm872, %v908, %v434
      %v945 = vsel %vm873, %v909, %v445
      %v946 = vsel %vm874, %v910, %v456
      %v947 = vsel %vm875, %v911, %v467
      %v948 = vsel %vm876, %v912, %v478
      %v949 = vsel %vm877, %v913, %v489
      %v950 = vsel %vm878, %v914, %v500
      %v951 = vsel %vm879, %v915, %v511
      %v952 = vsel %vm880, %v916, %v522
      %v953 = vsel %vm881, %v917, %v533
      %v954 = vsel %vm882, %v918, %v544
      %v955 = vsel %vm883, %v919, %v555
      %v956 = vsel %vm884, %v920, %v566
      %v957 = vsel %vm885, %v921, %v577
      %v958 = vsel %vm886, %v922, %v588
      %v959 = vsel %vm887, %v923, %v599
      %v960 = vsel %vm888, %v924, %v610
      %v961 = vsel %vm889, %v925, %v621
      %v962 = vsel %vm890, %v926, %v632
      %v963 = vsel %vm891, %v927, %v643
      %v964 = vsel %vm892, %v928, %v654
      %v965 = vsel %vm893, %v929, %v665
      %v966 = vsel %vm894, %v930, %v676
      %v967 = vsel %vm895, %v931, %v687
      %v968 = vsel %vm896, %v932, %v698
      %v969 = vsel %vm897, %v933, %v709
      %v970 = vsel %vm898, %v934, %v720
      %v971 = vsel %vm899, %v935, %v731
      %v972 = vsel %vm900, %v936, %v742
      %v973 = vsel %vm901, %v937, %v753
      %v974 = vsel %vm902, %v938, %v764
      %v975 = vsel %vm903, %v939, %v775
      %v976 = vsel %vm904, %v940, %v786
      %v977 = vsel %vm905, %v941, %v797
      %vm978 = vcmp.lt.s32.totalorder %v942, 16
      %vm979 = vcmp.lt.s32.totalorder %v943, 16
      %vm980 = vcmp.lt.s32.totalorder %v944, 16
      %vm981 = vcmp.lt.s32.totalorder %v945, 16
      %vm982 = vcmp.lt.s32.totalorder %v946, 16
      %vm983 = vcmp.lt.s32.totalorder %v947, 16
      %vm984 = vcmp.lt.s32.totalorder %v948, 16
      %vm985 = vcmp.lt.s32.totalorder %v949, 16
      %vm986 = vcmp.lt.s32.totalorder %v950, 16
      %vm987 = vcmp.lt.s32.totalorder %v951, 16
      %vm988 = vcmp.lt.s32.totalorder %v952, 16
      %vm989 = vcmp.lt.s32.totalorder %v953, 16
      %vm990 = vcmp.lt.s32.totalorder %v954, 16
      %vm991 = vcmp.lt.s32.totalorder %v955, 16
      %vm992 = vcmp.lt.s32.totalorder %v956, 16
      %vm993 = vcmp.lt.s32.totalorder %v957, 16
      %vm994 = vcmp.lt.s32.totalorder %v958, 16
      %vm995 = vcmp.lt.s32.totalorder %v959, 16
      %vm996 = vcmp.lt.s32.totalorder %v960, 16
      %vm997 = vcmp.lt.s32.totalorder %v961, 16
      %vm998 = vcmp.lt.s32.totalorder %v962, 16
      %vm999 = vcmp.lt.s32.totalorder %v963, 16
      %vm1000 = vcmp.lt.s32.totalorder %v964, 16
      %vm1001 = vcmp.lt.s32.totalorder %v965, 16
      %vm1002 = vcmp.lt.s32.totalorder %v966, 16
      %vm1003 = vcmp.lt.s32.totalorder %v967, 16
      %vm1004 = vcmp.lt.s32.totalorder %v968, 16
      %vm1005 = vcmp.lt.s32.totalorder %v969, 16
      %vm1006 = vcmp.lt.s32.totalorder %v970, 16
      %vm1007 = vcmp.lt.s32.totalorder %v971, 16
      %vm1008 = vcmp.lt.s32.totalorder %v972, 16
      %vm1009 = vcmp.lt.s32.totalorder %v973, 16
      %vm1010 = vcmp.lt.s32.totalorder %v974, 16
      %vm1011 = vcmp.lt.s32.totalorder %v975, 16
      %vm1012 = vcmp.lt.s32.totalorder %v976, 16
      %vm1013 = vcmp.lt.s32.totalorder %v977, 16
      %v1014 = vsel %vm978, 1, 0
      %v1015 = vsel %vm979, 1, 0
      %v1016 = vsel %vm980, 1, 0
      %v1017 = vsel %vm981, 1, 0
      %v1018 = vsel %vm982, 1, 0
      %v1019 = vsel %vm983, 1, 0
      %v1020 = vsel %vm984, 1, 0
      %v1021 = vsel %vm985, 1, 0
      %v1022 = vsel %vm986, 1, 0
      %v1023 = vsel %vm987, 1, 0
      %v1024 = vsel %vm988, 1, 0
      %v1025 = vsel %vm989, 1, 0
      %v1026 = vsel %vm990, 1, 0
      %v1027 = vsel %vm991, 1, 0
      %v1028 = vsel %vm992, 1, 0
      %v1029 = vsel %vm993, 1, 0
      %v1030 = vsel %vm994, 1, 0
      %v1031 = vsel %vm995, 1, 0
      %v1032 = vsel %vm996, 1, 0
      %v1033 = vsel %vm997, 1, 0
      %v1034 = vsel %vm998, 1, 0
      %v1035 = vsel %vm999, 1, 0
      %v1036 = vsel %vm1000, 1, 0
      %v1037 = vsel %vm1001, 1, 0
      %v1038 = vsel %vm1002, 1, 0
      %v1039 = vsel %vm1003, 1, 0
      %v1040 = vsel %vm1004, 1, 0
      %v1041 = vsel %vm1005, 1, 0
      %v1042 = vsel %vm1006, 1, 0
      %v1043 = vsel %vm1007, 1, 0
      %v1044 = vsel %vm1008, 1, 0
      %v1045 = vsel %vm1009, 1, 0
      %v1046 = vsel %vm1010, 1, 0
      %v1047 = vsel %vm1011, 1, 0
      %v1048 = vsel %vm1012, 1, 0
      %v1049 = vsel %vm1013, 1, 0
      %v1050 = vcvt.s32.f32 %v1014
      %v1051 = vcvt.s32.f32 %v1015
      %v1052 = vcvt.s32.f32 %v1016
      %v1053 = vcvt.s32.f32 %v1017
      %v1054 = vcvt.s32.f32 %v1018
      %v1055 = vcvt.s32.f32 %v1019
      %v1056 = vcvt.s32.f32 %v1020
      %v1057 = vcvt.s32.f32 %v1021
      %v1058 = vcvt.s32.f32 %v1022
      %v1059 = vcvt.s32.f32 %v1023
      %v1060 = vcvt.s32.f32 %v1024
      %v1061 = vcvt.s32.f32 %v1025
      %v1062 = vcvt.s32.f32 %v1026
      %v1063 = vcvt.s32.f32 %v1027
      %v1064 = vcvt.s32.f32 %v1028
      %v1065 = vcvt.s32.f32 %v1029
      %v1066 = vcvt.s32.f32 %v1030
      %v1067 = vcvt.s32.f32 %v1031
      %v1068 = vcvt.s32.f32 %v1032
      %v1069 = vcvt.s32.f32 %v1033
      %v1070 = vcvt.s32.f32 %v1034
      %v1071 = vcvt.s32.f32 %v1035
      %v1072 = vcvt.s32.f32 %v1036
      %v1073 = vcvt.s32.f32 %v1037
      %v1074 = vcvt.s32.f32 %v1038
      %v1075 = vcvt.s32.f32 %v1039
      %v1076 = vcvt.s32.f32 %v1040
      %v1077 = vcvt.s32.f32 %v1041
      %v1078 = vcvt.s32.f32 %v1042
      %v1079 = vcvt.s32.f32 %v1043
      %v1080 = vcvt.s32.f32 %v1044
      %v1081 = vcvt.s32.f32 %v1045
      %v1082 = vcvt.s32.f32 %v1046
      %v1083 = vcvt.s32.f32 %v1047
      %v1084 = vcvt.s32.f32 %v1048
      %v1085 = vcvt.s32.f32 %v1049
      %v1086 = vmul.f32 %v329, %v1050
      %v1087 = vmul.f32 %v330, %v1051
      %v1088 = vmul.f32 %v331, %v1052
      %v1089 = vmul.f32 %v332, %v1053
      %v1090 = vmul.f32 %v333, %v1054
      %v1091 = vmul.f32 %v334, %v1055
      %v1092 = vmul.f32 %v335, %v1056
      %v1093 = vmul.f32 %v336, %v1057
      %v1094 = vmul.f32 %v337, %v1058
      %v1095 = vmul.f32 %v338, %v1059
      %v1096 = vmul.f32 %v339, %v1060
      %v1097 = vmul.f32 %v340, %v1061
      %v1098 = vmul.f32 %v341, %v1062
      %v1099 = vmul.f32 %v342, %v1063
      %v1100 = vmul.f32 %v343, %v1064
      %v1101 = vmul.f32 %v344, %v1065
      %v1102 = vmul.f32 %v345, %v1066
      %v1103 = vmul.f32 %v346, %v1067
      %v1104 = vmul.f32 %v347, %v1068
      %v1105 = vmul.f32 %v348, %v1069
      %v1106 = vmul.f32 %v349, %v1070
      %v1107 = vmul.f32 %v350, %v1071
      %v1108 = vmul.f32 %v351, %v1072
      %v1109 = vmul.f32 %v352, %v1073
      %v1110 = vmul.f32 %v353, %v1074
      %v1111 = vmul.f32 %v354, %v1075
      %v1112 = vmul.f32 %v355, %v1076
      %v1113 = vmul.f32 %v356, %v1077
      %v1114 = vmul.f32 %v357, %v1078
      %v1115 = vmul.f32 %v358, %v1079
      %v1116 = vmul.f32 %v359, %v1080
      %v1117 = vmul.f32 %v360, %v1081
      %v1118 = vmul.f32 %v361, %v1082
      %v1119 = vmul.f32 %v362, %v1083
      %v1120 = vmul.f32 %v363, %v1084
      %v1121 = vmul.f32 %v364, %v1085
      %1122 = vst [vmem:[%s206] sm:$0xff] %v1086
      %1123 = vst [vmem:[%s206 + $0x8] sm:$0xff] %v1087
      %1124 = vst [vmem:[%s206 + $0x10] sm:$0xff] %v1088
      %1125 = vst [vmem:[%s206 + $0x18] sm:$0xff] %v1089
      %1126 = vst [vmem:[%s206 + $0x20] sm:$0xff] %v1090
      %1127 = vst [vmem:[%s206 + $0x28] sm:$0xff] %v1091
      %1128 = vst [vmem:[%s206 + $0x30] sm:$0xff] %v1092
      %1129 = vst [vmem:[%s206 + $0x38] sm:$0xff] %v1093
      %1130 = vst [vmem:[%s206 + $0x40] sm:$0xff] %v1094
      %1131 = vst [vmem:[%s206 + $0x48] sm:$0xff] %v1095
      %1132 = vst [vmem:[%s206 + $0x50] sm:$0xff] %v1096
      %1133 = vst [vmem:[%s206 + $0x58] sm:$0xff] %v1097
      %1134 = vst [vmem:[%s206 + $0x60] sm:$0xff] %v1098
      %1135 = vst [vmem:[%s206 + $0x68] sm:$0xff] %v1099
      %1136 = vst [vmem:[%s206 + $0x70] sm:$0xff] %v1100
      %1137 = vst [vmem:[%s206 + $0x78] sm:$0xff] %v1101
      %1138 = vst [vmem:[%s206 + $0x80] sm:$0xff] %v1102
      %1139 = vst [vmem:[%s206 + $0x88] sm:$0xff] %v1103
      %1140 = vst [vmem:[%s206 + $0x90] sm:$0xff] %v1104
      %1141 = vst [vmem:[%s206 + $0x98] sm:$0xff] %v1105
      %1142 = vst [vmem:[%s206 + $0xa0] sm:$0xff] %v1106
      %1143 = vst [vmem:[%s206 + $0xa8] sm:$0xff] %v1107
      %1144 = vst [vmem:[%s206 + $0xb0] sm:$0xff] %v1108
      %1145 = vst [vmem:[%s206 + $0xb8] sm:$0xff] %v1109
      %1146 = vst [vmem:[%s206 + $0xc0] sm:$0xff] %v1110
      %1147 = vst [vmem:[%s206 + $0xc8] sm:$0xff] %v1111
      %1148 = vst [vmem:[%s206 + $0xd0] sm:$0xff] %v1112
      %1149 = vst [vmem:[%s206 + $0xd8] sm:$0xff] %v1113
      %1150 = vst [vmem:[%s206 + $0xe0] sm:$0xff] %v1114
      %1151 = vst [vmem:[%s206 + $0xe8] sm:$0xff] %v1115
      %1152 = vst [vmem:[%s206 + $0xf0] sm:$0xff] %v1116
      %1153 = vst [vmem:[%s206 + $0xf8] sm:$0xff] %v1117
      %1154 = vst [vmem:[%s206 + $0x100] sm:$0xff] %v1118
      %1155 = vst [vmem:[%s206 + $0x108] sm:$0xff] %v1119
      %1156 = vst [vmem:[%s206 + $0x110] sm:$0xff] %v1120
      %1157 = vst [vmem:[%s206 + $0x118] sm:$0xff] %v1121
      %p1158 = scmp.lt.s32.totalorder %s18, 1
      %s1159 = scalar_select %p1158, %s18, 1
      %p1160 = scmp.lt.s32.totalorder %s19, 0
      %s1161 = scalar_select %p1160, %s19, 0
      %s1162 = smul.addr %s1161, 36
      %s1163 = smul.addr %s1159, 36
      %s1164 = sadd.s32 %s1162, %s1163
      %s1165 = smul.addr %s1164, 8
      %s1166 = scalar_lea.vmem %s3, %s1165
      // Predicated region
      $region33: #{conv_block_forward.7} parent=31 // pred_check
        %p1167 = pneg %p116
      $region34: #{conv_block_forward.7} parent=31 // pred_check_branch
        %1169 = sbr.rel (%p1167) target = $region36
      $region35: #{conv_block_forward.7} parent=31 // pred_region
        _
      $region36: #{conv_block_forward.7} parent=31 // pred_fallthru
        _
    $region32: #{conv_block_forward.7} parent=5 // pred_fallthru
      _
    %p1170 = scmp.le.s32.totalorder 2, %s9
    // Predicated region
    $region37: #{conv_block_forward.7} parent=5 // pred_check
      %p1171 = pneg %p1170
    $region38: #{conv_block_forward.7} parent=5 // pred_check_branch
      %1173 = sbr.rel (%p1171) target = $region40
    $region39: #{conv_block_forward.7} parent=5 // pred_region
      %s1174 = ssub.s32 %s9, 2
      // Predicated region
      $region41: #{conv_block_forward.7} parent=39 // pred_check
        %p1175 = pneg %p122
      $region42: #{conv_block_forward.7} parent=39 // pred_check_branch
        %1177 = sbr.rel (%p1175) target = $region44
      $region43: #{conv_block_forward.7} parent=39 // pred_region
        %p1178 = scmp.lt.s32.totalorder %s20, 1
        %s1179 = scalar_select %p1178, %s20, 1
        %p1180 = scmp.lt.s32.totalorder %s21, 0
        %s1181 = scalar_select %p1180, %s21, 0
        %s1182 = smul.addr %s1181, 36
        %s1183 = smul.addr %s1179, 36
        %s1184 = sadd.s32 %s1182, %s1183
        %s1185 = smul.addr %s1184, 8
        %s1186 = scalar_lea.vmem %s3, %s1185
      $region44: #{conv_block_forward.7} parent=39 // pred_fallthru
        _
    $region40: #{conv_block_forward.7} parent=5 // pred_fallthru
      _
  $region6: #{conv_block_forward.7} parent=0 // loop_footer
    %s13 = sadd.s32 1, %s9
  $region7: #{conv_block_forward.7} parent=0 // loop_footer_branch
    %8 = sbr.rel target = $region3
  $region8: #{conv_block_forward.7} parent=0 // loop_exit
    _

// kernel: conv_block_forward.6
$region0: #{conv_block_forward.6}
  #allocation0 [shape = 'u32[]', space=smem, size = 0x4, offset = 0x4, fixed_abs, tag = 'smem constant byte address 0x4 - core index']
  #allocation1 [shape = 'u32[144,128]{1,0:T(1,128)}', space=vmem, size = 0x12000, scoped, tag = 'internal scratch']
  %s0 = inlined_call_operand.vmem [shape: bf16[2,1,288,128], index: 0, kind: input, shape index: {}]
  %s1 = inlined_call_operand.vmem [shape: bf16[1,128,128], index: 1, kind: input, shape index: {}]
  %s2 = inlined_call_operand.vmem [shape: f32[2,1,288,128], index: 2, kind: output, shape index: {0}]
  %s3 = inlined_call_operand.vmem [shape: f32[2,1,128], index: 3, kind: output, shape index: {1}]
  %s4 = inlined_call_operand.vmem [shape: f32[2,1,128], index: 4, kind: output, shape index: {2}]
  %5 = xla_tuple %s2, %s3, %s4
  %s6 = sld [smem:[#allocation0]]
  $region61: #{conv_block_forward.6} parent=0
    _
  %s8 = ssub.s32 1, %s6
  %s9 = scalar_select 0, %s8, %s6
  loop: start=0, step=1, limit=4
  $region2: #{conv_block_forward.6} parent=0 // loop_pre_header
    _
  $region3: #{conv_block_forward.6} parent=0 // loop_header
    %s11 = sphi 0, %s15
    %p12 = scmp.ge.s32.totalorder %s11, 4
    %s18 = sphi 0, %s30
    %s19 = sphi 0, %s26
    %s20 = sphi 0, %s18
    %s21 = sphi 0, %s19
    %s22 = sphi 0, %s20
    %s23 = sphi 0, %s21
    %s35 = sphi 0, %s37
    %s38 = sphi 0, %s35
    %s39 = sphi 0, %s38
    %s55 = sphi 0, %s39
    %s59 = sphi 0, %s59
    %s61 = sphi 0, %s59
    %s62 = sphi 0, %s61
    %s76 = sphi 0, %s62
    %s84 = sphi 0, %s86
    %s87 = sphi 0, %s84
    %s88 = sphi 0, %s87
    %s104 = sphi 0, %s88
    %s110 = sphi 0, %s112
    %s113 = sphi 0, %s110
    %s114 = sphi 0, %s113
    %s130 = sphi 0, %s114
    %s136 = sphi 0, %s138
    %s139 = sphi 0, %s136
    %s140 = sphi 0, %s139
    %s156 = sphi 0, %s140
  $region4: #{conv_block_forward.6} parent=0 // loop_header_branch
    %14 = sbr.rel (%p12) target = $region8
  $region5: #{conv_block_forward.6} parent=0 // loop_body
    %s16 = ssub.s32 %s11, 1
    %s17 = ssub.s32 %s11, 2
    %s24 = sadd.s32 1, %s19
    %p25 = scmp.ge.s32.totalorder %s24, 1
    %s26 = scalar_select %p25, 0, %s24
    %s27 = sadd.s32 1, %s18
    %s28 = scalar_select %p25, %s27, %s18
    %p29 = scmp.ge.s32.totalorder %s28, 2
    %s30 = scalar_select %p29, 0, %s28
    %s31 = ssub.s32 %s18, %s30
    %s32 = ssub.s32 %s19, %s26
    %s33 = sor.u32 %s31, %s32
    %p34 = scmp.eq.s32.totalorder %s33, 0
    %s36 = sadd.s32 %s35, 1
    %s37 = scalar_select %p34, %s35, %s36
    %p40 = pneg %p34
    %p41 = scmp.eq.s32.totalorder %s11, 1
    %p42 = por %p40, %p41
    %p43 = scmp.ne.s32.totalorder %s35, %s38
    %p44 = scmp.eq.s32.totalorder %s11, 0
    %p45 = por %p43, %p44
    %p46 = scmp.ne.s32.totalorder %s35, %s38
    %p47 = scmp.eq.s32.totalorder %s16, 1
    %p48 = por %p46, %p47
    %p49 = scmp.ne.s32.totalorder %s38, %s39
    %p50 = scmp.eq.s32.totalorder %s16, 0
    %p51 = por %p49, %p50
    %p52 = scmp.ne.s32.totalorder %s38, %s39
    %p53 = scmp.eq.s32.totalorder %s17, 1
    %p54 = por %p52, %p53
    %p56 = scmp.ne.s32.totalorder %s39, %s55
    %p57 = scmp.eq.s32.totalorder %s17, 0
    %p58 = por %p56, %p57
    %s60 = sadd.s32 %s59, 1
    %p63 = scmp.eq.s32.totalorder %s11, 1
    %p64 = scmp.ne.s32.totalorder %s59, %s61
    %p65 = scmp.eq.s32.totalorder %s11, 0
    %p66 = por %p64, %p65
    %p67 = scmp.ne.s32.totalorder %s59, %s61
    %p68 = scmp.eq.s32.totalorder %s16, 1
    %p69 = por %p67, %p68
    %p70 = scmp.ne.s32.totalorder %s61, %s62
    %p71 = scmp.eq.s32.totalorder %s16, 0
    %p72 = por %p70, %p71
    %p73 = scmp.ne.s32.totalorder %s61, %s62
    %p74 = scmp.eq.s32.totalorder %s17, 1
    %p75 = por %p73, %p74
    %p77 = scmp.ne.s32.totalorder %s62, %s76
    %p78 = scmp.eq.s32.totalorder %s17, 0
    %p79 = por %p77, %p78
    %s80 = ssub.s32 %s18, %s30
    %s81 = ssub.s32 %s19, %s26
    %s82 = sor.u32 %s80, %s81
    %p83 = scmp.eq.s32.totalorder %s82, 0
    %s85 = sadd.s32 %s84, 1
    %s86 = scalar_select %p83, %s84, %s85
    %p89 = pneg %p83
    %p90 = scmp.eq.s32.totalorder %s11, 1
    %p91 = por %p89, %p90
    %p92 = scmp.ne.s32.totalorder %s84, %s87
    %p93 = scmp.eq.s32.totalorder %s11, 0
    %p94 = por %p92, %p93
    %p95 = scmp.ne.s32.totalorder %s84, %s87
    %p96 = scmp.eq.s32.totalorder %s16, 1
    %p97 = por %p95, %p96
    %p98 = scmp.ne.s32.totalorder %s87, %s88
    %p99 = scmp.eq.s32.totalorder %s16, 0
    %p100 = por %p98, %p99
    %p101 = scmp.ne.s32.totalorder %s87, %s88
    %p102 = scmp.eq.s32.totalorder %s17, 1
    %p103 = por %p101, %p102
    %p105 = scmp.ne.s32.totalorder %s88, %s104
    %p106 = scmp.eq.s32.totalorder %s17, 0
    %p107 = por %p105, %p106
    %s108 = ssub.s32 %s18, %s30
    %p109 = scmp.eq.s32.totalorder %s108, 0
    %s111 = sadd.s32 %s110, 1
    %s112 = scalar_select %p109, %s110, %s111
    %p115 = pneg %p109
    %p116 = scmp.eq.s32.totalorder %s11, 1
    %p117 = por %p115, %p116
    %p118 = scmp.ne.s32.totalorder %s110, %s113
    %p119 = scmp.eq.s32.totalorder %s11, 0
    %p120 = por %p118, %p119
    %p121 = scmp.ne.s32.totalorder %s110, %s113
    %p122 = scmp.eq.s32.totalorder %s16, 1
    %p123 = por %p121, %p122
    %p124 = scmp.ne.s32.totalorder %s113, %s114
    %p125 = scmp.eq.s32.totalorder %s16, 0
    %p126 = por %p124, %p125
    %p127 = scmp.ne.s32.totalorder %s113, %s114
    %p128 = scmp.eq.s32.totalorder %s17, 1
    %p129 = por %p127, %p128
    %p131 = scmp.ne.s32.totalorder %s114, %s130
    %p132 = scmp.eq.s32.totalorder %s17, 0
    %p133 = por %p131, %p132
    %s134 = ssub.s32 %s18, %s30
    %p135 = scmp.eq.s32.totalorder %s134, 0
    %s137 = sadd.s32 %s136, 1
    %s138 = scalar_select %p135, %s136, %s137
    %p141 = pneg %p135
    %p142 = scmp.eq.s32.totalorder %s11, 1
    %p143 = por %p141, %p142
    %p144 = scmp.ne.s32.totalorder %s136, %s139
    %p145 = scmp.eq.s32.totalorder %s11, 0
    %p146 = por %p144, %p145
    %p147 = scmp.ne.s32.totalorder %s136, %s139
    %p148 = scmp.eq.s32.totalorder %s16, 1
    %p149 = por %p147, %p148
    %p150 = scmp.ne.s32.totalorder %s139, %s140
    %p151 = scmp.eq.s32.totalorder %s16, 0
    %p152 = por %p150, %p151
    %p153 = scmp.ne.s32.totalorder %s139, %s140
    %p154 = scmp.eq.s32.totalorder %s17, 1
    %p155 = por %p153, %p154
    %p157 = scmp.ne.s32.totalorder %s140, %s156
    %p158 = scmp.eq.s32.totalorder %s17, 0
    %p159 = por %p157, %p158
    %p160 = scmp.le.s32.totalorder 1, %s11
    %p161 = scmp.lt.s32.totalorder %s11, 3
    %p162 = pnand %p160, %p161
    %p163 = pneg %p162
    // Predicated region
    $region9: #{conv_block_forward.6} parent=5 // pred_check
      _
    $region10: #{conv_block_forward.6} parent=5 // pred_check_branch
      %165 = sbr.rel (%p162) target = $region12
    $region11: #{conv_block_forward.6} parent=5 // pred_region
      %s166 = ssub.s32 %s11, 1
      // Predicated region
      $region13: #{conv_block_forward.6} parent=11 // pred_check
        %p167 = pneg %p72
      $region14: #{conv_block_forward.6} parent=11 // pred_check_branch
        %169 = sbr.rel (%p167) target = $region16
      $region15: #{conv_block_forward.6} parent=11 // pred_region
        _
      $region16: #{conv_block_forward.6} parent=11 // pred_fallthru
        _
    $region12: #{conv_block_forward.6} parent=5 // pred_fallthru
      _
    %p170 = scmp.lt.s32.totalorder %s11, 2
    // Predicated region
    $region17: #{conv_block_forward.6} parent=5 // pred_check
      %p171 = pneg %p170
    $region18: #{conv_block_forward.6} parent=5 // pred_check_branch
      %173 = sbr.rel (%p171) target = $region20
    $region19: #{conv_block_forward.6} parent=5 // pred_region
      // Predicated region
      $region21: #{conv_block_forward.6} parent=19 // pred_check
        %p174 = pneg %p45
      $region22: #{conv_block_forward.6} parent=19 // pred_check_branch
        %176 = sbr.rel (%p174) target = $region24
      $region23: #{conv_block_forward.6} parent=19 // pred_region
        %p177 = scmp.lt.s32.totalorder %s18, 1
        %s178 = scalar_select %p177, %s18, 1
        %p179 = scmp.lt.s32.totalorder %s19, 0
        %s180 = scalar_select %p179, %s19, 0
        %s181 = smul.addr %s180, 36
        %s182 = smul.addr %s178, 36
        %s183 = sadd.s32 %s181, %s182
        %s184 = smul.addr %s183, 4
        %s185 = scalar_lea.vmem %s0, %s184
      $region24: #{conv_block_forward.6} parent=19 // pred_fallthru
        _
    $region20: #{conv_block_forward.6} parent=5 // pred_fallthru
      _
    %p186 = scmp.le.s32.totalorder 1, %s11
    %p187 = scmp.lt.s32.totalorder %s11, 3
    %p188 = pnand %p186, %p187
    %p189 = pneg %p188
    // Predicated region
    $region25: #{conv_block_forward.6} parent=5 // pred_check
      _
    $region26: #{conv_block_forward.6} parent=5 // pred_check_branch
      %191 = sbr.rel (%p188) target = $region28
    $region27: #{conv_block_forward.6} parent=5 // pred_region
      %s192 = ssub.s32 %s11, 1
      %p193 = scmp.lt.s32.totalorder %s20, 1
      %s194 = scalar_select %p193, %s20, 1
      %p195 = scmp.lt.s32.totalorder %s21, 0
      %s196 = scalar_select %p195, %s21, 0
      %s197 = smul.addr %s196, 36
      %s198 = smul.addr %s194, 36
      %s199 = sadd.s32 %s197, %s198
      %s200 = smul.addr %s199, 4
      %s201 = scalar_lea.vmem %s0, %s200
      %p202 = pneg %p51
      %p203 = pneg %p48
      %p204 = pneg %p72
      %p205 = pneg %p69
      %p206 = pneg %p100
      %p207 = pneg %p97
      %p208 = scmp.lt.s32.totalorder %s20, 1
      %s209 = scalar_select %p208, %s20, 1
      %p210 = scmp.lt.s32.totalorder %s21, 0
      %s211 = scalar_select %p210, %s21, 0
      %s212 = smul.addr %s211, 36
      %s213 = smul.addr %s209, 36
      %s214 = sadd.s32 %s212, %s213
      %s215 = smul.addr %s214, 8
      %s216 = scalar_lea.vmem %s2, %s215
      %p217 = pneg %p126
      %p218 = pneg %p123
      %p219 = scmp.lt.s32.totalorder %s20, 1
      %s220 = scalar_select %p219, %s20, 1
      %s221 = scalar_lea.vmem %s3, %s220
      %p222 = pneg %p152
      %p223 = pneg %p149
      %p224 = scmp.lt.s32.totalorder %s20, 1
      %s225 = scalar_select %p224, %s20, 1
      %s226 = scalar_lea.vmem %s4, %s225
      %p227 = scmp.lt.s32.totalorder %s20, 1
      %s228 = scalar_select %p227, %s20, 1
      %p229 = scmp.lt.s32.totalorder %s21, 0
      %s230 = scalar_select %p229, %s21, 0
      %s231 = smul.addr %s230, 36
      %s232 = smul.addr %s228, 36
      %s233 = sadd.s32 %s231, %s232
      %s234 = smul.addr %s233, 4
      %s235 = scalar_lea.vmem %s0, %s234
      %p236 = scmp.lt.s32.totalorder %s20, 1
      %s237 = scalar_select %p236, %s20, 1
      %p238 = scmp.lt.s32.totalorder %s21, 0
      %s239 = scalar_select %p238, %s21, 0
      %s240 = smul.addr %s239, 36
      %s241 = smul.addr %s237, 36
      %s242 = sadd.s32 %s240, %s241
      %s243 = smul.addr %s242, 8
      %s244 = scalar_lea.vmem %s2, %s243
      %p245 = scmp.lt.s32.totalorder %s20, 1
      %s246 = scalar_select %p245, %s20, 1
      %s247 = scalar_lea.vmem %s3, %s246
      %p248 = scmp.lt.s32.totalorder %s20, 1
      %s249 = scalar_select %p248, %s20, 1
      %s250 = scalar_lea.vmem %s4, %s249
      %v252 = vld [vmem:[%s235] sm:$0xf]
      %v253 = vld [vmem:[%s235 + $0x4] sm:$0xf]
      %v254 = vld [vmem:[%s235 + $0x8] sm:$0xf]
      %v255 = vld [vmem:[%s235 + $0xc] sm:$0xf]
      %v256 = vld [vmem:[%s235 + $0x10] sm:$0xf]
      %v257 = vld [vmem:[%s235 + $0x14] sm:$0xf]
      %v258 = vld [vmem:[%s235 + $0x18] sm:$0xf]
      %v259 = vld [vmem:[%s235 + $0x1c] sm:$0xf]
      %v260 = vld [vmem:[%s235 + $0x20] sm:$0xf]
      %v261 = vld [vmem:[%s235 + $0x24] sm:$0xf]
      %v262 = vld [vmem:[%s235 + $0x28] sm:$0xf]
      %v263 = vld [vmem:[%s235 + $0x2c] sm:$0xf]
      %v264 = vld [vmem:[%s235 + $0x30] sm:$0xf]
      %v265 = vld [vmem:[%s235 + $0x34] sm:$0xf]
      %v266 = vld [vmem:[%s235 + $0x38] sm:$0xf]
      %v267 = vld [vmem:[%s235 + $0x3c] sm:$0xf]
      %v268 = vld [vmem:[%s235 + $0x40] sm:$0xf]
      %v269 = vld [vmem:[%s235 + $0x44] sm:$0xf]
      %v270 = vld [vmem:[%s235 + $0x48] sm:$0xf]
      %v271 = vld [vmem:[%s235 + $0x4c] sm:$0xf]
      %v272 = vld [vmem:[%s235 + $0x50] sm:$0xf]
      %v273 = vld [vmem:[%s235 + $0x54] sm:$0xf]
      %v274 = vld [vmem:[%s235 + $0x58] sm:$0xf]
      %v275 = vld [vmem:[%s235 + $0x5c] sm:$0xf]
      %v276 = vld [vmem:[%s235 + $0x60] sm:$0xf]
      %v277 = vld [vmem:[%s235 + $0x64] sm:$0xf]
      %v278 = vld [vmem:[%s235 + $0x68] sm:$0xf]
      %v279 = vld [vmem:[%s235 + $0x6c] sm:$0xf]
      %v280 = vld [vmem:[%s235 + $0x70] sm:$0xf]
      %v281 = vld [vmem:[%s235 + $0x74] sm:$0xf]
      %v282 = vld [vmem:[%s235 + $0x78] sm:$0xf]
      %v283 = vld [vmem:[%s235 + $0x7c] sm:$0xf]
      %v284 = vld [vmem:[%s235 + $0x80] sm:$0xf]
      %v285 = vld [vmem:[%s235 + $0x84] sm:$0xf]
      %v286 = vld [vmem:[%s235 + $0x88] sm:$0xf]
      %v287 = vld [vmem:[%s235 + $0x8c] sm:$0xf]
      %v288 = vld [vmem:[%s1] sm:$0xf]
      %v289 = vld [vmem:[%s1 + $0x4] sm:$0xf]
      %v290 = vld [vmem:[%s1 + $0x8] sm:$0xf]
      %v291 = vld [vmem:[%s1 + $0xc] sm:$0xf]
      %v292 = vld [vmem:[%s1 + $0x10] sm:$0xf]
      %v293 = vld [vmem:[%s1 + $0x14] sm:$0xf]
      %v294 = vld [vmem:[%s1 + $0x18] sm:$0xf]
      %v295 = vld [vmem:[%s1 + $0x1c] sm:$0xf]
      %v296 = vld [vmem:[%s1 + $0x20] sm:$0xf]
      %v297 = vld [vmem:[%s1 + $0x24] sm:$0xf]
      %v298 = vld [vmem:[%s1 + $0x28] sm:$0xf]
      %v299 = vld [vmem:[%s1 + $0x2c] sm:$0xf]
      %v300 = vld [vmem:[%s1 + $0x30] sm:$0xf]
      %v301 = vld [vmem:[%s1 + $0x34] sm:$0xf]
      %v302 = vld [vmem:[%s1 + $0x38] sm:$0xf]
      %v303 = vld [vmem:[%s1 + $0x3c] sm:$0xf]
      %v340 = vunpack.c.l.b16 %v252
      %v341 = vunpack.c.l.b16 %v253
      %v342 = vunpack.c.l.b16 %v254
      %v343 = vunpack.c.l.b16 %v255
      %v344 = vunpack.c.l.b16 %v256
      %v345 = vunpack.c.l.b16 %v257
      %v346 = vunpack.c.l.b16 %v258
      %v347 = vunpack.c.l.b16 %v259
      %v348 = vunpack.c.l.b16 %v260
      %v349 = vunpack.c.l.b16 %v261
      %v350 = vunpack.c.l.b16 %v262
      %v351 = vunpack.c.l.b16 %v263
      %v352 = vunpack.c.l.b16 %v264
      %v353 = vunpack.c.l.b16 %v265
      %v354 = vunpack.c.l.b16 %v266
      %v355 = vunpack.c.l.b16 %v267
      %v356 = vunpack.c.l.b16 %v268
      %v357 = vunpack.c.l.b16 %v269
      %v358 = vunpack.c.l.b16 %v270
      %v359 = vunpack.c.l.b16 %v271
      %v360 = vunpack.c.l.b16 %v272
      %v361 = vunpack.c.l.b16 %v273
      %v362 = vunpack.c.l.b16 %v274
      %v363 = vunpack.c.l.b16 %v275
      %v364 = vunpack.c.l.b16 %v276
      %v365 = vunpack.c.l.b16 %v277
      %v366 = vunpack.c.l.b16 %v278
      %v367 = vunpack.c.l.b16 %v279
      %v368 = vunpack.c.l.b16 %v280
      %v369 = vunpack.c.l.b16 %v281
      %v370 = vunpack.c.l.b16 %v282
      %v371 = vunpack.c.l.b16 %v283
      %v372 = vunpack.c.l.b16 %v284
      %v373 = vunpack.c.l.b16 %v285
      %v374 = vunpack.c.l.b16 %v286
      %v375 = vunpack.c.l.b16 %v287
      %v376 = vpack.c.b16 %v341, %v340
      %v377 = vpack.c.b16 %v343, %v342
      %v378 = vpack.c.b16 %v345, %v344
      %v379 = vpack.c.b16 %v347, %v346
      %v380 = vpack.c.b16 %v349, %v348
      %v381 = vpack.c.b16 %v351, %v350
      %v382 = vpack.c.b16 %v353, %v352
      %v383 = vpack.c.b16 %v355, %v354
      %v384 = vpack.c.b16 %v357, %v356
      %v385 = vpack.c.b16 %v359, %v358
      %v386 = vpack.c.b16 %v361, %v360
      %v387 = vpack.c.b16 %v363, %v362
      %v388 = vpack.c.b16 %v365, %v364
      %v389 = vpack.c.b16 %v367, %v366
      %v390 = vpack.c.b16 %v369, %v368
      %v391 = vpack.c.b16 %v371, %v370
      %v392 = vpack.c.b16 %v373, %v372
      %v393 = vpack.c.b16 %v375, %v374
      %v428 = vunpack.c.l.b16 %v288
      %v429 = vunpack.c.l.b16 %v289
      %v430 = vunpack.c.l.b16 %v290
      %v431 = vunpack.c.l.b16 %v291
      %v432 = vunpack.c.l.b16 %v292
      %v433 = vunpack.c.l.b16 %v293
      %v434 = vunpack.c.l.b16 %v294
      %v435 = vunpack.c.l.b16 %v295
      %v436 = vunpack.c.l.b16 %v296
      %v437 = vunpack.c.l.b16 %v297
      %v438 = vunpack.c.l.b16 %v298
      %v439 = vunpack.c.l.b16 %v299
      %v440 = vunpack.c.l.b16 %v300
      %v441 = vunpack.c.l.b16 %v301
      %v442 = vunpack.c.l.b16 %v302
      %v443 = vunpack.c.l.b16 %v303
      %v444 = vpack.c.b16 %v429, %v428
      %v445 = vpack.c.b16 %v431, %v430
      %v446 = vpack.c.b16 %v433, %v432
      %v447 = vpack.c.b16 %v435, %v434
      %v448 = vpack.c.b16 %v437, %v436
      %v449 = vpack.c.b16 %v439, %v438
      %v450 = vpack.c.b16 %v441, %v440
      %v451 = vpack.c.b16 %v443, %v442
      %460 = vmatprep.subr.bf16.mxu0 0
      %461 = vmatpush1.bf16.msra.mxu0 %v451
      %462 = vmatprep.subr.bf16.mxu0 0
      %463 = vmatpush1.bf16.msra.mxu0 %v450
      %464 = vmatprep.subr.bf16.mxu0 0
      %465 = vmatpush1.bf16.msra.mxu0 %v449
      %466 = vmatprep.subr.bf16.mxu0 0
      %467 = vmatpush1.bf16.msra.mxu0 %v448
      %468 = vmatprep.subr.bf16.mxu0 0
      %469 = vmatpush1.bf16.msra.mxu0 %v447
      %470 = vmatprep.subr.bf16.mxu0 0
      %471 = vmatpush1.bf16.msra.mxu0 %v446
      %472 = vmatprep.subr.bf16.mxu0 0
      %473 = vmatpush1.bf16.msra.mxu0 %v445
      %474 = vmatprep.subr.bf16.mxu0 0
      %475 = vmatpush1.bf16.msra.mxu0 %v444
      %476 = vmatprep.subr.bf16.mxu0 0
      %477 = vmatpush2.bf16.msra.mxu0 0
      %478 = vmatprep.subr.bf16.mxu0 0
      %479 = vmatpush2.bf16.msra.mxu0 0
      %480 = vmatprep.subr.bf16.mxu0 0
      %481 = vmatpush2.bf16.msra.mxu0 0
      %482 = vmatprep.subr.bf16.mxu0 0
      %483 = vmatpush2.bf16.msra.mxu0 0
      %484 = vmatprep.subr.bf16.mxu0 0
      %485 = vmatpush2.bf16.msra.mxu0 0
      %486 = vmatprep.subr.bf16.mxu0 0
      %487 = vmatpush2.bf16.msra.mxu0 0
      %488 = vmatprep.subr.bf16.mxu0 0
      %489 = vmatpush2.bf16.msra.mxu0 0
      %490 = vmatprep.subr.bf16.mxu0 0
      %491 = vmatpush2.bf16.msra.mxu0 0
      %492 = vmatprep.mubr.bf16.mxu0 0
      %493 = vmatmul.mubr.bf16.gmra.mxu0 %v376
      %v494 = vpop.f32.mrf.mxu0
      %v495 = vadd.f32 0.0, %v494
      %v496 = vpop.f32.mrf.mxu0
      %v497 = vpop.f32.mrf.mxu0
      %v498 = vadd.f32 0.0, %v497
      %v499 = vpop.f32.mrf.mxu0
      %500 = vmatprep.mubr.bf16.mxu0 0
      %501 = vmatmul.mubr.bf16.gmra.mxu0 %v377
      %v502 = vpop.f32.mrf.mxu0
      %v503 = vadd.f32 0.0, %v502
      %v504 = vpop.f32.mrf.mxu0
      %v505 = vpop.f32.mrf.mxu0
      %v506 = vadd.f32 0.0, %v505
      %v507 = vpop.f32.mrf.mxu0
      %508 = vmatprep.mubr.bf16.mxu0 0
      %509 = vmatmul.mubr.bf16.gmra.mxu0 %v378
      %v510 = vpop.f32.mrf.mxu0
      %v511 = vadd.f32 0.0, %v510
      %v512 = vpop.f32.mrf.mxu0
      %v513 = vpop.f32.mrf.mxu0
      %v514 = vadd.f32 0.0, %v513
      %v515 = vpop.f32.mrf.mxu0
      %516 = vmatprep.mubr.bf16.mxu0 0
      %517 = vmatmul.mubr.bf16.gmra.mxu0 %v379
      %v518 = vpop.f32.mrf.mxu0
      %v519 = vadd.f32 0.0, %v518
      %v520 = vpop.f32.mrf.mxu0
      %v521 = vpop.f32.mrf.mxu0
      %v522 = vadd.f32 0.0, %v521
      %v523 = vpop.f32.mrf.mxu0
      %524 = vmatprep.mubr.bf16.mxu0 0
      %525 = vmatmul.mubr.bf16.gmra.mxu0 %v380
      %v526 = vpop.f32.mrf.mxu0
      %v527 = vadd.f32 0.0, %v526
      %v528 = vpop.f32.mrf.mxu0
      %v529 = vpop.f32.mrf.mxu0
      %v530 = vadd.f32 0.0, %v529
      %v531 = vpop.f32.mrf.mxu0
      %532 = vmatprep.mubr.bf16.mxu0 0
      %533 = vmatmul.mubr.bf16.gmra.mxu0 %v381
      %v534 = vpop.f32.mrf.mxu0
      %v535 = vadd.f32 0.0, %v534
      %v536 = vpop.f32.mrf.mxu0
      %v537 = vpop.f32.mrf.mxu0
      %v538 = vadd.f32 0.0, %v537
      %v539 = vpop.f32.mrf.mxu0
      %540 = vmatprep.mubr.bf16.mxu0 0
      %541 = vmatmul.mubr.bf16.gmra.mxu0 %v382
      %v542 = vpop.f32.mrf.mxu0
      %v543 = vadd.f32 0.0, %v542
      %v544 = vpop.f32.mrf.mxu0
      %v545 = vpop.f32.mrf.mxu0
      %v546 = vadd.f32 0.0, %v545
      %v547 = vpop.f32.mrf.mxu0
      %548 = vmatprep.mubr.bf16.mxu0 0
      %549 = vmatmul.mubr.bf16.gmra.mxu0 %v383
      %v550 = vpop.f32.mrf.mxu0
      %v551 = vadd.f32 0.0, %v550
      %v552 = vpop.f32.mrf.mxu0
      %v553 = vpop.f32.mrf.mxu0
      %v554 = vadd.f32 0.0, %v553
      %v555 = vpop.f32.mrf.mxu0
      %556 = vmatprep.mubr.bf16.mxu0 0
      %557 = vmatmul.mubr.bf16.gmra.mxu0 %v384
      %v558 = vpop.f32.mrf.mxu0
      %v559 = vadd.f32 0.0, %v558
      %v560 = vpop.f32.mrf.mxu0
      %v561 = vpop.f32.mrf.mxu0
      %v562 = vadd.f32 0.0, %v561
      %v563 = vpop.f32.mrf.mxu0
      %564 = vmatprep.mubr.bf16.mxu0 0
      %565 = vmatmul.mubr.bf16.gmra.mxu0 %v385
      %v566 = vpop.f32.mrf.mxu0
      %v567 = vadd.f32 0.0, %v566
      %v568 = vpop.f32.mrf.mxu0
      %v569 = vpop.f32.mrf.mxu0
      %v570 = vadd.f32 0.0, %v569
      %v571 = vpop.f32.mrf.mxu0
      %572 = vmatprep.mubr.bf16.mxu0 0
      %573 = vmatmul.mubr.bf16.gmra.mxu0 %v386
      %v574 = vpop.f32.mrf.mxu0
      %v575 = vadd.f32 0.0, %v574
      %v576 = vpop.f32.mrf.mxu0
      %v577 = vpop.f32.mrf.mxu0
      %v578 = vadd.f32 0.0, %v577
      %v579 = vpop.f32.mrf.mxu0
      %580 = vmatprep.mubr.bf16.mxu0 0
      %581 = vmatmul.mubr.bf16.gmra.mxu0 %v387
      %v582 = vpop.f32.mrf.mxu0
      %v583 = vadd.f32 0.0, %v582
      %v584 = vpop.f32.mrf.mxu0
      %v585 = vpop.f32.mrf.mxu0
      %v586 = vadd.f32 0.0, %v585
      %v587 = vpop.f32.mrf.mxu0
      %588 = vmatprep.mubr.bf16.mxu0 0
      %589 = vmatmul.mubr.bf16.gmra.mxu0 %v388
      %v590 = vpop.f32.mrf.mxu0
      %v591 = vadd.f32 0.0, %v590
      %v592 = vpop.f32.mrf.mxu0
      %v593 = vpop.f32.mrf.mxu0
      %v594 = vadd.f32 0.0, %v593
      %v595 = vpop.f32.mrf.mxu0
      %596 = vmatprep.mubr.bf16.mxu0 0
      %597 = vmatmul.mubr.bf16.gmra.mxu0 %v389
      %v598 = vpop.f32.mrf.mxu0
      %v599 = vadd.f32 0.0, %v598
      %v600 = vpop.f32.mrf.mxu0
      %v601 = vpop.f32.mrf.mxu0
      %v602 = vadd.f32 0.0, %v601
      %v603 = vpop.f32.mrf.mxu0
      %604 = vmatprep.mubr.bf16.mxu0 0
      %605 = vmatmul.mubr.bf16.gmra.mxu0 %v390
      %v606 = vpop.f32.mrf.mxu0
      %v607 = vadd.f32 0.0, %v606
      %v608 = vpop.f32.mrf.mxu0
      %v609 = vpop.f32.mrf.mxu0
      %v610 = vadd.f32 0.0, %v609
      %v611 = vpop.f32.mrf.mxu0
      %612 = vmatprep.mubr.bf16.mxu0 0
      %613 = vmatmul.mubr.bf16.gmra.mxu0 %v391
      %v614 = vpop.f32.mrf.mxu0
      %v615 = vadd.f32 0.0, %v614
      %v616 = vpop.f32.mrf.mxu0
      %v617 = vpop.f32.mrf.mxu0
      %v618 = vadd.f32 0.0, %v617
      %v619 = vpop.f32.mrf.mxu0
      %620 = vmatprep.mubr.bf16.mxu0 0
      %621 = vmatmul.mubr.bf16.gmra.mxu0 %v392
      %v622 = vpop.f32.mrf.mxu0
      %v623 = vadd.f32 0.0, %v622
      %v624 = vpop.f32.mrf.mxu0
      %v625 = vpop.f32.mrf.mxu0
      %v626 = vadd.f32 0.0, %v625
      %v627 = vpop.f32.mrf.mxu0
      %628 = vmatprep.mubr.bf16.mxu0 0
      %629 = vmatmul.mubr.bf16.gmra.mxu0 %v393
      %v630 = vpop.f32.mrf.mxu0
      %v631 = vadd.f32 0.0, %v630
      %v632 = vpop.f32.mrf.mxu0
      %v633 = vpop.f32.mrf.mxu0
      %v634 = vadd.f32 0.0, %v633
      %v635 = vpop.f32.mrf.mxu0
      %636 = vdwg.mxu0
      %637 = vst [vmem:[%s244] sm:$0xff] %v495
      %638 = vst [vmem:[%s244 + $0x8] sm:$0xff] %v498
      %639 = vst [vmem:[%s244 + $0x10] sm:$0xff] %v503
      %640 = vst [vmem:[%s244 + $0x18] sm:$0xff] %v506
      %641 = vst [vmem:[%s244 + $0x20] sm:$0xff] %v511
      %642 = vst [vmem:[%s244 + $0x28] sm:$0xff] %v514
      %643 = vst [vmem:[%s244 + $0x30] sm:$0xff] %v519
      %644 = vst [vmem:[%s244 + $0x38] sm:$0xff] %v522
      %645 = vst [vmem:[%s244 + $0x40] sm:$0xff] %v527
      %646 = vst [vmem:[%s244 + $0x48] sm:$0xff] %v530
      %647 = vst [vmem:[%s244 + $0x50] sm:$0xff] %v535
      %648 = vst [vmem:[%s244 + $0x58] sm:$0xff] %v538
      %649 = vst [vmem:[%s244 + $0x60] sm:$0xff] %v543
      %650 = vst [vmem:[%s244 + $0x68] sm:$0xff] %v546
      %651 = vst [vmem:[%s244 + $0x70] sm:$0xff] %v551
      %652 = vst [vmem:[%s244 + $0x78] sm:$0xff] %v554
      %653 = vst [vmem:[%s244 + $0x80] sm:$0xff] %v559
      %654 = vst [vmem:[%s244 + $0x88] sm:$0xff] %v562
      %655 = vst [vmem:[%s244 + $0x90] sm:$0xff] %v567
      %656 = vst [vmem:[%s244 + $0x98] sm:$0xff] %v570
      %657 = vst [vmem:[%s244 + $0xa0] sm:$0xff] %v575
      %658 = vst [vmem:[%s244 + $0xa8] sm:$0xff] %v578
      %659 = vst [vmem:[%s244 + $0xb0] sm:$0xff] %v583
      %660 = vst [vmem:[%s244 + $0xb8] sm:$0xff] %v586
      %661 = vst [vmem:[%s244 + $0xc0] sm:$0xff] %v591
      %662 = vst [vmem:[%s244 + $0xc8] sm:$0xff] %v594
      %663 = vst [vmem:[%s244 + $0xd0] sm:$0xff] %v599
      %664 = vst [vmem:[%s244 + $0xd8] sm:$0xff] %v602
      %665 = vst [vmem:[%s244 + $0xe0] sm:$0xff] %v607
      %666 = vst [vmem:[%s244 + $0xe8] sm:$0xff] %v610
      %667 = vst [vmem:[%s244 + $0xf0] sm:$0xff] %v615
      %668 = vst [vmem:[%s244 + $0xf8] sm:$0xff] %v618
      %669 = vst [vmem:[%s244 + $0x100] sm:$0xff] %v623
      %670 = vst [vmem:[%s244 + $0x108] sm:$0xff] %v626
      %671 = vst [vmem:[%s244 + $0x110] sm:$0xff] %v631
      %672 = vst [vmem:[%s244 + $0x118] sm:$0xff] %v634
      %v673 = vlaneseq
      %v674 = vshrl.u32 %v673, 7
      %v675 = vadd.s32 %v674, 8
      %v676 = vadd.s32 %v674, 16
      %v677 = vadd.s32 %v674, 24
      %v678 = vadd.s32 %v674, 32
      %v679 = vadd.s32 %v674, 40
      %v680 = vadd.s32 %v674, 48
      %v681 = vadd.s32 %v674, 56
      %v682 = vadd.s32 %v674, 64
      %v683 = vadd.s32 %v674, 72
      %v684 = vadd.s32 %v674, 80
      %v685 = vadd.s32 %v674, 88
      %v686 = vadd.s32 %v674, 96
      %v687 = vadd.s32 %v674, 104
      %v688 = vadd.s32 %v674, 112
      %v689 = vadd.s32 %v674, 120
      %v690 = vadd.s32 %v674, 128
      %v691 = vadd.s32 %v674, 136
      %v692 = vadd.s32 %v674, 144
      %v693 = vadd.s32 %v674, 152
      %v694 = vadd.s32 %v674, 160
      %v695 = vadd.s32 %v674, 168
      %v696 = vadd.s32 %v674, 176
      %v697 = vadd.s32 %v674, 184
      %v698 = vadd.s32 %v674, 192
      %v699 = vadd.s32 %v674, 200
      %v700 = vadd.s32 %v674, 208
      %v701 = vadd.s32 %v674, 216
      %v702 = vadd.s32 %v674, 224
      %v703 = vadd.s32 %v674, 232
      %v704 = vadd.s32 %v674, 240
      %v705 = vadd.s32 %v674, 248
      %v706 = vadd.s32 %v674, 256
      %v707 = vadd.s32 %v674, 264
      %v708 = vadd.s32 %v674, 272
      %v709 = vadd.s32 %v674, 280
      %vm710 = vcmp.lt.s32.totalorder %v674, 0
      %v711 = vsub.s32 0, %v674
      %v712 = vsel %vm710, %v711, %v674
      %v713 = vmul.u32.u64.compose %v712, 3817748708
      %v714 = vextract.low.u32 %v713
      %v715 = vextract.high.u32 %v713
      %v716 = vshrl.u32 %v715, 4
      %v717 = vmul.u32 %v716, 18
      %v718 = vsub.s32 %v712, %v717
      %v719 = vsub.s32 0, %v718
      %v720 = vsel %vm710, %v719, %v718
      %vm721 = vcmp.lt.s32.totalorder %v675, 0
      %v722 = vsub.s32 0, %v675
      %v723 = vsel %vm721, %v722, %v675
      %v724 = vmul.u32.u64.compose %v723, 3817748708
      %v725 = vextract.low.u32 %v724
      %v726 = vextract.high.u32 %v724
      %v727 = vshrl.u32 %v726, 4
      %v728 = vmul.u32 %v727, 18
      %v729 = vsub.s32 %v723, %v728
      %v730 = vsub.s32 0, %v729
      %v731 = vsel %vm721, %v730, %v729
      %vm732 = vcmp.lt.s32.totalorder %v676, 0
      %v733 = vsub.s32 0, %v676
      %v734 = vsel %vm732, %v733, %v676
      %v735 = vmul.u32.u64.compose %v734, 3817748708
      %v736 = vextract.low.u32 %v735
      %v737 = vextract.high.u32 %v735
      %v738 = vshrl.u32 %v737, 4
      %v739 = vmul.u32 %v738, 18
      %v740 = vsub.s32 %v734, %v739
      %v741 = vsub.s32 0, %v740
      %v742 = vsel %vm732, %v741, %v740
      %vm743 = vcmp.lt.s32.totalorder %v677, 0
      %v744 = vsub.s32 0, %v677
      %v745 = vsel %vm743, %v744, %v677
      %v746 = vmul.u32.u64.compose %v745, 3817748708
      %v747 = vextract.low.u32 %v746
      %v748 = vextract.high.u32 %v746
      %v749 = vshrl.u32 %v748, 4
      %v750 = vmul.u32 %v749, 18
      %v751 = vsub.s32 %v745, %v750
      %v752 = vsub.s32 0, %v751
      %v753 = vsel %vm743, %v752, %v751
      %vm754 = vcmp.lt.s32.totalorder %v678, 0
      %v755 = vsub.s32 0, %v678
      %v756 = vsel %vm754, %v755, %v678
      %v757 = vmul.u32.u64.compose %v756, 3817748708
      %v758 = vextract.low.u32 %v757
      %v759 = vextract.high.u32 %v757
      %v760 = vshrl.u32 %v759, 4
      %v761 = vmul.u32 %v760, 18
      %v762 = vsub.s32 %v756, %v761
      %v763 = vsub.s32 0, %v762
      %v764 = vsel %vm754, %v763, %v762
      %vm765 = vcmp.lt.s32.totalorder %v679, 0
      %v766 = vsub.s32 0, %v679
      %v767 = vsel %vm765, %v766, %v679
      %v768 = vmul.u32.u64.compose %v767, 3817748708
      %v769 = vextract.low.u32 %v768
      %v770 = vextract.high.u32 %v768
      %v771 = vshrl.u32 %v770, 4
      %v772 = vmul.u32 %v771, 18
      %v773 = vsub.s32 %v767, %v772
      %v774 = vsub.s32 0, %v773
      %v775 = vsel %vm765, %v774, %v773
      %vm776 = vcmp.lt.s32.totalorder %v680, 0
      %v777 = vsub.s32 0, %v680
      %v778 = vsel %vm776, %v777, %v680
      %v779 = vmul.u32.u64.compose %v778, 3817748708
      %v780 = vextract.low.u32 %v779
      %v781 = vextract.high.u32 %v779
      %v782 = vshrl.u32 %v781, 4
      %v783 = vmul.u32 %v782, 18
      %v784 = vsub.s32 %v778, %v783
      %v785 = vsub.s32 0, %v784
      %v786 = vsel %vm776, %v785, %v784
      %vm787 = vcmp.lt.s32.totalorder %v681, 0
      %v788 = vsub.s32 0, %v681
      %v789 = vsel %vm787, %v788, %v681
      %v790 = vmul.u32.u64.compose %v789, 3817748708
      %v791 = vextract.low.u32 %v790
      %v792 = vextract.high.u32 %v790
      %v793 = vshrl.u32 %v792, 4
      %v794 = vmul.u32 %v793, 18
      %v795 = vsub.s32 %v789, %v794
      %v796 = vsub.s32 0, %v795
      %v797 = vsel %vm787, %v796, %v795
      %vm798 = vcmp.lt.s32.totalorder %v682, 0
      %v799 = vsub.s32 0, %v682
      %v800 = vsel %vm798, %v799, %v682
      %v801 = vmul.u32.u64.compose %v800, 3817748708
      %v802 = vextract.low.u32 %v801
      %v803 = vextract.high.u32 %v801
      %v804 = vshrl.u32 %v803, 4
      %v805 = vmul.u32 %v804, 18
      %v806 = vsub.s32 %v800, %v805
      %v807 = vsub.s32 0, %v806
      %v808 = vsel %vm798, %v807, %v806
      %vm809 = vcmp.lt.s32.totalorder %v683, 0
      %v810 = vsub.s32 0, %v683
      %v811 = vsel %vm809, %v810, %v683
      %v812 = vmul.u32.u64.compose %v811, 3817748708
      %v813 = vextract.low.u32 %v812
      %v814 = vextract.high.u32 %v812
      %v815 = vshrl.u32 %v814, 4
      %v816 = vmul.u32 %v815, 18
      %v817 = vsub.s32 %v811, %v816
      %v818 = vsub.s32 0, %v817
      %v819 = vsel %vm809, %v818, %v817
      %vm820 = vcmp.lt.s32.totalorder %v684, 0
      %v821 = vsub.s32 0, %v684
      %v822 = vsel %vm820, %v821, %v684
      %v823 = vmul.u32.u64.compose %v822, 3817748708
      %v824 = vextract.low.u32 %v823
      %v825 = vextract.high.u32 %v823
      %v826 = vshrl.u32 %v825, 4
      %v827 = vmul.u32 %v826, 18
      %v828 = vsub.s32 %v822, %v827
      %v829 = vsub.s32 0, %v828
      %v830 = vsel %vm820, %v829, %v828
      %vm831 = vcmp.lt.s32.totalorder %v685, 0
      %v832 = vsub.s32 0, %v685
      %v833 = vsel %vm831, %v832, %v685
      %v834 = vmul.u32.u64.compose %v833, 3817748708
      %v835 = vextract.low.u32 %v834
      %v836 = vextract.high.u32 %v834
      %v837 = vshrl.u32 %v836, 4
      %v838 = vmul.u32 %v837, 18
      %v839 = vsub.s32 %v833, %v838
      %v840 = vsub.s32 0, %v839
      %v841 = vsel %vm831, %v840, %v839
      %vm842 = vcmp.lt.s32.totalorder %v686, 0
      %v843 = vsub.s32 0, %v686
      %v844 = vsel %vm842, %v843, %v686
      %v845 = vmul.u32.u64.compose %v844, 3817748708
      %v846 = vextract.low.u32 %v845
      %v847 = vextract.high.u32 %v845
      %v848 = vshrl.u32 %v847, 4
      %v849 = vmul.u32 %v848, 18
      %v850 = vsub.s32 %v844, %v849
      %v851 = vsub.s32 0, %v850
      %v852 = vsel %vm842, %v851, %v850
      %vm853 = vcmp.lt.s32.totalorder %v687, 0
      %v854 = vsub.s32 0, %v687
      %v855 = vsel %vm853, %v854, %v687
      %v856 = vmul.u32.u64.compose %v855, 3817748708
      %v857 = vextract.low.u32 %v856
      %v858 = vextract.high.u32 %v856
      %v859 = vshrl.u32 %v858, 4
      %v860 = vmul.u32 %v859, 18
      %v861 = vsub.s32 %v855, %v860
      %v862 = vsub.s32 0, %v861
      %v863 = vsel %vm853, %v862, %v861
      %vm864 = vcmp.lt.s32.totalorder %v688, 0
      %v865 = vsub.s32 0, %v688
      %v866 = vsel %vm864, %v865, %v688
      %v867 = vmul.u32.u64.compose %v866, 3817748708
      %v868 = vextract.low.u32 %v867
      %v869 = vextract.high.u32 %v867
      %v870 = vshrl.u32 %v869, 4
      %v871 = vmul.u32 %v870, 18
      %v872 = vsub.s32 %v866, %v871
      %v873 = vsub.s32 0, %v872
      %v874 = vsel %vm864, %v873, %v872
      %vm875 = vcmp.lt.s32.totalorder %v689, 0
      %v876 = vsub.s32 0, %v689
      %v877 = vsel %vm875, %v876, %v689
      %v878 = vmul.u32.u64.compose %v877, 3817748708
      %v879 = vextract.low.u32 %v878
      %v880 = vextract.high.u32 %v878
      %v881 = vshrl.u32 %v880, 4
      %v882 = vmul.u32 %v881, 18
      %v883 = vsub.s32 %v877, %v882
      %v884 = vsub.s32 0, %v883
      %v885 = vsel %vm875, %v884, %v883
      %vm886 = vcmp.lt.s32.totalorder %v690, 0
      %v887 = vsub.s32 0, %v690
      %v888 = vsel %vm886, %v887, %v690
      %v889 = vmul.u32.u64.compose %v888, 3817748708
      %v890 = vextract.low.u32 %v889
      %v891 = vextract.high.u32 %v889
      %v892 = vshrl.u32 %v891, 4
      %v893 = vmul.u32 %v892, 18
      %v894 = vsub.s32 %v888, %v893
      %v895 = vsub.s32 0, %v894
      %v896 = vsel %vm886, %v895, %v894
      %vm897 = vcmp.lt.s32.totalorder %v691, 0
      %v898 = vsub.s32 0, %v691
      %v899 = vsel %vm897, %v898, %v691
      %v900 = vmul.u32.u64.compose %v899, 3817748708
      %v901 = vextract.low.u32 %v900
      %v902 = vextract.high.u32 %v900
      %v903 = vshrl.u32 %v902, 4
      %v904 = vmul.u32 %v903, 18
      %v905 = vsub.s32 %v899, %v904
      %v906 = vsub.s32 0, %v905
      %v907 = vsel %vm897, %v906, %v905
      %vm908 = vcmp.lt.s32.totalorder %v692, 0
      %v909 = vsub.s32 0, %v692
      %v910 = vsel %vm908, %v909, %v692
      %v911 = vmul.u32.u64.compose %v910, 3817748708
      %v912 = vextract.low.u32 %v911
      %v913 = vextract.high.u32 %v911
      %v914 = vshrl.u32 %v913, 4
      %v915 = vmul.u32 %v914, 18
      %v916 = vsub.s32 %v910, %v915
      %v917 = vsub.s32 0, %v916
      %v918 = vsel %vm908, %v917, %v916
      %vm919 = vcmp.lt.s32.totalorder %v693, 0
      %v920 = vsub.s32 0, %v693
      %v921 = vsel %vm919, %v920, %v693
      %v922 = vmul.u32.u64.compose %v921, 3817748708
      %v923 = vextract.low.u32 %v922
      %v924 = vextract.high.u32 %v922
      %v925 = vshrl.u32 %v924, 4
      %v926 = vmul.u32 %v925, 18
      %v927 = vsub.s32 %v921, %v926
      %v928 = vsub.s32 0, %v927
      %v929 = vsel %vm919, %v928, %v927
      %vm930 = vcmp.lt.s32.totalorder %v694, 0
      %v931 = vsub.s32 0, %v694
      %v932 = vsel %vm930, %v931, %v694
      %v933 = vmul.u32.u64.compose %v932, 3817748708
      %v934 = vextract.low.u32 %v933
      %v935 = vextract.high.u32 %v933
      %v936 = vshrl.u32 %v935, 4
      %v937 = vmul.u32 %v936, 18
      %v938 = vsub.s32 %v932, %v937
      %v939 = vsub.s32 0, %v938
      %v940 = vsel %vm930, %v939, %v938
      %vm941 = vcmp.lt.s32.totalorder %v695, 0
      %v942 = vsub.s32 0, %v695
      %v943 = vsel %vm941, %v942, %v695
      %v944 = vmul.u32.u64.compose %v943, 3817748708
      %v945 = vextract.low.u32 %v944
      %v946 = vextract.high.u32 %v944
      %v947 = vshrl.u32 %v946, 4
      %v948 = vmul.u32 %v947, 18
      %v949 = vsub.s32 %v943, %v948
      %v950 = vsub.s32 0, %v949
      %v951 = vsel %vm941, %v950, %v949
      %vm952 = vcmp.lt.s32.totalorder %v696, 0
      %v953 = vsub.s32 0, %v696
      %v954 = vsel %vm952, %v953, %v696
      %v955 = vmul.u32.u64.compose %v954, 3817748708
      %v956 = vextract.low.u32 %v955
      %v957 = vextract.high.u32 %v955
      %v958 = vshrl.u32 %v957, 4
      %v959 = vmul.u32 %v958, 18
      %v960 = vsub.s32 %v954, %v959
      %v961 = vsub.s32 0, %v960
      %v962 = vsel %vm952, %v961, %v960
      %vm963 = vcmp.lt.s32.totalorder %v697, 0
      %v964 = vsub.s32 0, %v697
      %v965 = vsel %vm963, %v964, %v697
      %v966 = vmul.u32.u64.compose %v965, 3817748708
      %v967 = vextract.low.u32 %v966
      %v968 = vextract.high.u32 %v966
      %v969 = vshrl.u32 %v968, 4
      %v970 = vmul.u32 %v969, 18
      %v971 = vsub.s32 %v965, %v970
      %v972 = vsub.s32 0, %v971
      %v973 = vsel %vm963, %v972, %v971
      %vm974 = vcmp.lt.s32.totalorder %v698, 0
      %v975 = vsub.s32 0, %v698
      %v976 = vsel %vm974, %v975, %v698
      %v977 = vmul.u32.u64.compose %v976, 3817748708
      %v978 = vextract.low.u32 %v977
      %v979 = vextract.high.u32 %v977
      %v980 = vshrl.u32 %v979, 4
      %v981 = vmul.u32 %v980, 18
      %v982 = vsub.s32 %v976, %v981
      %v983 = vsub.s32 0, %v982
      %v984 = vsel %vm974, %v983, %v982
      %vm985 = vcmp.lt.s32.totalorder %v699, 0
      %v986 = vsub.s32 0, %v699
      %v987 = vsel %vm985, %v986, %v699
      %v988 = vmul.u32.u64.compose %v987, 3817748708
      %v989 = vextract.low.u32 %v988
      %v990 = vextract.high.u32 %v988
      %v991 = vshrl.u32 %v990, 4
      %v992 = vmul.u32 %v991, 18
      %v993 = vsub.s32 %v987, %v992
      %v994 = vsub.s32 0, %v993
      %v995 = vsel %vm985, %v994, %v993
      %vm996 = vcmp.lt.s32.totalorder %v700, 0
      %v997 = vsub.s32 0, %v700
      %v998 = vsel %vm996, %v997, %v700
      %v999 = vmul.u32.u64.compose %v998, 3817748708
      %v1000 = vextract.low.u32 %v999
      %v1001 = vextract.high.u32 %v999
      %v1002 = vshrl.u32 %v1001, 4
      %v1003 = vmul.u32 %v1002, 18
      %v1004 = vsub.s32 %v998, %v1003
      %v1005 = vsub.s32 0, %v1004
      %v1006 = vsel %vm996, %v1005, %v1004
      %vm1007 = vcmp.lt.s32.totalorder %v701, 0
      %v1008 = vsub.s32 0, %v701
      %v1009 = vsel %vm1007, %v1008, %v701
      %v1010 = vmul.u32.u64.compose %v1009, 3817748708
      %v1011 = vextract.low.u32 %v1010
      %v1012 = vextract.high.u32 %v1010
      %v1013 = vshrl.u32 %v1012, 4
      %v1014 = vmul.u32 %v1013, 18
      %v1015 = vsub.s32 %v1009, %v1014
      %v1016 = vsub.s32 0, %v1015
      %v1017 = vsel %vm1007, %v1016, %v1015
      %vm1018 = vcmp.lt.s32.totalorder %v702, 0
      %v1019 = vsub.s32 0, %v702
      %v1020 = vsel %vm1018, %v1019, %v702
      %v1021 = vmul.u32.u64.compose %v1020, 3817748708
      %v1022 = vextract.low.u32 %v1021
      %v1023 = vextract.high.u32 %v1021
      %v1024 = vshrl.u32 %v1023, 4
      %v1025 = vmul.u32 %v1024, 18
      %v1026 = vsub.s32 %v1020, %v1025
      %v1027 = vsub.s32 0, %v1026
      %v1028 = vsel %vm1018, %v1027, %v1026
      %vm1029 = vcmp.lt.s32.totalorder %v703, 0
      %v1030 = vsub.s32 0, %v703
      %v1031 = vsel %vm1029, %v1030, %v703
      %v1032 = vmul.u32.u64.compose %v1031, 3817748708
      %v1033 = vextract.low.u32 %v1032
      %v1034 = vextract.high.u32 %v1032
      %v1035 = vshrl.u32 %v1034, 4
      %v1036 = vmul.u32 %v1035, 18
      %v1037 = vsub.s32 %v1031, %v1036
      %v1038 = vsub.s32 0, %v1037
      %v1039 = vsel %vm1029, %v1038, %v1037
      %vm1040 = vcmp.lt.s32.totalorder %v704, 0
      %v1041 = vsub.s32 0, %v704
      %v1042 = vsel %vm1040, %v1041, %v704
      %v1043 = vmul.u32.u64.compose %v1042, 3817748708
      %v1044 = vextract.low.u32 %v1043
      %v1045 = vextract.high.u32 %v1043
      %v1046 = vshrl.u32 %v1045, 4
      %v1047 = vmul.u32 %v1046, 18
      %v1048 = vsub.s32 %v1042, %v1047
      %v1049 = vsub.s32 0, %v1048
      %v1050 = vsel %vm1040, %v1049, %v1048
      %vm1051 = vcmp.lt.s32.totalorder %v705, 0
      %v1052 = vsub.s32 0, %v705
      %v1053 = vsel %vm1051, %v1052, %v705
      %v1054 = vmul.u32.u64.compose %v1053, 3817748708
      %v1055 = vextract.low.u32 %v1054
      %v1056 = vextract.high.u32 %v1054
      %v1057 = vshrl.u32 %v1056, 4
      %v1058 = vmul.u32 %v1057, 18
      %v1059 = vsub.s32 %v1053, %v1058
      %v1060 = vsub.s32 0, %v1059
      %v1061 = vsel %vm1051, %v1060, %v1059
      %vm1062 = vcmp.lt.s32.totalorder %v706, 0
      %v1063 = vsub.s32 0, %v706
      %v1064 = vsel %vm1062, %v1063, %v706
      %v1065 = vmul.u32.u64.compose %v1064, 3817748708
      %v1066 = vextract.low.u32 %v1065
      %v1067 = vextract.high.u32 %v1065
      %v1068 = vshrl.u32 %v1067, 4
      %v1069 = vmul.u32 %v1068, 18
      %v1070 = vsub.s32 %v1064, %v1069
      %v1071 = vsub.s32 0, %v1070
      %v1072 = vsel %vm1062, %v1071, %v1070
      %vm1073 = vcmp.lt.s32.totalorder %v707, 0
      %v1074 = vsub.s32 0, %v707
      %v1075 = vsel %vm1073, %v1074, %v707
      %v1076 = vmul.u32.u64.compose %v1075, 3817748708
      %v1077 = vextract.low.u32 %v1076
      %v1078 = vextract.high.u32 %v1076
      %v1079 = vshrl.u32 %v1078, 4
      %v1080 = vmul.u32 %v1079, 18
      %v1081 = vsub.s32 %v1075, %v1080
      %v1082 = vsub.s32 0, %v1081
      %v1083 = vsel %vm1073, %v1082, %v1081
      %vm1084 = vcmp.lt.s32.totalorder %v708, 0
      %v1085 = vsub.s32 0, %v708
      %v1086 = vsel %vm1084, %v1085, %v708
      %v1087 = vmul.u32.u64.compose %v1086, 3817748708
      %v1088 = vextract.low.u32 %v1087
      %v1089 = vextract.high.u32 %v1087
      %v1090 = vshrl.u32 %v1089, 4
      %v1091 = vmul.u32 %v1090, 18
      %v1092 = vsub.s32 %v1086, %v1091
      %v1093 = vsub.s32 0, %v1092
      %v1094 = vsel %vm1084, %v1093, %v1092
      %vm1095 = vcmp.lt.s32.totalorder %v709, 0
      %v1096 = vsub.s32 0, %v709
      %v1097 = vsel %vm1095, %v1096, %v709
      %v1098 = vmul.u32.u64.compose %v1097, 3817748708
      %v1099 = vextract.low.u32 %v1098
      %v1100 = vextract.high.u32 %v1098
      %v1101 = vshrl.u32 %v1100, 4
      %v1102 = vmul.u32 %v1101, 18
      %v1103 = vsub.s32 %v1097, %v1102
      %v1104 = vsub.s32 0, %v1103
      %v1105 = vsel %vm1095, %v1104, %v1103
      %vm1106 = vcmp.ne.s32.totalorder %v720, 0
      %vm1107 = vcmp.ne.s32.totalorder %v731, 0
      %vm1108 = vcmp.ne.s32.totalorder %v742, 0
      %vm1109 = vcmp.ne.s32.totalorder %v753, 0
      %vm1110 = vcmp.ne.s32.totalorder %v764, 0
      %vm1111 = vcmp.ne.s32.totalorder %v775, 0
      %vm1112 = vcmp.ne.s32.totalorder %v786, 0
      %vm1113 = vcmp.ne.s32.totalorder %v797, 0
      %vm1114 = vcmp.ne.s32.totalorder %v808, 0
      %vm1115 = vcmp.ne.s32.totalorder %v819, 0
      %vm1116 = vcmp.ne.s32.totalorder %v830, 0
      %vm1117 = vcmp.ne.s32.totalorder %v841, 0
      %vm1118 = vcmp.ne.s32.totalorder %v852, 0
      %vm1119 = vcmp.ne.s32.totalorder %v863, 0
      %vm1120 = vcmp.ne.s32.totalorder %v874, 0
      %vm1121 = vcmp.ne.s32.totalorder %v885, 0
      %vm1122 = vcmp.ne.s32.totalorder %v896, 0
      %vm1123 = vcmp.ne.s32.totalorder %v907, 0
      %vm1124 = vcmp.ne.s32.totalorder %v918, 0
      %vm1125 = vcmp.ne.s32.totalorder %v929, 0
      %vm1126 = vcmp.ne.s32.totalorder %v940, 0
      %vm1127 = vcmp.ne.s32.totalorder %v951, 0
      %vm1128 = vcmp.ne.s32.totalorder %v962, 0
      %vm1129 = vcmp.ne.s32.totalorder %v973, 0
      %vm1130 = vcmp.ne.s32.totalorder %v984, 0
      %vm1131 = vcmp.ne.s32.totalorder %v995, 0
      %vm1132 = vcmp.ne.s32.totalorder %v1006, 0
      %vm1133 = vcmp.ne.s32.totalorder %v1017, 0
      %vm1134 = vcmp.ne.s32.totalorder %v1028, 0
      %vm1135 = vcmp.ne.s32.totalorder %v1039, 0
      %vm1136 = vcmp.ne.s32.totalorder %v1050, 0
      %vm1137 = vcmp.ne.s32.totalorder %v1061, 0
      %vm1138 = vcmp.ne.s32.totalorder %v1072, 0
      %vm1139 = vcmp.ne.s32.totalorder %v1083, 0
      %vm1140 = vcmp.ne.s32.totalorder %v1094, 0
      %vm1141 = vcmp.ne.s32.totalorder %v1105, 0
      %vm1142 = vcmp.lt.s32.totalorder %v720, 0
      %vm1143 = vcmp.lt.s32.totalorder %v731, 0
      %vm1144 = vcmp.lt.s32.totalorder %v742, 0
      %vm1145 = vcmp.lt.s32.totalorder %v753, 0
      %vm1146 = vcmp.lt.s32.totalorder %v764, 0
      %vm1147 = vcmp.lt.s32.totalorder %v775, 0
      %vm1148 = vcmp.lt.s32.totalorder %v786, 0
      %vm1149 = vcmp.lt.s32.totalorder %v797, 0
      %vm1150 = vcmp.lt.s32.totalorder %v808, 0
      %vm1151 = vcmp.lt.s32.totalorder %v819, 0
      %vm1152 = vcmp.lt.s32.totalorder %v830, 0
      %vm1153 = vcmp.lt.s32.totalorder %v841, 0
      %vm1154 = vcmp.lt.s32.totalorder %v852, 0
      %vm1155 = vcmp.lt.s32.totalorder %v863, 0
      %vm1156 = vcmp.lt.s32.totalorder %v874, 0
      %vm1157 = vcmp.lt.s32.totalorder %v885, 0
      %vm1158 = vcmp.lt.s32.totalorder %v896, 0
      %vm1159 = vcmp.lt.s32.totalorder %v907, 0
      %vm1160 = vcmp.lt.s32.totalorder %v918, 0
      %vm1161 = vcmp.lt.s32.totalorder %v929, 0
      %vm1162 = vcmp.lt.s32.totalorder %v940, 0
      %vm1163 = vcmp.lt.s32.totalorder %v951, 0
      %vm1164 = vcmp.lt.s32.totalorder %v962, 0
      %vm1165 = vcmp.lt.s32.totalorder %v973, 0
      %vm1166 = vcmp.lt.s32.totalorder %v984, 0
      %vm1167 = vcmp.lt.s32.totalorder %v995, 0
      %vm1168 = vcmp.lt.s32.totalorder %v1006, 0
      %vm1169 = vcmp.lt.s32.totalorder %v1017, 0
      %vm1170 = vcmp.lt.s32.totalorder %v1028, 0
      %vm1171 = vcmp.lt.s32.totalorder %v1039, 0
      %vm1172 = vcmp.lt.s32.totalorder %v1050, 0
      %vm1173 = vcmp.lt.s32.totalorder %v1061, 0
      %vm1174 = vcmp.lt.s32.totalorder %v1072, 0
      %vm1175 = vcmp.lt.s32.totalorder %v1083, 0
      %vm1176 = vcmp.lt.s32.totalorder %v1094, 0
      %vm1177 = vcmp.lt.s32.totalorder %v1105, 0
      %vm1178 = vmand %vm1142, %vm1106
      %vm1179 = vmand %vm1143, %vm1107
      %vm1180 = vmand %vm1144, %vm1108
      %vm1181 = vmand %vm1145, %vm1109
      %vm1182 = vmand %vm1146, %vm1110
      %vm1183 = vmand %vm1147, %vm1111
      %vm1184 = vmand %vm1148, %vm1112
      %vm1185 = vmand %vm1149, %vm1113
      %vm1186 = vmand %vm1150, %vm1114
      %vm1187 = vmand %vm1151, %vm1115
      %vm1188 = vmand %vm1152, %vm1116
      %vm1189 = vmand %vm1153, %vm1117
      %vm1190 = vmand %vm1154, %vm1118
      %vm1191 = vmand %vm1155, %vm1119
      %vm1192 = vmand %vm1156, %vm1120
      %vm1193 = vmand %vm1157, %vm1121
      %vm1194 = vmand %vm1158, %vm1122
      %vm1195 = vmand %vm1159, %vm1123
      %vm1196 = vmand %vm1160, %vm1124
      %vm1197 = vmand %vm1161, %vm1125
      %vm1198 = vmand %vm1162, %vm1126
      %vm1199 = vmand %vm1163, %vm1127
      %vm1200 = vmand %vm1164, %vm1128
      %vm1201 = vmand %vm1165, %vm1129
      %vm1202 = vmand %vm1166, %vm1130
      %vm1203 = vmand %vm1167, %vm1131
      %vm1204 = vmand %vm1168, %vm1132
      %vm1205 = vmand %vm1169, %vm1133
      %vm1206 = vmand %vm1170, %vm1134
      %vm1207 = vmand %vm1171, %vm1135
      %vm1208 = vmand %vm1172, %vm1136
      %vm1209 = vmand %vm1173, %vm1137
      %vm1210 = vmand %vm1174, %vm1138
      %vm1211 = vmand %vm1175, %vm1139
      %vm1212 = vmand %vm1176, %vm1140
      %vm1213 = vmand %vm1177, %vm1141
      %v1214 = vadd.s32 %v720, 18
      %v1215 = vadd.s32 %v731, 18
      %v1216 = vadd.s32 %v742, 18
      %v1217 = vadd.s32 %v753, 18
      %v1218 = vadd.s32 %v764, 18
      %v1219 = vadd.s32 %v775, 18
      %v1220 = vadd.s32 %v786, 18
      %v1221 = vadd.s32 %v797, 18
      %v1222 = vadd.s32 %v808, 18
      %v1223 = vadd.s32 %v819, 18
      %v1224 = vadd.s32 %v830, 18
      %v1225 = vadd.s32 %v841, 18
      %v1226 = vadd.s32 %v852, 18
      %v1227 = vadd.s32 %v863, 18
      %v1228 = vadd.s32 %v874, 18
      %v1229 = vadd.s32 %v885, 18
      %v1230 = vadd.s32 %v896, 18
      %v1231 = vadd.s32 %v907, 18
      %v1232 = vadd.s32 %v918, 18
      %v1233 = vadd.s32 %v929, 18
      %v1234 = vadd.s32 %v940, 18
      %v1235 = vadd.s32 %v951, 18
      %v1236 = vadd.s32 %v962, 18
      %v1237 = vadd.s32 %v973, 18
      %v1238 = vadd.s32 %v984, 18
      %v1239 = vadd.s32 %v995, 18
      %v1240 = vadd.s32 %v1006, 18
      %v1241 = vadd.s32 %v1017, 18
      %v1242 = vadd.s32 %v1028, 18
      %v1243 = vadd.s32 %v1039, 18
      %v1244 = vadd.s32 %v1050, 18
      %v1245 = vadd.s32 %v1061, 18
      %v1246 = vadd.s32 %v1072, 18
      %v1247 = vadd.s32 %v1083, 18
      %v1248 = vadd.s32 %v1094, 18
      %v1249 = vadd.s32 %v1105, 18
      %v1250 = vsel %vm1178, %v1214, %v720
      %v1251 = vsel %vm1179, %v1215, %v731
      %v1252 = vsel %vm1180, %v1216, %v742
      %v1253 = vsel %vm1181, %v1217, %v753
      %v1254 = vsel %vm1182, %v1218, %v764
      %v1255 = vsel %vm1183, %v1219, %v775
      %v1256 = vsel %vm1184, %v1220, %v786
      %v1257 = vsel %vm1185, %v1221, %v797
      %v1258 = vsel %vm1186, %v1222, %v808
      %v1259 = vsel %vm1187, %v1223, %v819
      %v1260 = vsel %vm1188, %v1224, %v830
      %v1261 = vsel %vm1189, %v1225, %v841
      %v1262 = vsel %vm1190, %v1226, %v852
      %v1263 = vsel %vm1191, %v1227, %v863
      %v1264 = vsel %vm1192, %v1228, %v874
      %v1265 = vsel %vm1193, %v1229, %v885
      %v1266 = vsel %vm1194, %v1230, %v896
      %v1267 = vsel %vm1195, %v1231, %v907
      %v1268 = vsel %vm1196, %v1232, %v918
      %v1269 = vsel %vm1197, %v1233, %v929
      %v1270 = vsel %vm1198, %v1234, %v940
      %v1271 = vsel %vm1199, %v1235, %v951
      %v1272 = vsel %vm1200, %v1236, %v962
      %v1273 = vsel %vm1201, %v1237, %v973
      %v1274 = vsel %vm1202, %v1238, %v984
      %v1275 = vsel %vm1203, %v1239, %v995
      %v1276 = vsel %vm1204, %v1240, %v1006
      %v1277 = vsel %vm1205, %v1241, %v1017
      %v1278 = vsel %vm1206, %v1242, %v1028
      %v1279 = vsel %vm1207, %v1243, %v1039
      %v1280 = vsel %vm1208, %v1244, %v1050
      %v1281 = vsel %vm1209, %v1245, %v1061
      %v1282 = vsel %vm1210, %v1246, %v1072
      %v1283 = vsel %vm1211, %v1247, %v1083
      %v1284 = vsel %vm1212, %v1248, %v1094
      %v1285 = vsel %vm1213, %v1249, %v1105
      %vm1286 = vcmp.lt.s32.totalorder %v1250, 16
      %vm1287 = vcmp.lt.s32.totalorder %v1251, 16
      %vm1288 = vcmp.lt.s32.totalorder %v1252, 16
      %vm1289 = vcmp.lt.s32.totalorder %v1253, 16
      %vm1290 = vcmp.lt.s32.totalorder %v1254, 16
      %vm1291 = vcmp.lt.s32.totalorder %v1255, 16
      %vm1292 = vcmp.lt.s32.totalorder %v1256, 16
      %vm1293 = vcmp.lt.s32.totalorder %v1257, 16
      %vm1294 = vcmp.lt.s32.totalorder %v1258, 16
      %vm1295 = vcmp.lt.s32.totalorder %v1259, 16
      %vm1296 = vcmp.lt.s32.totalorder %v1260, 16
      %vm1297 = vcmp.lt.s32.totalorder %v1261, 16
      %vm1298 = vcmp.lt.s32.totalorder %v1262, 16
      %vm1299 = vcmp.lt.s32.totalorder %v1263, 16
      %vm1300 = vcmp.lt.s32.totalorder %v1264, 16
      %vm1301 = vcmp.lt.s32.totalorder %v1265, 16
      %vm1302 = vcmp.lt.s32.totalorder %v1266, 16
      %vm1303 = vcmp.lt.s32.totalorder %v1267, 16
      %vm1304 = vcmp.lt.s32.totalorder %v1268, 16
      %vm1305 = vcmp.lt.s32.totalorder %v1269, 16
      %vm1306 = vcmp.lt.s32.totalorder %v1270, 16
      %vm1307 = vcmp.lt.s32.totalorder %v1271, 16
      %vm1308 = vcmp.lt.s32.totalorder %v1272, 16
      %vm1309 = vcmp.lt.s32.totalorder %v1273, 16
      %vm1310 = vcmp.lt.s32.totalorder %v1274, 16
      %vm1311 = vcmp.lt.s32.totalorder %v1275, 16
      %vm1312 = vcmp.lt.s32.totalorder %v1276, 16
      %vm1313 = vcmp.lt.s32.totalorder %v1277, 16
      %vm1314 = vcmp.lt.s32.totalorder %v1278, 16
      %vm1315 = vcmp.lt.s32.totalorder %v1279, 16
      %vm1316 = vcmp.lt.s32.totalorder %v1280, 16
      %vm1317 = vcmp.lt.s32.totalorder %v1281, 16
      %vm1318 = vcmp.lt.s32.totalorder %v1282, 16
      %vm1319 = vcmp.lt.s32.totalorder %v1283, 16
      %vm1320 = vcmp.lt.s32.totalorder %v1284, 16
      %vm1321 = vcmp.lt.s32.totalorder %v1285, 16
      %v1322 = vsel %vm1286, 1, 0
      %v1323 = vsel %vm1287, 1, 0
      %v1324 = vsel %vm1288, 1, 0
      %v1325 = vsel %vm1289, 1, 0
      %v1326 = vsel %vm1290, 1, 0
      %v1327 = vsel %vm1291, 1, 0
      %v1328 = vsel %vm1292, 1, 0
      %v1329 = vsel %vm1293, 1, 0
      %v1330 = vsel %vm1294, 1, 0
      %v1331 = vsel %vm1295, 1, 0
      %v1332 = vsel %vm1296, 1, 0
      %v1333 = vsel %vm1297, 1, 0
      %v1334 = vsel %vm1298, 1, 0
      %v1335 = vsel %vm1299, 1, 0
      %v1336 = vsel %vm1300, 1, 0
      %v1337 = vsel %vm1301, 1, 0
      %v1338 = vsel %vm1302, 1, 0
      %v1339 = vsel %vm1303, 1, 0
      %v1340 = vsel %vm1304, 1, 0
      %v1341 = vsel %vm1305, 1, 0
      %v1342 = vsel %vm1306, 1, 0
      %v1343 = vsel %vm1307, 1, 0
      %v1344 = vsel %vm1308, 1, 0
      %v1345 = vsel %vm1309, 1, 0
      %v1346 = vsel %vm1310, 1, 0
      %v1347 = vsel %vm1311, 1, 0
      %v1348 = vsel %vm1312, 1, 0
      %v1349 = vsel %vm1313, 1, 0
      %v1350 = vsel %vm1314, 1, 0
      %v1351 = vsel %vm1315, 1, 0
      %v1352 = vsel %vm1316, 1, 0
      %v1353 = vsel %vm1317, 1, 0
      %v1354 = vsel %vm1318, 1, 0
      %v1355 = vsel %vm1319, 1, 0
      %v1356 = vsel %vm1320, 1, 0
      %v1357 = vsel %vm1321, 1, 0
      %v1358 = vcvt.s32.f32 %v1322
      %v1359 = vcvt.s32.f32 %v1323
      %v1360 = vcvt.s32.f32 %v1324
      %v1361 = vcvt.s32.f32 %v1325
      %v1362 = vcvt.s32.f32 %v1326
      %v1363 = vcvt.s32.f32 %v1327
      %v1364 = vcvt.s32.f32 %v1328
      %v1365 = vcvt.s32.f32 %v1329
      %v1366 = vcvt.s32.f32 %v1330
      %v1367 = vcvt.s32.f32 %v1331
      %v1368 = vcvt.s32.f32 %v1332
      %v1369 = vcvt.s32.f32 %v1333
      %v1370 = vcvt.s32.f32 %v1334
      %v1371 = vcvt.s32.f32 %v1335
      %v1372 = vcvt.s32.f32 %v1336
      %v1373 = vcvt.s32.f32 %v1337
      %v1374 = vcvt.s32.f32 %v1338
      %v1375 = vcvt.s32.f32 %v1339
      %v1376 = vcvt.s32.f32 %v1340
      %v1377 = vcvt.s32.f32 %v1341
      %v1378 = vcvt.s32.f32 %v1342
      %v1379 = vcvt.s32.f32 %v1343
      %v1380 = vcvt.s32.f32 %v1344
      %v1381 = vcvt.s32.f32 %v1345
      %v1382 = vcvt.s32.f32 %v1346
      %v1383 = vcvt.s32.f32 %v1347
      %v1384 = vcvt.s32.f32 %v1348
      %v1385 = vcvt.s32.f32 %v1349
      %v1386 = vcvt.s32.f32 %v1350
      %v1387 = vcvt.s32.f32 %v1351
      %v1388 = vcvt.s32.f32 %v1352
      %v1389 = vcvt.s32.f32 %v1353
      %v1390 = vcvt.s32.f32 %v1354
      %v1391 = vcvt.s32.f32 %v1355
      %v1392 = vcvt.s32.f32 %v1356
      %v1393 = vcvt.s32.f32 %v1357
      %v1394 = vmul.f32 %v495, %v1358
      %v1395 = vmul.f32 %v498, %v1359
      %v1396 = vmul.f32 %v503, %v1360
      %v1397 = vmul.f32 %v506, %v1361
      %v1398 = vmul.f32 %v511, %v1362
      %v1399 = vmul.f32 %v514, %v1363
      %v1400 = vmul.f32 %v519, %v1364
      %v1401 = vmul.f32 %v522, %v1365
      %v1402 = vmul.f32 %v527, %v1366
      %v1403 = vmul.f32 %v530, %v1367
      %v1404 = vmul.f32 %v535, %v1368
      %v1405 = vmul.f32 %v538, %v1369
      %v1406 = vmul.f32 %v543, %v1370
      %v1407 = vmul.f32 %v546, %v1371
      %v1408 = vmul.f32 %v551, %v1372
      %v1409 = vmul.f32 %v554, %v1373
      %v1410 = vmul.f32 %v559, %v1374
      %v1411 = vmul.f32 %v562, %v1375
      %v1412 = vmul.f32 %v567, %v1376
      %v1413 = vmul.f32 %v570, %v1377
      %v1414 = vmul.f32 %v575, %v1378
      %v1415 = vmul.f32 %v578, %v1379
      %v1416 = vmul.f32 %v583, %v1380
      %v1417 = vmul.f32 %v586, %v1381
      %v1418 = vmul.f32 %v591, %v1382
      %v1419 = vmul.f32 %v594, %v1383
      %v1420 = vmul.f32 %v599, %v1384
      %v1421 = vmul.f32 %v602, %v1385
      %v1422 = vmul.f32 %v607, %v1386
      %v1423 = vmul.f32 %v610, %v1387
      %v1424 = vmul.f32 %v615, %v1388
      %v1425 = vmul.f32 %v618, %v1389
      %v1426 = vmul.f32 %v623, %v1390
      %v1427 = vmul.f32 %v626, %v1391
      %v1428 = vmul.f32 %v631, %v1392
      %v1429 = vmul.f32 %v634, %v1393
      %p1430 = scmp.eq.s32.totalorder %s21, 0
      // Predicated region
      $region29: #{conv_block_forward.6} parent=27 // pred_check
        %p1431 = pneg %p1430
      $region30: #{conv_block_forward.6} parent=27 // pred_check_branch
        %1433 = sbr.rel (%p1431) target = $region32
      $region31: #{conv_block_forward.6} parent=27 // pred_region
        %1434 = vst [vmem:[%s247] sm:$0x1] 0.0
        %1435 = vst [vmem:[%s250] sm:$0x1] 0.0
      $region32: #{conv_block_forward.6} parent=27 // pred_fallthru
        _
      %v1436 = vld [vmem:[%s247] sm:$0x1]
      %v1437 = vadd.f32 %v1394, %v1395
      %v1438 = vadd.f32 %v1437, %v1396
      %v1439 = vadd.f32 %v1438, %v1397
      %v1440 = vadd.f32 %v1439, %v1398
      %v1441 = vadd.f32 %v1440, %v1399
      %v1442 = vadd.f32 %v1441, %v1400
      %v1443 = vadd.f32 %v1442, %v1401
      %v1444 = vadd.f32 %v1443, %v1402
      %v1445 = vadd.f32 %v1444, %v1403
      %v1446 = vadd.f32 %v1445, %v1404
      %v1447 = vadd.f32 %v1446, %v1405
      %v1448 = vadd.f32 %v1447, %v1406
      %v1449 = vadd.f32 %v1448, %v1407
      %v1450 = vadd.f32 %v1449, %v1408
      %v1451 = vadd.f32 %v1450, %v1409
      %v1452 = vadd.f32 %v1451, %v1410
      %v1453 = vadd.f32 %v1452, %v1411
      %v1454 = vadd.f32 %v1453, %v1412
      %v1455 = vadd.f32 %v1454, %v1413
      %v1456 = vadd.f32 %v1455, %v1414
      %v1457 = vadd.f32 %v1456, %v1415
      %v1458 = vadd.f32 %v1457, %v1416
      %v1459 = vadd.f32 %v1458, %v1417
      %v1460 = vadd.f32 %v1459, %v1418
      %v1461 = vadd.f32 %v1460, %v1419
      %v1462 = vadd.f32 %v1461, %v1420
      %v1463 = vadd.f32 %v1462, %v1421
      %v1464 = vadd.f32 %v1463, %v1422
      %v1465 = vadd.f32 %v1464, %v1423
      %v1466 = vadd.f32 %v1465, %v1424
      %v1467 = vadd.f32 %v1466, %v1425
      %v1468 = vadd.f32 %v1467, %v1426
      %v1469 = vadd.f32 %v1468, %v1427
      %v1470 = vadd.f32 %v1469, %v1428
      %v1471 = vadd.f32 %v1470, %v1429
      %v1472 = vrot.slane %v1471, 4
      %v1473 = vadd.f32 %v1471, %v1472
      %v1474 = vrot.slane %v1473, 2
      %v1475 = vadd.f32 %v1473, %v1474
      %v1476 = vrot.slane %v1475, 1
      %v1477 = vadd.f32 %v1475, %v1476
      %v1478 = vadd.f32 %v1436, %v1477
      %1479 = vst [vmem:[%s247] sm:$0x1] %v1478
      %v1480 = vld [vmem:[%s250] sm:$0x1]
      %v1481 = vmul.f32 %v1394, %v495
      %v1482 = vmul.f32 %v1395, %v498
      %v1483 = vmul.f32 %v1396, %v503
      %v1484 = vmul.f32 %v1397, %v506
      %v1485 = vmul.f32 %v1398, %v511
      %v1486 = vmul.f32 %v1399, %v514
      %v1487 = vmul.f32 %v1400, %v519
      %v1488 = vmul.f32 %v1401, %v522
      %v1489 = vmul.f32 %v1402, %v527
      %v1490 = vmul.f32 %v1403, %v530
      %v1491 = vmul.f32 %v1404, %v535
      %v1492 = vmul.f32 %v1405, %v538
      %v1493 = vmul.f32 %v1406, %v543
      %v1494 = vmul.f32 %v1407, %v546
      %v1495 = vmul.f32 %v1408, %v551
      %v1496 = vmul.f32 %v1409, %v554
      %v1497 = vmul.f32 %v1410, %v559
      %v1498 = vmul.f32 %v1411, %v562
      %v1499 = vmul.f32 %v1412, %v567
      %v1500 = vmul.f32 %v1413, %v570
      %v1501 = vmul.f32 %v1414, %v575
      %v1502 = vmul.f32 %v1415, %v578
      %v1503 = vmul.f32 %v1416, %v583
      %v1504 = vmul.f32 %v1417, %v586
      %v1505 = vmul.f32 %v1418, %v591
      %v1506 = vmul.f32 %v1419, %v594
      %v1507 = vmul.f32 %v1420, %v599
      %v1508 = vmul.f32 %v1421, %v602
      %v1509 = vmul.f32 %v1422, %v607
      %v1510 = vmul.f32 %v1423, %v610
      %v1511 = vmul.f32 %v1424, %v615
      %v1512 = vmul.f32 %v1425, %v618
      %v1513 = vmul.f32 %v1426, %v623
      %v1514 = vmul.f32 %v1427, %v626
      %v1515 = vmul.f32 %v1428, %v631
      %v1516 = vmul.f32 %v1429, %v634
      %v1517 = vadd.f32 %v1481, %v1482
      %v1518 = vadd.f32 %v1517, %v1483
      %v1519 = vadd.f32 %v1518, %v1484
      %v1520 = vadd.f32 %v1519, %v1485
      %v1521 = vadd.f32 %v1520, %v1486
      %v1522 = vadd.f32 %v1521, %v1487
      %v1523 = vadd.f32 %v1522, %v1488
      %v1524 = vadd.f32 %v1523, %v1489
      %v1525 = vadd.f32 %v1524, %v1490
      %v1526 = vadd.f32 %v1525, %v1491
      %v1527 = vadd.f32 %v1526, %v1492
      %v1528 = vadd.f32 %v1527, %v1493
      %v1529 = vadd.f32 %v1528, %v1494
      %v1530 = vadd.f32 %v1529, %v1495
      %v1531 = vadd.f32 %v1530, %v1496
      %v1532 = vadd.f32 %v1531, %v1497
      %v1533 = vadd.f32 %v1532, %v1498
      %v1534 = vadd.f32 %v1533, %v1499
      %v1535 = vadd.f32 %v1534, %v1500
      %v1536 = vadd.f32 %v1535, %v1501
      %v1537 = vadd.f32 %v1536, %v1502
      %v1538 = vadd.f32 %v1537, %v1503
      %v1539 = vadd.f32 %v1538, %v1504
      %v1540 = vadd.f32 %v1539, %v1505
      %v1541 = vadd.f32 %v1540, %v1506
      %v1542 = vadd.f32 %v1541, %v1507
      %v1543 = vadd.f32 %v1542, %v1508
      %v1544 = vadd.f32 %v1543, %v1509
      %v1545 = vadd.f32 %v1544, %v1510
      %v1546 = vadd.f32 %v1545, %v1511
      %v1547 = vadd.f32 %v1546, %v1512
      %v1548 = vadd.f32 %v1547, %v1513
      %v1549 = vadd.f32 %v1548, %v1514
      %v1550 = vadd.f32 %v1549, %v1515
      %v1551 = vadd.f32 %v1550, %v1516
      %v1552 = vrot.slane %v1551, 4
      %v1553 = vadd.f32 %v1551, %v1552
      %v1554 = vrot.slane %v1553, 2
      %v1555 = vadd.f32 %v1553, %v1554
      %v1556 = vrot.slane %v1555, 1
      %v1557 = vadd.f32 %v1555, %v1556
      %v1558 = vadd.f32 %v1480, %v1557
      %1559 = vst [vmem:[%s250] sm:$0x1] %v1558
      %p1560 = scmp.lt.s32.totalorder %s20, 1
      %s1561 = scalar_select %p1560, %s20, 1
      %p1562 = scmp.lt.s32.totalorder %s21, 0
      %s1563 = scalar_select %p1562, %s21, 0
      %s1564 = smul.addr %s1563, 36
      %s1565 = smul.addr %s1561, 36
      %s1566 = sadd.s32 %s1564, %s1565
      %s1567 = smul.addr %s1566, 8
      %s1568 = scalar_lea.vmem %s2, %s1567
      %p1569 = scmp.lt.s32.totalorder %s20, 1
      %s1570 = scalar_select %p1569, %s20, 1
      %s1571 = scalar_lea.vmem %s3, %s1570
      %p1572 = scmp.lt.s32.totalorder %s20, 1
      %s1573 = scalar_select %p1572, %s20, 1
      %s1574 = scalar_lea.vmem %s4, %s1573
      // Predicated region
      $region33: #{conv_block_forward.6} parent=27 // pred_check
        %p1575 = pneg %p97
      $region34: #{conv_block_forward.6} parent=27 // pred_check_branch
        %1577 = sbr.rel (%p1575) target = $region36
      $region35: #{conv_block_forward.6} parent=27 // pred_region
        _
      $region36: #{conv_block_forward.6} parent=27 // pred_fallthru
        _
      // Predicated region
      $region37: #{conv_block_forward.6} parent=27 // pred_check
        %p1578 = pneg %p123
      $region38: #{conv_block_forward.6} parent=27 // pred_check_branch
        %1580 = sbr.rel (%p1578) target = $region40
      $region39: #{conv_block_forward.6} parent=27 // pred_region
        _
      $region40: #{conv_block_forward.6} parent=27 // pred_fallthru
        _
      // Predicated region
      $region41: #{conv_block_forward.6} parent=27 // pred_check
        %p1581 = pneg %p149
      $region42: #{conv_block_forward.6} parent=27 // pred_check_branch
        %1583 = sbr.rel (%p1581) target = $region44
      $region43: #{conv_block_forward.6} parent=27 // pred_region
        _
      $region44: #{conv_block_forward.6} parent=27 // pred_fallthru
        _
    $region28: #{conv_block_forward.6} parent=5 // pred_fallthru
      _
    %p1584 = scmp.le.s32.totalorder 2, %s11
    // Predicated region
    $region45: #{conv_block_forward.6} parent=5 // pred_check
      %p1585 = pneg %p1584
    $region46: #{conv_block_forward.6} parent=5 // pred_check_branch
      %1587 = sbr.rel (%p1585) target = $region48
    $region47: #{conv_block_forward.6} parent=5 // pred_region
      %s1588 = ssub.s32 %s11, 2
      // Predicated region
      $region49: #{conv_block_forward.6} parent=47 // pred_check
        %p1589 = pneg %p103
      $region50: #{conv_block_forward.6} parent=47 // pred_check_branch
        %1591 = sbr.rel (%p1589) target = $region52
      $region51: #{conv_block_forward.6} parent=47 // pred_region
        %p1592 = scmp.lt.s32.totalorder %s22, 1
        %s1593 = scalar_select %p1592, %s22, 1
        %p1594 = scmp.lt.s32.totalorder %s23, 0
        %s1595 = scalar_select %p1594, %s23, 0
        %s1596 = smul.addr %s1595, 36
        %s1597 = smul.addr %s1593, 36
        %s1598 = sadd.s32 %s1596, %s1597
        %s1599 = smul.addr %s1598, 8
        %s1600 = scalar_lea.vmem %s2, %s1599
      $region52: #{conv_block_forward.6} parent=47 // pred_fallthru
        _
      // Predicated region
      $region53: #{conv_block_forward.6} parent=47 // pred_check
        %p1601 = pneg %p129
      $region54: #{conv_block_forward.6} parent=47 // pred_check_branch
        %1603 = sbr.rel (%p1601) target = $region56
      $region55: #{conv_block_forward.6} parent=47 // pred_region
        %p1604 = scmp.lt.s32.totalorder %s22, 1
        %s1605 = scalar_select %p1604, %s22, 1
        %s1606 = scalar_lea.vmem %s3, %s1605
      $region56: #{conv_block_forward.6} parent=47 // pred_fallthru
        _
      // Predicated region
      $region57: #{conv_block_forward.6} parent=47 // pred_check
        %p1607 = pneg %p155
      $region58: #{conv_block_forward.6} parent=47 // pred_check_branch
        %1609 = sbr.rel (%p1607) target = $region60
      $region59: #{conv_block_forward.6} parent=47 // pred_region
        %p1610 = scmp.lt.s32.totalorder %s22, 1
        %s1611 = scalar_select %p1610, %s22, 1
        %s1612 = scalar_lea.vmem %s4, %s1611
      $region60: #{conv_block_forward.6} parent=47 // pred_fallthru
        _
    $region48: #{conv_block_forward.6} parent=5 // pred_fallthru
      _
  $region6: #{conv_block_forward.6} parent=0 // loop_footer
    %s15 = sadd.s32 1, %s11
  $region7: #{conv_block_forward.6} parent=0 // loop_footer_branch
    %10 = sbr.rel target = $region3
  $region8: #{conv_block_forward.6} parent=0 // loop_exit
    _

</llo_original>
